<compile_context>
chip_gen: v7x
topology: tpu7x:2x2x1
jax: 0.10.0
libtpu: 0.0.40
codegen_flags: <defaults>
</compile_context>

<pallas_src>
import functools

import jax
import jax.numpy as jnp
import numpy as np
from jax.experimental import pallas as pl
from jax.experimental.pallas import tpu as pltpu


def _round_up(x, m):
    return ((x + m - 1) // m) * m


def stack_layout(input_size, hidden_size, num_layers):
    """Static row layout of one LSTM stack's packed weight slab.

    Per layer: rows [w_off, w_off + in + H) hold concat([W_ih^T, W_hh^T])
    ((in,4H) then (H,4H)); row b_off holds the fused bias (b_ih + b_hh).
    All offsets are 8-sublane aligned."""
    lanes = _round_up(4 * hidden_size, 128)
    metas = []
    off = 0
    for l in range(num_layers):
        in_sz = input_size if l == 0 else hidden_size
        w_off = off
        b_off = w_off + _round_up(in_sz + hidden_size, 8)
        off = b_off + 8
        metas.append(dict(in_sz=in_sz, H=hidden_size, w_off=w_off, b_off=b_off))
    return metas, off, lanes


def make_autoencoder_kernel(seq_len, n_features, embedding_size, num_layers,
                            batch_pad, enc_meta, dec_meta,
                            matmul_dtype=jnp.float32):
    """Builds the encoder+decoder LSTM kernel body (closure over static sizes)."""
    S, F, E, L, B = seq_len, n_features, embedding_size, num_layers, batch_pad
    del L, E  # sizes are carried in the metas

    def load_stack(slab_ref, metas):
        layers = []
        for m in metas:
            in_sz, H = m['in_sz'], m['H']
            w = slab_ref[m['w_off']:m['w_off'] + in_sz + H, :4 * H]
            w = w.astype(matmul_dtype)
            b = slab_ref[m['b_off']:m['b_off'] + 1, :4 * H]      # (1, 4H) f32
            layers.append(dict(
                w=w,                        # (in+H, 4H) fused    [layers l>0]
                w_ih=w[:in_sz, :],          # (in, 4H)            [layer-0 proj]
                w_hh=w[in_sz:, :],          # (H, 4H)             [layer-0 recur]
                b=b,
                b_bcast=jnp.broadcast_to(b, (B, 4 * H)),  # hoisted once
                H=H))
        return layers

    def cell(gates, c, H):
        # Gate order was repacked offline to (i, f, o, g): sigmoid on the first
        # 3H lanes only, tanh on the last H lanes only.
        sig = jax.nn.sigmoid(gates[:, :3 * H])
        g_g = jnp.tanh(gates[:, 3 * H:4 * H])
        i_g = sig[:, 0 * H:1 * H]
        f_g = sig[:, 1 * H:2 * H]
        o_g = sig[:, 2 * H:3 * H]
        c_new = f_g * c + i_g * g_g
        h_new = o_g * jnp.tanh(c_new)
        return h_new, c_new

    def run_stack_wavefront(layers, layer0_precomp):
        """Wavefront schedule over an L-layer LSTM stack.

        At wave w, layer l processes step t = w - l; the per-layer chains in a
        wave are data-independent, so their MXU/EUP pushes overlap. Returns
        the last layer's S per-step outputs."""
        L_ = len(layers)
        h = [jnp.zeros((B, ly['H']), jnp.float32) for ly in layers]
        c = [jnp.zeros((B, ly['H']), jnp.float32) for ly in layers]
        outs = [[None] * S for _ in range(L_)]
        for wave in range(S + L_ - 1):
            for l in range(L_):
                t = wave - l
                if not (0 <= t < S):
                    continue
                ly = layers[l]
                H = ly['H']
                if l == 0:
                    # Input projection was precomputed (batched / hoisted);
                    # only the K=H recurrent matmul sits on the serial path.
                    gates = layer0_precomp[t] + jnp.dot(
                        h[0].astype(matmul_dtype), ly['w_hh'],
                        preferred_element_type=jnp.float32)
                else:
                    # Single fused K = in+H matmul per step (one MXU push
                    # instead of two).
                    xh = jnp.concatenate(
                        [outs[l - 1][t], h[l]], axis=-1).astype(matmul_dtype)
                    gates = jnp.dot(
                        xh, ly['w'],
                        preferred_element_type=jnp.float32) + ly['b_bcast']
                h[l], c[l] = cell(gates, c[l], H)
                outs[l][t] = h[l]
        return outs[L_ - 1]

    def kernel(x_ref, enc_ref, dec_ref, out_ref):
        enc_layers = load_stack(enc_ref, enc_meta)
        dec_layers = load_stack(dec_ref, dec_meta)

        # ---------------- Encoder ----------------
        # Layer-0 input projection for ALL timesteps as one wide MXU matmul:
        # (S*B, F) @ (F, 4H) + fused bias. Rows [t*B, (t+1)*B) = timestep t.
        xs = x_ref[...].astype(matmul_dtype)
        gp = jnp.dot(xs, enc_layers[0]['w_ih'],
                     preferred_element_type=jnp.float32) + enc_layers[0]['b']
        enc_pre = [gp[t * B:(t + 1) * B, :] for t in range(S)]
        enc_outs = run_stack_wavefront(enc_layers, enc_pre)
        hidden = enc_outs[S - 1]          # == torch `hidden[-1]` (last layer)

        # ---------------- Decoder ----------------
        # Input is `hidden` repeated over time -> project ONCE, reuse per step.
        ih0 = jnp.dot(hidden.astype(matmul_dtype), dec_layers[0]['w_ih'],
                      preferred_element_type=jnp.float32) + dec_layers[0]['b']
        dec_outs = run_stack_wavefront(dec_layers, [ih0] * S)

        # Single lane-dense store: (B, S*F) slab, unmasked vst.
        out_ref[...] = jnp.concatenate(dec_outs, axis=-1)

    return kernel


@functools.partial(
    jax.jit,
    static_argnames=("seq_len", "n_features", "embedding_size", "num_layers"))
def recurrent_autoencoder_forward(x, enc_slab, dec_slab, *, seq_len, n_features,
                                  embedding_size, num_layers):
    """x: (B, S, n_features) f32. enc_slab/dec_slab: packed (rows, lanes) slabs."""
    B = x.shape[0]
    B_pad = _round_up(max(B, 8), 8)     # pad batch to the 8-sublane minimum

    x_p = jnp.zeros((B_pad, seq_len, n_features), jnp.float32).at[:B].set(
        x.astype(jnp.float32))
    # Time-major flatten so each timestep is a contiguous 8-sublane block.
    x_flat = jnp.transpose(x_p, (1, 0, 2)).reshape(seq_len * B_pad, n_features)

    enc_meta, _, _ = stack_layout(n_features, embedding_size, num_layers)
    dec_meta, _, _ = stack_layout(embedding_size, n_features, num_layers)

    kernel = make_autoencoder_kernel(seq_len, n_features, embedding_size,
                                     num_layers, B_pad, enc_meta, dec_meta)

    vmem = pl.BlockSpec(memory_space=pltpu.MemorySpace.VMEM)
    out_flat = pl.pallas_call(
        kernel,
        out_shape=jax.ShapeDtypeStruct((B_pad, seq_len * n_features),
                                       jnp.float32),
        in_specs=[vmem, vmem, vmem],
        out_specs=vmem,
    )(x_flat, enc_slab, dec_slab)

    # Free layout plumbing: lane-dense slab -> (B, S, F), drop batch padding.
    return out_flat.reshape(B_pad, seq_len, n_features)[:B]


# ----------------------------- param packing -----------------------------

def pack_stack(params, input_size, hidden_size, num_layers):
    """Pack one LSTM stack (PyTorch layout, gate order (i,f,g,o)) into a single
    (rows, lanes) f32 slab: per layer concat([W_ih^T, W_hh^T]) plus the fused
    bias row, with the gate order repacked to (i, f, o, g)."""
    metas, rows, lanes = stack_layout(input_size, hidden_size, num_layers)
    H = hidden_size
    slab = np.zeros((rows, lanes), np.float32)

    def reorder_ifog(a):  # (i,f,g,o) -> (i,f,o,g) along axis 0
        i, f, g, o = np.split(np.asarray(a, np.float32), 4, axis=0)
        return np.concatenate([i, f, o, g], axis=0)

    for m, (w_ih, w_hh, b_ih, b_hh) in zip(metas, params):
        in_sz = m['in_sz']
        w_ih_t = reorder_ifog(w_ih).T                               # (in, 4H)
        w_hh_t = reorder_ifog(w_hh).T                               # (H, 4H)
        b = reorder_ifog(np.asarray(b_ih) + np.asarray(b_hh))       # (4H,)
        slab[m['w_off']:m['w_off'] + in_sz, :4 * H] = w_ih_t
        slab[m['w_off'] + in_sz:m['w_off'] + in_sz + H, :4 * H] = w_hh_t
        slab[m['b_off'], :4 * H] = b
    return jnp.asarray(slab)


# ----------------------------- pure-JAX reference -----------------------------

def lstm_stack_reference(inp, params):
    """nn.LSTM (batch_first) semantics. Returns (outputs, last-layer final h)."""
    Bsz, S, _ = inp.shape
    h = None
    for (w_ih, w_hh, b_ih, b_hh) in params:
        H = w_hh.shape[1]
        h = jnp.zeros((Bsz, H), jnp.float32)
        c = jnp.zeros((Bsz, H), jnp.float32)
        outs = []
        for t in range(S):
            gates = inp[:, t] @ w_ih.T + b_ih + h @ w_hh.T + b_hh
            i, f, g, o = jnp.split(gates, 4, axis=-1)
            c = jax.nn.sigmoid(f) * c + jax.nn.sigmoid(i) * jnp.tanh(g)
            h = jax.nn.sigmoid(o) * jnp.tanh(c)
            outs.append(h)
        inp = jnp.stack(outs, axis=1)
    return inp, h


def recurrent_autoencoder_reference(x, enc_params, dec_params, seq_len):
    _, hidden = lstm_stack_reference(x, enc_params)          # encoder: hidden[-1]
    Bsz, E = hidden.shape
    dec_in = jnp.broadcast_to(hidden[:, None, :], (Bsz, seq_len, E))
    out, _ = lstm_stack_reference(dec_in, dec_params)
    return out


# ----------------------------- param construction -----------------------------

def init_lstm_params(key, input_size, hidden_size, num_layers):
    """nn.LSTM-shaped params, U(-1/sqrt(H), 1/sqrt(H)), gate order (i,f,g,o)."""
    k = 1.0 / np.sqrt(hidden_size)
    params = []
    for l in range(num_layers):
        in_size = input_size if l == 0 else hidden_size
        key, k1, k2, k3, k4 = jax.random.split(key, 5)
        w_ih = jax.random.uniform(k1, (4 * hidden_size, in_size), jnp.float32, -k, k)
        w_hh = jax.random.uniform(k2, (4 * hidden_size, hidden_size), jnp.float32, -k, k)
        b_ih = jax.random.uniform(k3, (4 * hidden_size,), jnp.float32, -k, k)
        b_hh = jax.random.uniform(k4, (4 * hidden_size,), jnp.float32, -k, k)
        params.append((w_ih, w_hh, b_ih, b_hh))
    return key, params


if __name__ == "__main__":
    # RecurrentAutoencoder(seq_len, n_features, embedding_size, num_layers)
    batch = 4
    seq_len = 8
    n_features = 32
    embedding_size = 32
    num_layers = 2

    key = jax.random.PRNGKey(0)
    key, kx = jax.random.split(key)
    x = jax.random.normal(kx, (batch, seq_len, n_features), jnp.float32)

    key, enc_params = init_lstm_params(key, n_features, embedding_size, num_layers)
    key, dec_params = init_lstm_params(key, embedding_size, n_features, num_layers)

    enc_slab = pack_stack(enc_params, n_features, embedding_size, num_layers)
    dec_slab = pack_stack(dec_params, embedding_size, n_features, num_layers)

    out = recurrent_autoencoder_forward(
        x, enc_slab, dec_slab,
        seq_len=seq_len, n_features=n_features,
        embedding_size=embedding_size, num_layers=num_layers)
    out = jax.block_until_ready(out)

    ref = jax.block_until_ready(
        recurrent_autoencoder_reference(x, enc_params, dec_params, seq_len))

    assert out.shape == (batch, seq_len, n_features), out.shape
    np.testing.assert_allclose(np.asarray(out), np.asarray(ref), rtol=1e-4, atol=1e-4)

    print("KERNEL_OK")
</pallas_src>

<mosaic_0001>
module attributes {stable_mosaic.version = 11 : i64} {
  func.func @kernel(%arg0: memref<64x32xf32, #tpu.memory_space<vmem>>, %arg1: memref<144x128xf32, #tpu.memory_space<vmem>>, %arg2: memref<144x128xf32, #tpu.memory_space<vmem>>, %arg3: memref<8x256xf32, #tpu.memory_space<vmem>>) attributes {dimension_semantics = [], scalar_prefetch = 0 : i64, scratch_operands = 0 : i64, tpu.core_type = #tpu.core_type<tc>} {
    %c0 = arith.constant 0 : index
    %c0_0 = arith.constant 0 : index
    %0 = vector.load %arg1[%c0, %c0_0] : memref<144x128xf32, #tpu.memory_space<vmem>>, vector<64x128xf32>
    %c64 = arith.constant 64 : index
    %c0_1 = arith.constant 0 : index
    %1 = vector.load %arg1[%c64, %c0_1] : memref<144x128xf32, #tpu.memory_space<vmem>>, vector<1x128xf32>
    %2 = vector.extract_strided_slice %0 {offsets = [0, 0], sizes = [32, 128], strides = [1, 1]} : vector<64x128xf32> to vector<32x128xf32>
    %3 = vector.extract_strided_slice %0 {offsets = [32, 0], sizes = [32, 128], strides = [1, 1]} : vector<64x128xf32> to vector<32x128xf32>
    %c72 = arith.constant 72 : index
    %c0_2 = arith.constant 0 : index
    %4 = vector.load %arg1[%c72, %c0_2] : memref<144x128xf32, #tpu.memory_space<vmem>>, vector<64x128xf32>
    %c136 = arith.constant 136 : index
    %c0_3 = arith.constant 0 : index
    %5 = vector.load %arg1[%c136, %c0_3] : memref<144x128xf32, #tpu.memory_space<vmem>>, vector<1x128xf32>
    %6 = vector.shape_cast %5 : vector<1x128xf32> to vector<1x128xf32>
    %7 = vector.broadcast %6 : vector<1x128xf32> to vector<8x128xf32>
    %c0_4 = arith.constant 0 : index
    %c0_5 = arith.constant 0 : index
    %8 = vector.load %arg2[%c0_4, %c0_5] : memref<144x128xf32, #tpu.memory_space<vmem>>, vector<64x128xf32>
    %c64_6 = arith.constant 64 : index
    %c0_7 = arith.constant 0 : index
    %9 = vector.load %arg2[%c64_6, %c0_7] : memref<144x128xf32, #tpu.memory_space<vmem>>, vector<1x128xf32>
    %10 = vector.extract_strided_slice %8 {offsets = [0, 0], sizes = [32, 128], strides = [1, 1]} : vector<64x128xf32> to vector<32x128xf32>
    %11 = vector.extract_strided_slice %8 {offsets = [32, 0], sizes = [32, 128], strides = [1, 1]} : vector<64x128xf32> to vector<32x128xf32>
    %c72_8 = arith.constant 72 : index
    %c0_9 = arith.constant 0 : index
    %12 = vector.load %arg2[%c72_8, %c0_9] : memref<144x128xf32, #tpu.memory_space<vmem>>, vector<64x128xf32>
    %c136_10 = arith.constant 136 : index
    %c0_11 = arith.constant 0 : index
    %13 = vector.load %arg2[%c136_10, %c0_11] : memref<144x128xf32, #tpu.memory_space<vmem>>, vector<1x128xf32>
    %14 = vector.shape_cast %13 : vector<1x128xf32> to vector<1x128xf32>
    %15 = vector.broadcast %14 : vector<1x128xf32> to vector<8x128xf32>
    %c0_12 = arith.constant 0 : index
    %c0_13 = arith.constant 0 : index
    %16 = vector.load %arg0[%c0_12, %c0_13] : memref<64x32xf32, #tpu.memory_space<vmem>>, vector<64x32xf32>
    %cst = arith.constant dense<0.000000e+00> : vector<64x128xf32>
    %17 = tpu.matmul %16, %2, %cst {dimension_numbers = #tpu.dot_dimension_numbers<[1], [0], [0], [1], [0, 0, 1, 1], [], []>} : vector<64x32xf32>, vector<32x128xf32>, vector<64x128xf32> -> vector<64x128xf32>
    %18 = vector.broadcast %1 : vector<1x128xf32> to vector<64x128xf32>
    %19 = arith.addf %17, %18 : vector<64x128xf32>
    %20 = vector.extract_strided_slice %19 {offsets = [0, 0], sizes = [8, 128], strides = [1, 1]} : vector<64x128xf32> to vector<8x128xf32>
    %21 = vector.extract_strided_slice %19 {offsets = [8, 0], sizes = [8, 128], strides = [1, 1]} : vector<64x128xf32> to vector<8x128xf32>
    %22 = vector.extract_strided_slice %19 {offsets = [16, 0], sizes = [8, 128], strides = [1, 1]} : vector<64x128xf32> to vector<8x128xf32>
    %23 = vector.extract_strided_slice %19 {offsets = [24, 0], sizes = [8, 128], strides = [1, 1]} : vector<64x128xf32> to vector<8x128xf32>
    %24 = vector.extract_strided_slice %19 {offsets = [32, 0], sizes = [8, 128], strides = [1, 1]} : vector<64x128xf32> to vector<8x128xf32>
    %25 = vector.extract_strided_slice %19 {offsets = [40, 0], sizes = [8, 128], strides = [1, 1]} : vector<64x128xf32> to vector<8x128xf32>
    %26 = vector.extract_strided_slice %19 {offsets = [48, 0], sizes = [8, 128], strides = [1, 1]} : vector<64x128xf32> to vector<8x128xf32>
    %27 = vector.extract_strided_slice %19 {offsets = [56, 0], sizes = [8, 128], strides = [1, 1]} : vector<64x128xf32> to vector<8x128xf32>
    %cst_14 = arith.constant 0.000000e+00 : f32
    %28 = vector.broadcast %cst_14 : f32 to vector<8x32xf32>
    %cst_15 = arith.constant 0.000000e+00 : f32
    %29 = vector.broadcast %cst_15 : f32 to vector<8x32xf32>
    %cst_16 = arith.constant 0.000000e+00 : f32
    %30 = vector.broadcast %cst_16 : f32 to vector<8x32xf32>
    %cst_17 = arith.constant 0.000000e+00 : f32
    %31 = vector.broadcast %cst_17 : f32 to vector<8x32xf32>
    %cst_18 = arith.constant dense<0.000000e+00> : vector<8x128xf32>
    %32 = tpu.matmul %28, %3, %cst_18 {dimension_numbers = #tpu.dot_dimension_numbers<[1], [0], [0], [1], [0, 0, 1, 1], [], []>} : vector<8x32xf32>, vector<32x128xf32>, vector<8x128xf32> -> vector<8x128xf32>
    %33 = arith.addf %20, %32 : vector<8x128xf32>
    %34 = vector.extract_strided_slice %33 {offsets = [0, 0], sizes = [8, 96], strides = [1, 1]} : vector<8x128xf32> to vector<8x96xf32>
    %35 = arith.negf %34 : vector<8x96xf32>
    %36 = math.exp %35 : vector<8x96xf32>
    %cst_19 = arith.constant 1.000000e+00 : f32
    %37 = vector.broadcast %cst_19 : f32 to vector<8x96xf32>
    %38 = arith.addf %37, %36 : vector<8x96xf32>
    %39 = arith.divf %37, %38 : vector<8x96xf32>
    %40 = vector.extract_strided_slice %33 {offsets = [0, 96], sizes = [8, 32], strides = [1, 1]} : vector<8x128xf32> to vector<8x32xf32>
    %41 = math.tanh %40 : vector<8x32xf32>
    %42 = vector.extract_strided_slice %39 {offsets = [0, 0], sizes = [8, 32], strides = [1, 1]} : vector<8x96xf32> to vector<8x32xf32>
    %43 = vector.extract_strided_slice %39 {offsets = [0, 32], sizes = [8, 32], strides = [1, 1]} : vector<8x96xf32> to vector<8x32xf32>
    %44 = vector.extract_strided_slice %39 {offsets = [0, 64], sizes = [8, 32], strides = [1, 1]} : vector<8x96xf32> to vector<8x32xf32>
    %45 = arith.mulf %43, %30 : vector<8x32xf32>
    %46 = arith.mulf %42, %41 : vector<8x32xf32>
    %47 = arith.addf %45, %46 : vector<8x32xf32>
    %48 = math.tanh %47 : vector<8x32xf32>
    %49 = arith.mulf %44, %48 : vector<8x32xf32>
    %cst_20 = arith.constant dense<0.000000e+00> : vector<8x128xf32>
    %50 = tpu.matmul %49, %3, %cst_20 {dimension_numbers = #tpu.dot_dimension_numbers<[1], [0], [0], [1], [0, 0, 1, 1], [], []>} : vector<8x32xf32>, vector<32x128xf32>, vector<8x128xf32> -> vector<8x128xf32>
    %51 = arith.addf %21, %50 : vector<8x128xf32>
    %52 = vector.extract_strided_slice %51 {offsets = [0, 0], sizes = [8, 96], strides = [1, 1]} : vector<8x128xf32> to vector<8x96xf32>
    %53 = arith.negf %52 : vector<8x96xf32>
    %54 = math.exp %53 : vector<8x96xf32>
    %cst_21 = arith.constant 1.000000e+00 : f32
    %55 = vector.broadcast %cst_21 : f32 to vector<8x96xf32>
    %56 = arith.addf %55, %54 : vector<8x96xf32>
    %57 = arith.divf %55, %56 : vector<8x96xf32>
    %58 = vector.extract_strided_slice %51 {offsets = [0, 96], sizes = [8, 32], strides = [1, 1]} : vector<8x128xf32> to vector<8x32xf32>
    %59 = math.tanh %58 : vector<8x32xf32>
    %60 = vector.extract_strided_slice %57 {offsets = [0, 0], sizes = [8, 32], strides = [1, 1]} : vector<8x96xf32> to vector<8x32xf32>
    %61 = vector.extract_strided_slice %57 {offsets = [0, 32], sizes = [8, 32], strides = [1, 1]} : vector<8x96xf32> to vector<8x32xf32>
    %62 = vector.extract_strided_slice %57 {offsets = [0, 64], sizes = [8, 32], strides = [1, 1]} : vector<8x96xf32> to vector<8x32xf32>
    %63 = arith.mulf %61, %47 : vector<8x32xf32>
    %64 = arith.mulf %60, %59 : vector<8x32xf32>
    %65 = arith.addf %63, %64 : vector<8x32xf32>
    %66 = math.tanh %65 : vector<8x32xf32>
    %67 = arith.mulf %62, %66 : vector<8x32xf32>
    %68 = tpu.concatenate %49, %29 in 1 : vector<8x32xf32>, vector<8x32xf32> -> vector<8x64xf32>
    %cst_22 = arith.constant dense<0.000000e+00> : vector<8x128xf32>
    %69 = tpu.matmul %68, %4, %cst_22 {dimension_numbers = #tpu.dot_dimension_numbers<[1], [0], [0], [1], [0, 0, 1, 1], [], []>} : vector<8x64xf32>, vector<64x128xf32>, vector<8x128xf32> -> vector<8x128xf32>
    %70 = arith.addf %69, %7 : vector<8x128xf32>
    %71 = vector.extract_strided_slice %70 {offsets = [0, 0], sizes = [8, 96], strides = [1, 1]} : vector<8x128xf32> to vector<8x96xf32>
    %72 = arith.negf %71 : vector<8x96xf32>
    %73 = math.exp %72 : vector<8x96xf32>
    %cst_23 = arith.constant 1.000000e+00 : f32
    %74 = vector.broadcast %cst_23 : f32 to vector<8x96xf32>
    %75 = arith.addf %74, %73 : vector<8x96xf32>
    %76 = arith.divf %74, %75 : vector<8x96xf32>
    %77 = vector.extract_strided_slice %70 {offsets = [0, 96], sizes = [8, 32], strides = [1, 1]} : vector<8x128xf32> to vector<8x32xf32>
    %78 = math.tanh %77 : vector<8x32xf32>
    %79 = vector.extract_strided_slice %76 {offsets = [0, 0], sizes = [8, 32], strides = [1, 1]} : vector<8x96xf32> to vector<8x32xf32>
    %80 = vector.extract_strided_slice %76 {offsets = [0, 32], sizes = [8, 32], strides = [1, 1]} : vector<8x96xf32> to vector<8x32xf32>
    %81 = vector.extract_strided_slice %76 {offsets = [0, 64], sizes = [8, 32], strides = [1, 1]} : vector<8x96xf32> to vector<8x32xf32>
    %82 = arith.mulf %80, %31 : vector<8x32xf32>
    %83 = arith.mulf %79, %78 : vector<8x32xf32>
    %84 = arith.addf %82, %83 : vector<8x32xf32>
    %85 = math.tanh %84 : vector<8x32xf32>
    %86 = arith.mulf %81, %85 : vector<8x32xf32>
    %cst_24 = arith.constant dense<0.000000e+00> : vector<8x128xf32>
    %87 = tpu.matmul %67, %3, %cst_24 {dimension_numbers = #tpu.dot_dimension_numbers<[1], [0], [0], [1], [0, 0, 1, 1], [], []>} : vector<8x32xf32>, vector<32x128xf32>, vector<8x128xf32> -> vector<8x128xf32>
    %88 = arith.addf %22, %87 : vector<8x128xf32>
    %89 = vector.extract_strided_slice %88 {offsets = [0, 0], sizes = [8, 96], strides = [1, 1]} : vector<8x128xf32> to vector<8x96xf32>
    %90 = arith.negf %89 : vector<8x96xf32>
    %91 = math.exp %90 : vector<8x96xf32>
    %cst_25 = arith.constant 1.000000e+00 : f32
    %92 = vector.broadcast %cst_25 : f32 to vector<8x96xf32>
    %93 = arith.addf %92, %91 : vector<8x96xf32>
    %94 = arith.divf %92, %93 : vector<8x96xf32>
    %95 = vector.extract_strided_slice %88 {offsets = [0, 96], sizes = [8, 32], strides = [1, 1]} : vector<8x128xf32> to vector<8x32xf32>
    %96 = math.tanh %95 : vector<8x32xf32>
    %97 = vector.extract_strided_slice %94 {offsets = [0, 0], sizes = [8, 32], strides = [1, 1]} : vector<8x96xf32> to vector<8x32xf32>
    %98 = vector.extract_strided_slice %94 {offsets = [0, 32], sizes = [8, 32], strides = [1, 1]} : vector<8x96xf32> to vector<8x32xf32>
    %99 = vector.extract_strided_slice %94 {offsets = [0, 64], sizes = [8, 32], strides = [1, 1]} : vector<8x96xf32> to vector<8x32xf32>
    %100 = arith.mulf %98, %65 : vector<8x32xf32>
    %101 = arith.mulf %97, %96 : vector<8x32xf32>
    %102 = arith.addf %100, %101 : vector<8x32xf32>
    %103 = math.tanh %102 : vector<8x32xf32>
    %104 = arith.mulf %99, %103 : vector<8x32xf32>
    %105 = tpu.concatenate %67, %86 in 1 : vector<8x32xf32>, vector<8x32xf32> -> vector<8x64xf32>
    %cst_26 = arith.constant dense<0.000000e+00> : vector<8x128xf32>
    %106 = tpu.matmul %105, %4, %cst_26 {dimension_numbers = #tpu.dot_dimension_numbers<[1], [0], [0], [1], [0, 0, 1, 1], [], []>} : vector<8x64xf32>, vector<64x128xf32>, vector<8x128xf32> -> vector<8x128xf32>
    %107 = arith.addf %106, %7 : vector<8x128xf32>
    %108 = vector.extract_strided_slice %107 {offsets = [0, 0], sizes = [8, 96], strides = [1, 1]} : vector<8x128xf32> to vector<8x96xf32>
    %109 = arith.negf %108 : vector<8x96xf32>
    %110 = math.exp %109 : vector<8x96xf32>
    %cst_27 = arith.constant 1.000000e+00 : f32
    %111 = vector.broadcast %cst_27 : f32 to vector<8x96xf32>
    %112 = arith.addf %111, %110 : vector<8x96xf32>
    %113 = arith.divf %111, %112 : vector<8x96xf32>
    %114 = vector.extract_strided_slice %107 {offsets = [0, 96], sizes = [8, 32], strides = [1, 1]} : vector<8x128xf32> to vector<8x32xf32>
    %115 = math.tanh %114 : vector<8x32xf32>
    %116 = vector.extract_strided_slice %113 {offsets = [0, 0], sizes = [8, 32], strides = [1, 1]} : vector<8x96xf32> to vector<8x32xf32>
    %117 = vector.extract_strided_slice %113 {offsets = [0, 32], sizes = [8, 32], strides = [1, 1]} : vector<8x96xf32> to vector<8x32xf32>
    %118 = vector.extract_strided_slice %113 {offsets = [0, 64], sizes = [8, 32], strides = [1, 1]} : vector<8x96xf32> to vector<8x32xf32>
    %119 = arith.mulf %117, %84 : vector<8x32xf32>
    %120 = arith.mulf %116, %115 : vector<8x32xf32>
    %121 = arith.addf %119, %120 : vector<8x32xf32>
    %122 = math.tanh %121 : vector<8x32xf32>
    %123 = arith.mulf %118, %122 : vector<8x32xf32>
    %cst_28 = arith.constant dense<0.000000e+00> : vector<8x128xf32>
    %124 = tpu.matmul %104, %3, %cst_28 {dimension_numbers = #tpu.dot_dimension_numbers<[1], [0], [0], [1], [0, 0, 1, 1], [], []>} : vector<8x32xf32>, vector<32x128xf32>, vector<8x128xf32> -> vector<8x128xf32>
    %125 = arith.addf %23, %124 : vector<8x128xf32>
    %126 = vector.extract_strided_slice %125 {offsets = [0, 0], sizes = [8, 96], strides = [1, 1]} : vector<8x128xf32> to vector<8x96xf32>
    %127 = arith.negf %126 : vector<8x96xf32>
    %128 = math.exp %127 : vector<8x96xf32>
    %cst_29 = arith.constant 1.000000e+00 : f32
    %129 = vector.broadcast %cst_29 : f32 to vector<8x96xf32>
    %130 = arith.addf %129, %128 : vector<8x96xf32>
    %131 = arith.divf %129, %130 : vector<8x96xf32>
    %132 = vector.extract_strided_slice %125 {offsets = [0, 96], sizes = [8, 32], strides = [1, 1]} : vector<8x128xf32> to vector<8x32xf32>
    %133 = math.tanh %132 : vector<8x32xf32>
    %134 = vector.extract_strided_slice %131 {offsets = [0, 0], sizes = [8, 32], strides = [1, 1]} : vector<8x96xf32> to vector<8x32xf32>
    %135 = vector.extract_strided_slice %131 {offsets = [0, 32], sizes = [8, 32], strides = [1, 1]} : vector<8x96xf32> to vector<8x32xf32>
    %136 = vector.extract_strided_slice %131 {offsets = [0, 64], sizes = [8, 32], strides = [1, 1]} : vector<8x96xf32> to vector<8x32xf32>
    %137 = arith.mulf %135, %102 : vector<8x32xf32>
    %138 = arith.mulf %134, %133 : vector<8x32xf32>
    %139 = arith.addf %137, %138 : vector<8x32xf32>
    %140 = math.tanh %139 : vector<8x32xf32>
    %141 = arith.mulf %136, %140 : vector<8x32xf32>
    %142 = tpu.concatenate %104, %123 in 1 : vector<8x32xf32>, vector<8x32xf32> -> vector<8x64xf32>
    %cst_30 = arith.constant dense<0.000000e+00> : vector<8x128xf32>
    %143 = tpu.matmul %142, %4, %cst_30 {dimension_numbers = #tpu.dot_dimension_numbers<[1], [0], [0], [1], [0, 0, 1, 1], [], []>} : vector<8x64xf32>, vector<64x128xf32>, vector<8x128xf32> -> vector<8x128xf32>
    %144 = arith.addf %143, %7 : vector<8x128xf32>
    %145 = vector.extract_strided_slice %144 {offsets = [0, 0], sizes = [8, 96], strides = [1, 1]} : vector<8x128xf32> to vector<8x96xf32>
    %146 = arith.negf %145 : vector<8x96xf32>
    %147 = math.exp %146 : vector<8x96xf32>
    %cst_31 = arith.constant 1.000000e+00 : f32
    %148 = vector.broadcast %cst_31 : f32 to vector<8x96xf32>
    %149 = arith.addf %148, %147 : vector<8x96xf32>
    %150 = arith.divf %148, %149 : vector<8x96xf32>
    %151 = vector.extract_strided_slice %144 {offsets = [0, 96], sizes = [8, 32], strides = [1, 1]} : vector<8x128xf32> to vector<8x32xf32>
    %152 = math.tanh %151 : vector<8x32xf32>
    %153 = vector.extract_strided_slice %150 {offsets = [0, 0], sizes = [8, 32], strides = [1, 1]} : vector<8x96xf32> to vector<8x32xf32>
    %154 = vector.extract_strided_slice %150 {offsets = [0, 32], sizes = [8, 32], strides = [1, 1]} : vector<8x96xf32> to vector<8x32xf32>
    %155 = vector.extract_strided_slice %150 {offsets = [0, 64], sizes = [8, 32], strides = [1, 1]} : vector<8x96xf32> to vector<8x32xf32>
    %156 = arith.mulf %154, %121 : vector<8x32xf32>
    %157 = arith.mulf %153, %152 : vector<8x32xf32>
    %158 = arith.addf %156, %157 : vector<8x32xf32>
    %159 = math.tanh %158 : vector<8x32xf32>
    %160 = arith.mulf %155, %159 : vector<8x32xf32>
    %cst_32 = arith.constant dense<0.000000e+00> : vector<8x128xf32>
    %161 = tpu.matmul %141, %3, %cst_32 {dimension_numbers = #tpu.dot_dimension_numbers<[1], [0], [0], [1], [0, 0, 1, 1], [], []>} : vector<8x32xf32>, vector<32x128xf32>, vector<8x128xf32> -> vector<8x128xf32>
    %162 = arith.addf %24, %161 : vector<8x128xf32>
    %163 = vector.extract_strided_slice %162 {offsets = [0, 0], sizes = [8, 96], strides = [1, 1]} : vector<8x128xf32> to vector<8x96xf32>
    %164 = arith.negf %163 : vector<8x96xf32>
    %165 = math.exp %164 : vector<8x96xf32>
    %cst_33 = arith.constant 1.000000e+00 : f32
    %166 = vector.broadcast %cst_33 : f32 to vector<8x96xf32>
    %167 = arith.addf %166, %165 : vector<8x96xf32>
    %168 = arith.divf %166, %167 : vector<8x96xf32>
    %169 = vector.extract_strided_slice %162 {offsets = [0, 96], sizes = [8, 32], strides = [1, 1]} : vector<8x128xf32> to vector<8x32xf32>
    %170 = math.tanh %169 : vector<8x32xf32>
    %171 = vector.extract_strided_slice %168 {offsets = [0, 0], sizes = [8, 32], strides = [1, 1]} : vector<8x96xf32> to vector<8x32xf32>
    %172 = vector.extract_strided_slice %168 {offsets = [0, 32], sizes = [8, 32], strides = [1, 1]} : vector<8x96xf32> to vector<8x32xf32>
    %173 = vector.extract_strided_slice %168 {offsets = [0, 64], sizes = [8, 32], strides = [1, 1]} : vector<8x96xf32> to vector<8x32xf32>
    %174 = arith.mulf %172, %139 : vector<8x32xf32>
    %175 = arith.mulf %171, %170 : vector<8x32xf32>
    %176 = arith.addf %174, %175 : vector<8x32xf32>
    %177 = math.tanh %176 : vector<8x32xf32>
    %178 = arith.mulf %173, %177 : vector<8x32xf32>
    %179 = tpu.concatenate %141, %160 in 1 : vector<8x32xf32>, vector<8x32xf32> -> vector<8x64xf32>
    %cst_34 = arith.constant dense<0.000000e+00> : vector<8x128xf32>
    %180 = tpu.matmul %179, %4, %cst_34 {dimension_numbers = #tpu.dot_dimension_numbers<[1], [0], [0], [1], [0, 0, 1, 1], [], []>} : vector<8x64xf32>, vector<64x128xf32>, vector<8x128xf32> -> vector<8x128xf32>
    %181 = arith.addf %180, %7 : vector<8x128xf32>
    %182 = vector.extract_strided_slice %181 {offsets = [0, 0], sizes = [8, 96], strides = [1, 1]} : vector<8x128xf32> to vector<8x96xf32>
    %183 = arith.negf %182 : vector<8x96xf32>
    %184 = math.exp %183 : vector<8x96xf32>
    %cst_35 = arith.constant 1.000000e+00 : f32
    %185 = vector.broadcast %cst_35 : f32 to vector<8x96xf32>
    %186 = arith.addf %185, %184 : vector<8x96xf32>
    %187 = arith.divf %185, %186 : vector<8x96xf32>
    %188 = vector.extract_strided_slice %181 {offsets = [0, 96], sizes = [8, 32], strides = [1, 1]} : vector<8x128xf32> to vector<8x32xf32>
    %189 = math.tanh %188 : vector<8x32xf32>
    %190 = vector.extract_strided_slice %187 {offsets = [0, 0], sizes = [8, 32], strides = [1, 1]} : vector<8x96xf32> to vector<8x32xf32>
    %191 = vector.extract_strided_slice %187 {offsets = [0, 32], sizes = [8, 32], strides = [1, 1]} : vector<8x96xf32> to vector<8x32xf32>
    %192 = vector.extract_strided_slice %187 {offsets = [0, 64], sizes = [8, 32], strides = [1, 1]} : vector<8x96xf32> to vector<8x32xf32>
    %193 = arith.mulf %191, %158 : vector<8x32xf32>
    %194 = arith.mulf %190, %189 : vector<8x32xf32>
    %195 = arith.addf %193, %194 : vector<8x32xf32>
    %196 = math.tanh %195 : vector<8x32xf32>
    %197 = arith.mulf %192, %196 : vector<8x32xf32>
    %cst_36 = arith.constant dense<0.000000e+00> : vector<8x128xf32>
    %198 = tpu.matmul %178, %3, %cst_36 {dimension_numbers = #tpu.dot_dimension_numbers<[1], [0], [0], [1], [0, 0, 1, 1], [], []>} : vector<8x32xf32>, vector<32x128xf32>, vector<8x128xf32> -> vector<8x128xf32>
    %199 = arith.addf %25, %198 : vector<8x128xf32>
    %200 = vector.extract_strided_slice %199 {offsets = [0, 0], sizes = [8, 96], strides = [1, 1]} : vector<8x128xf32> to vector<8x96xf32>
    %201 = arith.negf %200 : vector<8x96xf32>
    %202 = math.exp %201 : vector<8x96xf32>
    %cst_37 = arith.constant 1.000000e+00 : f32
    %203 = vector.broadcast %cst_37 : f32 to vector<8x96xf32>
    %204 = arith.addf %203, %202 : vector<8x96xf32>
    %205 = arith.divf %203, %204 : vector<8x96xf32>
    %206 = vector.extract_strided_slice %199 {offsets = [0, 96], sizes = [8, 32], strides = [1, 1]} : vector<8x128xf32> to vector<8x32xf32>
    %207 = math.tanh %206 : vector<8x32xf32>
    %208 = vector.extract_strided_slice %205 {offsets = [0, 0], sizes = [8, 32], strides = [1, 1]} : vector<8x96xf32> to vector<8x32xf32>
    %209 = vector.extract_strided_slice %205 {offsets = [0, 32], sizes = [8, 32], strides = [1, 1]} : vector<8x96xf32> to vector<8x32xf32>
    %210 = vector.extract_strided_slice %205 {offsets = [0, 64], sizes = [8, 32], strides = [1, 1]} : vector<8x96xf32> to vector<8x32xf32>
    %211 = arith.mulf %209, %176 : vector<8x32xf32>
    %212 = arith.mulf %208, %207 : vector<8x32xf32>
    %213 = arith.addf %211, %212 : vector<8x32xf32>
    %214 = math.tanh %213 : vector<8x32xf32>
    %215 = arith.mulf %210, %214 : vector<8x32xf32>
    %216 = tpu.concatenate %178, %197 in 1 : vector<8x32xf32>, vector<8x32xf32> -> vector<8x64xf32>
    %cst_38 = arith.constant dense<0.000000e+00> : vector<8x128xf32>
    %217 = tpu.matmul %216, %4, %cst_38 {dimension_numbers = #tpu.dot_dimension_numbers<[1], [0], [0], [1], [0, 0, 1, 1], [], []>} : vector<8x64xf32>, vector<64x128xf32>, vector<8x128xf32> -> vector<8x128xf32>
    %218 = arith.addf %217, %7 : vector<8x128xf32>
    %219 = vector.extract_strided_slice %218 {offsets = [0, 0], sizes = [8, 96], strides = [1, 1]} : vector<8x128xf32> to vector<8x96xf32>
    %220 = arith.negf %219 : vector<8x96xf32>
    %221 = math.exp %220 : vector<8x96xf32>
    %cst_39 = arith.constant 1.000000e+00 : f32
    %222 = vector.broadcast %cst_39 : f32 to vector<8x96xf32>
    %223 = arith.addf %222, %221 : vector<8x96xf32>
    %224 = arith.divf %222, %223 : vector<8x96xf32>
    %225 = vector.extract_strided_slice %218 {offsets = [0, 96], sizes = [8, 32], strides = [1, 1]} : vector<8x128xf32> to vector<8x32xf32>
    %226 = math.tanh %225 : vector<8x32xf32>
    %227 = vector.extract_strided_slice %224 {offsets = [0, 0], sizes = [8, 32], strides = [1, 1]} : vector<8x96xf32> to vector<8x32xf32>
    %228 = vector.extract_strided_slice %224 {offsets = [0, 32], sizes = [8, 32], strides = [1, 1]} : vector<8x96xf32> to vector<8x32xf32>
    %229 = vector.extract_strided_slice %224 {offsets = [0, 64], sizes = [8, 32], strides = [1, 1]} : vector<8x96xf32> to vector<8x32xf32>
    %230 = arith.mulf %228, %195 : vector<8x32xf32>
    %231 = arith.mulf %227, %226 : vector<8x32xf32>
    %232 = arith.addf %230, %231 : vector<8x32xf32>
    %233 = math.tanh %232 : vector<8x32xf32>
    %234 = arith.mulf %229, %233 : vector<8x32xf32>
    %cst_40 = arith.constant dense<0.000000e+00> : vector<8x128xf32>
    %235 = tpu.matmul %215, %3, %cst_40 {dimension_numbers = #tpu.dot_dimension_numbers<[1], [0], [0], [1], [0, 0, 1, 1], [], []>} : vector<8x32xf32>, vector<32x128xf32>, vector<8x128xf32> -> vector<8x128xf32>
    %236 = arith.addf %26, %235 : vector<8x128xf32>
    %237 = vector.extract_strided_slice %236 {offsets = [0, 0], sizes = [8, 96], strides = [1, 1]} : vector<8x128xf32> to vector<8x96xf32>
    %238 = arith.negf %237 : vector<8x96xf32>
    %239 = math.exp %238 : vector<8x96xf32>
    %cst_41 = arith.constant 1.000000e+00 : f32
    %240 = vector.broadcast %cst_41 : f32 to vector<8x96xf32>
    %241 = arith.addf %240, %239 : vector<8x96xf32>
    %242 = arith.divf %240, %241 : vector<8x96xf32>
    %243 = vector.extract_strided_slice %236 {offsets = [0, 96], sizes = [8, 32], strides = [1, 1]} : vector<8x128xf32> to vector<8x32xf32>
    %244 = math.tanh %243 : vector<8x32xf32>
    %245 = vector.extract_strided_slice %242 {offsets = [0, 0], sizes = [8, 32], strides = [1, 1]} : vector<8x96xf32> to vector<8x32xf32>
    %246 = vector.extract_strided_slice %242 {offsets = [0, 32], sizes = [8, 32], strides = [1, 1]} : vector<8x96xf32> to vector<8x32xf32>
    %247 = vector.extract_strided_slice %242 {offsets = [0, 64], sizes = [8, 32], strides = [1, 1]} : vector<8x96xf32> to vector<8x32xf32>
    %248 = arith.mulf %246, %213 : vector<8x32xf32>
    %249 = arith.mulf %245, %244 : vector<8x32xf32>
    %250 = arith.addf %248, %249 : vector<8x32xf32>
    %251 = math.tanh %250 : vector<8x32xf32>
    %252 = arith.mulf %247, %251 : vector<8x32xf32>
    %253 = tpu.concatenate %215, %234 in 1 : vector<8x32xf32>, vector<8x32xf32> -> vector<8x64xf32>
    %cst_42 = arith.constant dense<0.000000e+00> : vector<8x128xf32>
    %254 = tpu.matmul %253, %4, %cst_42 {dimension_numbers = #tpu.dot_dimension_numbers<[1], [0], [0], [1], [0, 0, 1, 1], [], []>} : vector<8x64xf32>, vector<64x128xf32>, vector<8x128xf32> -> vector<8x128xf32>
    %255 = arith.addf %254, %7 : vector<8x128xf32>
    %256 = vector.extract_strided_slice %255 {offsets = [0, 0], sizes = [8, 96], strides = [1, 1]} : vector<8x128xf32> to vector<8x96xf32>
    %257 = arith.negf %256 : vector<8x96xf32>
    %258 = math.exp %257 : vector<8x96xf32>
    %cst_43 = arith.constant 1.000000e+00 : f32
    %259 = vector.broadcast %cst_43 : f32 to vector<8x96xf32>
    %260 = arith.addf %259, %258 : vector<8x96xf32>
    %261 = arith.divf %259, %260 : vector<8x96xf32>
    %262 = vector.extract_strided_slice %255 {offsets = [0, 96], sizes = [8, 32], strides = [1, 1]} : vector<8x128xf32> to vector<8x32xf32>
    %263 = math.tanh %262 : vector<8x32xf32>
    %264 = vector.extract_strided_slice %261 {offsets = [0, 0], sizes = [8, 32], strides = [1, 1]} : vector<8x96xf32> to vector<8x32xf32>
    %265 = vector.extract_strided_slice %261 {offsets = [0, 32], sizes = [8, 32], strides = [1, 1]} : vector<8x96xf32> to vector<8x32xf32>
    %266 = vector.extract_strided_slice %261 {offsets = [0, 64], sizes = [8, 32], strides = [1, 1]} : vector<8x96xf32> to vector<8x32xf32>
    %267 = arith.mulf %265, %232 : vector<8x32xf32>
    %268 = arith.mulf %264, %263 : vector<8x32xf32>
    %269 = arith.addf %267, %268 : vector<8x32xf32>
    %270 = math.tanh %269 : vector<8x32xf32>
    %271 = arith.mulf %266, %270 : vector<8x32xf32>
    %cst_44 = arith.constant dense<0.000000e+00> : vector<8x128xf32>
    %272 = tpu.matmul %252, %3, %cst_44 {dimension_numbers = #tpu.dot_dimension_numbers<[1], [0], [0], [1], [0, 0, 1, 1], [], []>} : vector<8x32xf32>, vector<32x128xf32>, vector<8x128xf32> -> vector<8x128xf32>
    %273 = arith.addf %27, %272 : vector<8x128xf32>
    %274 = vector.extract_strided_slice %273 {offsets = [0, 0], sizes = [8, 96], strides = [1, 1]} : vector<8x128xf32> to vector<8x96xf32>
    %275 = arith.negf %274 : vector<8x96xf32>
    %276 = math.exp %275 : vector<8x96xf32>
    %cst_45 = arith.constant 1.000000e+00 : f32
    %277 = vector.broadcast %cst_45 : f32 to vector<8x96xf32>
    %278 = arith.addf %277, %276 : vector<8x96xf32>
    %279 = arith.divf %277, %278 : vector<8x96xf32>
    %280 = vector.extract_strided_slice %273 {offsets = [0, 96], sizes = [8, 32], strides = [1, 1]} : vector<8x128xf32> to vector<8x32xf32>
    %281 = math.tanh %280 : vector<8x32xf32>
    %282 = vector.extract_strided_slice %279 {offsets = [0, 0], sizes = [8, 32], strides = [1, 1]} : vector<8x96xf32> to vector<8x32xf32>
    %283 = vector.extract_strided_slice %279 {offsets = [0, 32], sizes = [8, 32], strides = [1, 1]} : vector<8x96xf32> to vector<8x32xf32>
    %284 = vector.extract_strided_slice %279 {offsets = [0, 64], sizes = [8, 32], strides = [1, 1]} : vector<8x96xf32> to vector<8x32xf32>
    %285 = arith.mulf %283, %250 : vector<8x32xf32>
    %286 = arith.mulf %282, %281 : vector<8x32xf32>
    %287 = arith.addf %285, %286 : vector<8x32xf32>
    %288 = math.tanh %287 : vector<8x32xf32>
    %289 = arith.mulf %284, %288 : vector<8x32xf32>
    %290 = tpu.concatenate %252, %271 in 1 : vector<8x32xf32>, vector<8x32xf32> -> vector<8x64xf32>
    %cst_46 = arith.constant dense<0.000000e+00> : vector<8x128xf32>
    %291 = tpu.matmul %290, %4, %cst_46 {dimension_numbers = #tpu.dot_dimension_numbers<[1], [0], [0], [1], [0, 0, 1, 1], [], []>} : vector<8x64xf32>, vector<64x128xf32>, vector<8x128xf32> -> vector<8x128xf32>
    %292 = arith.addf %291, %7 : vector<8x128xf32>
    %293 = vector.extract_strided_slice %292 {offsets = [0, 0], sizes = [8, 96], strides = [1, 1]} : vector<8x128xf32> to vector<8x96xf32>
    %294 = arith.negf %293 : vector<8x96xf32>
    %295 = math.exp %294 : vector<8x96xf32>
    %cst_47 = arith.constant 1.000000e+00 : f32
    %296 = vector.broadcast %cst_47 : f32 to vector<8x96xf32>
    %297 = arith.addf %296, %295 : vector<8x96xf32>
    %298 = arith.divf %296, %297 : vector<8x96xf32>
    %299 = vector.extract_strided_slice %292 {offsets = [0, 96], sizes = [8, 32], strides = [1, 1]} : vector<8x128xf32> to vector<8x32xf32>
    %300 = math.tanh %299 : vector<8x32xf32>
    %301 = vector.extract_strided_slice %298 {offsets = [0, 0], sizes = [8, 32], strides = [1, 1]} : vector<8x96xf32> to vector<8x32xf32>
    %302 = vector.extract_strided_slice %298 {offsets = [0, 32], sizes = [8, 32], strides = [1, 1]} : vector<8x96xf32> to vector<8x32xf32>
    %303 = vector.extract_strided_slice %298 {offsets = [0, 64], sizes = [8, 32], strides = [1, 1]} : vector<8x96xf32> to vector<8x32xf32>
    %304 = arith.mulf %302, %269 : vector<8x32xf32>
    %305 = arith.mulf %301, %300 : vector<8x32xf32>
    %306 = arith.addf %304, %305 : vector<8x32xf32>
    %307 = math.tanh %306 : vector<8x32xf32>
    %308 = arith.mulf %303, %307 : vector<8x32xf32>
    %309 = tpu.concatenate %289, %308 in 1 : vector<8x32xf32>, vector<8x32xf32> -> vector<8x64xf32>
    %cst_48 = arith.constant dense<0.000000e+00> : vector<8x128xf32>
    %310 = tpu.matmul %309, %4, %cst_48 {dimension_numbers = #tpu.dot_dimension_numbers<[1], [0], [0], [1], [0, 0, 1, 1], [], []>} : vector<8x64xf32>, vector<64x128xf32>, vector<8x128xf32> -> vector<8x128xf32>
    %311 = arith.addf %310, %7 : vector<8x128xf32>
    %312 = vector.extract_strided_slice %311 {offsets = [0, 0], sizes = [8, 96], strides = [1, 1]} : vector<8x128xf32> to vector<8x96xf32>
    %313 = arith.negf %312 : vector<8x96xf32>
    %314 = math.exp %313 : vector<8x96xf32>
    %cst_49 = arith.constant 1.000000e+00 : f32
    %315 = vector.broadcast %cst_49 : f32 to vector<8x96xf32>
    %316 = arith.addf %315, %314 : vector<8x96xf32>
    %317 = arith.divf %315, %316 : vector<8x96xf32>
    %318 = vector.extract_strided_slice %311 {offsets = [0, 96], sizes = [8, 32], strides = [1, 1]} : vector<8x128xf32> to vector<8x32xf32>
    %319 = math.tanh %318 : vector<8x32xf32>
    %320 = vector.extract_strided_slice %317 {offsets = [0, 0], sizes = [8, 32], strides = [1, 1]} : vector<8x96xf32> to vector<8x32xf32>
    %321 = vector.extract_strided_slice %317 {offsets = [0, 32], sizes = [8, 32], strides = [1, 1]} : vector<8x96xf32> to vector<8x32xf32>
    %322 = vector.extract_strided_slice %317 {offsets = [0, 64], sizes = [8, 32], strides = [1, 1]} : vector<8x96xf32> to vector<8x32xf32>
    %323 = arith.mulf %321, %306 : vector<8x32xf32>
    %324 = arith.mulf %320, %319 : vector<8x32xf32>
    %325 = arith.addf %323, %324 : vector<8x32xf32>
    %326 = math.tanh %325 : vector<8x32xf32>
    %327 = arith.mulf %322, %326 : vector<8x32xf32>
    %cst_50 = arith.constant dense<0.000000e+00> : vector<8x128xf32>
    %328 = tpu.matmul %327, %10, %cst_50 {dimension_numbers = #tpu.dot_dimension_numbers<[1], [0], [0], [1], [0, 0, 1, 1], [], []>} : vector<8x32xf32>, vector<32x128xf32>, vector<8x128xf32> -> vector<8x128xf32>
    %329 = vector.broadcast %9 : vector<1x128xf32> to vector<8x128xf32>
    %330 = arith.addf %328, %329 : vector<8x128xf32>
    %cst_51 = arith.constant 0.000000e+00 : f32
    %331 = vector.broadcast %cst_51 : f32 to vector<8x32xf32>
    %cst_52 = arith.constant 0.000000e+00 : f32
    %332 = vector.broadcast %cst_52 : f32 to vector<8x32xf32>
    %cst_53 = arith.constant 0.000000e+00 : f32
    %333 = vector.broadcast %cst_53 : f32 to vector<8x32xf32>
    %cst_54 = arith.constant 0.000000e+00 : f32
    %334 = vector.broadcast %cst_54 : f32 to vector<8x32xf32>
    %cst_55 = arith.constant dense<0.000000e+00> : vector<8x128xf32>
    %335 = tpu.matmul %331, %11, %cst_55 {dimension_numbers = #tpu.dot_dimension_numbers<[1], [0], [0], [1], [0, 0, 1, 1], [], []>} : vector<8x32xf32>, vector<32x128xf32>, vector<8x128xf32> -> vector<8x128xf32>
    %336 = arith.addf %330, %335 : vector<8x128xf32>
    %337 = vector.extract_strided_slice %336 {offsets = [0, 0], sizes = [8, 96], strides = [1, 1]} : vector<8x128xf32> to vector<8x96xf32>
    %338 = arith.negf %337 : vector<8x96xf32>
    %339 = math.exp %338 : vector<8x96xf32>
    %cst_56 = arith.constant 1.000000e+00 : f32
    %340 = vector.broadcast %cst_56 : f32 to vector<8x96xf32>
    %341 = arith.addf %340, %339 : vector<8x96xf32>
    %342 = arith.divf %340, %341 : vector<8x96xf32>
    %343 = vector.extract_strided_slice %336 {offsets = [0, 96], sizes = [8, 32], strides = [1, 1]} : vector<8x128xf32> to vector<8x32xf32>
    %344 = math.tanh %343 : vector<8x32xf32>
    %345 = vector.extract_strided_slice %342 {offsets = [0, 0], sizes = [8, 32], strides = [1, 1]} : vector<8x96xf32> to vector<8x32xf32>
    %346 = vector.extract_strided_slice %342 {offsets = [0, 32], sizes = [8, 32], strides = [1, 1]} : vector<8x96xf32> to vector<8x32xf32>
    %347 = vector.extract_strided_slice %342 {offsets = [0, 64], sizes = [8, 32], strides = [1, 1]} : vector<8x96xf32> to vector<8x32xf32>
    %348 = arith.mulf %346, %333 : vector<8x32xf32>
    %349 = arith.mulf %345, %344 : vector<8x32xf32>
    %350 = arith.addf %348, %349 : vector<8x32xf32>
    %351 = math.tanh %350 : vector<8x32xf32>
    %352 = arith.mulf %347, %351 : vector<8x32xf32>
    %cst_57 = arith.constant dense<0.000000e+00> : vector<8x128xf32>
    %353 = tpu.matmul %352, %11, %cst_57 {dimension_numbers = #tpu.dot_dimension_numbers<[1], [0], [0], [1], [0, 0, 1, 1], [], []>} : vector<8x32xf32>, vector<32x128xf32>, vector<8x128xf32> -> vector<8x128xf32>
    %354 = arith.addf %330, %353 : vector<8x128xf32>
    %355 = vector.extract_strided_slice %354 {offsets = [0, 0], sizes = [8, 96], strides = [1, 1]} : vector<8x128xf32> to vector<8x96xf32>
    %356 = arith.negf %355 : vector<8x96xf32>
    %357 = math.exp %356 : vector<8x96xf32>
    %cst_58 = arith.constant 1.000000e+00 : f32
    %358 = vector.broadcast %cst_58 : f32 to vector<8x96xf32>
    %359 = arith.addf %358, %357 : vector<8x96xf32>
    %360 = arith.divf %358, %359 : vector<8x96xf32>
    %361 = vector.extract_strided_slice %354 {offsets = [0, 96], sizes = [8, 32], strides = [1, 1]} : vector<8x128xf32> to vector<8x32xf32>
    %362 = math.tanh %361 : vector<8x32xf32>
    %363 = vector.extract_strided_slice %360 {offsets = [0, 0], sizes = [8, 32], strides = [1, 1]} : vector<8x96xf32> to vector<8x32xf32>
    %364 = vector.extract_strided_slice %360 {offsets = [0, 32], sizes = [8, 32], strides = [1, 1]} : vector<8x96xf32> to vector<8x32xf32>
    %365 = vector.extract_strided_slice %360 {offsets = [0, 64], sizes = [8, 32], strides = [1, 1]} : vector<8x96xf32> to vector<8x32xf32>
    %366 = arith.mulf %364, %350 : vector<8x32xf32>
    %367 = arith.mulf %363, %362 : vector<8x32xf32>
    %368 = arith.addf %366, %367 : vector<8x32xf32>
    %369 = math.tanh %368 : vector<8x32xf32>
    %370 = arith.mulf %365, %369 : vector<8x32xf32>
    %371 = tpu.concatenate %352, %332 in 1 : vector<8x32xf32>, vector<8x32xf32> -> vector<8x64xf32>
    %cst_59 = arith.constant dense<0.000000e+00> : vector<8x128xf32>
    %372 = tpu.matmul %371, %12, %cst_59 {dimension_numbers = #tpu.dot_dimension_numbers<[1], [0], [0], [1], [0, 0, 1, 1], [], []>} : vector<8x64xf32>, vector<64x128xf32>, vector<8x128xf32> -> vector<8x128xf32>
    %373 = arith.addf %372, %15 : vector<8x128xf32>
    %374 = vector.extract_strided_slice %373 {offsets = [0, 0], sizes = [8, 96], strides = [1, 1]} : vector<8x128xf32> to vector<8x96xf32>
    %375 = arith.negf %374 : vector<8x96xf32>
    %376 = math.exp %375 : vector<8x96xf32>
    %cst_60 = arith.constant 1.000000e+00 : f32
    %377 = vector.broadcast %cst_60 : f32 to vector<8x96xf32>
    %378 = arith.addf %377, %376 : vector<8x96xf32>
    %379 = arith.divf %377, %378 : vector<8x96xf32>
    %380 = vector.extract_strided_slice %373 {offsets = [0, 96], sizes = [8, 32], strides = [1, 1]} : vector<8x128xf32> to vector<8x32xf32>
    %381 = math.tanh %380 : vector<8x32xf32>
    %382 = vector.extract_strided_slice %379 {offsets = [0, 0], sizes = [8, 32], strides = [1, 1]} : vector<8x96xf32> to vector<8x32xf32>
    %383 = vector.extract_strided_slice %379 {offsets = [0, 32], sizes = [8, 32], strides = [1, 1]} : vector<8x96xf32> to vector<8x32xf32>
    %384 = vector.extract_strided_slice %379 {offsets = [0, 64], sizes = [8, 32], strides = [1, 1]} : vector<8x96xf32> to vector<8x32xf32>
    %385 = arith.mulf %383, %334 : vector<8x32xf32>
    %386 = arith.mulf %382, %381 : vector<8x32xf32>
    %387 = arith.addf %385, %386 : vector<8x32xf32>
    %388 = math.tanh %387 : vector<8x32xf32>
    %389 = arith.mulf %384, %388 : vector<8x32xf32>
    %cst_61 = arith.constant dense<0.000000e+00> : vector<8x128xf32>
    %390 = tpu.matmul %370, %11, %cst_61 {dimension_numbers = #tpu.dot_dimension_numbers<[1], [0], [0], [1], [0, 0, 1, 1], [], []>} : vector<8x32xf32>, vector<32x128xf32>, vector<8x128xf32> -> vector<8x128xf32>
    %391 = arith.addf %330, %390 : vector<8x128xf32>
    %392 = vector.extract_strided_slice %391 {offsets = [0, 0], sizes = [8, 96], strides = [1, 1]} : vector<8x128xf32> to vector<8x96xf32>
    %393 = arith.negf %392 : vector<8x96xf32>
    %394 = math.exp %393 : vector<8x96xf32>
    %cst_62 = arith.constant 1.000000e+00 : f32
    %395 = vector.broadcast %cst_62 : f32 to vector<8x96xf32>
    %396 = arith.addf %395, %394 : vector<8x96xf32>
    %397 = arith.divf %395, %396 : vector<8x96xf32>
    %398 = vector.extract_strided_slice %391 {offsets = [0, 96], sizes = [8, 32], strides = [1, 1]} : vector<8x128xf32> to vector<8x32xf32>
    %399 = math.tanh %398 : vector<8x32xf32>
    %400 = vector.extract_strided_slice %397 {offsets = [0, 0], sizes = [8, 32], strides = [1, 1]} : vector<8x96xf32> to vector<8x32xf32>
    %401 = vector.extract_strided_slice %397 {offsets = [0, 32], sizes = [8, 32], strides = [1, 1]} : vector<8x96xf32> to vector<8x32xf32>
    %402 = vector.extract_strided_slice %397 {offsets = [0, 64], sizes = [8, 32], strides = [1, 1]} : vector<8x96xf32> to vector<8x32xf32>
    %403 = arith.mulf %401, %368 : vector<8x32xf32>
    %404 = arith.mulf %400, %399 : vector<8x32xf32>
    %405 = arith.addf %403, %404 : vector<8x32xf32>
    %406 = math.tanh %405 : vector<8x32xf32>
    %407 = arith.mulf %402, %406 : vector<8x32xf32>
    %408 = tpu.concatenate %370, %389 in 1 : vector<8x32xf32>, vector<8x32xf32> -> vector<8x64xf32>
    %cst_63 = arith.constant dense<0.000000e+00> : vector<8x128xf32>
    %409 = tpu.matmul %408, %12, %cst_63 {dimension_numbers = #tpu.dot_dimension_numbers<[1], [0], [0], [1], [0, 0, 1, 1], [], []>} : vector<8x64xf32>, vector<64x128xf32>, vector<8x128xf32> -> vector<8x128xf32>
    %410 = arith.addf %409, %15 : vector<8x128xf32>
    %411 = vector.extract_strided_slice %410 {offsets = [0, 0], sizes = [8, 96], strides = [1, 1]} : vector<8x128xf32> to vector<8x96xf32>
    %412 = arith.negf %411 : vector<8x96xf32>
    %413 = math.exp %412 : vector<8x96xf32>
    %cst_64 = arith.constant 1.000000e+00 : f32
    %414 = vector.broadcast %cst_64 : f32 to vector<8x96xf32>
    %415 = arith.addf %414, %413 : vector<8x96xf32>
    %416 = arith.divf %414, %415 : vector<8x96xf32>
    %417 = vector.extract_strided_slice %410 {offsets = [0, 96], sizes = [8, 32], strides = [1, 1]} : vector<8x128xf32> to vector<8x32xf32>
    %418 = math.tanh %417 : vector<8x32xf32>
    %419 = vector.extract_strided_slice %416 {offsets = [0, 0], sizes = [8, 32], strides = [1, 1]} : vector<8x96xf32> to vector<8x32xf32>
    %420 = vector.extract_strided_slice %416 {offsets = [0, 32], sizes = [8, 32], strides = [1, 1]} : vector<8x96xf32> to vector<8x32xf32>
    %421 = vector.extract_strided_slice %416 {offsets = [0, 64], sizes = [8, 32], strides = [1, 1]} : vector<8x96xf32> to vector<8x32xf32>
    %422 = arith.mulf %420, %387 : vector<8x32xf32>
    %423 = arith.mulf %419, %418 : vector<8x32xf32>
    %424 = arith.addf %422, %423 : vector<8x32xf32>
    %425 = math.tanh %424 : vector<8x32xf32>
    %426 = arith.mulf %421, %425 : vector<8x32xf32>
    %cst_65 = arith.constant dense<0.000000e+00> : vector<8x128xf32>
    %427 = tpu.matmul %407, %11, %cst_65 {dimension_numbers = #tpu.dot_dimension_numbers<[1], [0], [0], [1], [0, 0, 1, 1], [], []>} : vector<8x32xf32>, vector<32x128xf32>, vector<8x128xf32> -> vector<8x128xf32>
    %428 = arith.addf %330, %427 : vector<8x128xf32>
    %429 = vector.extract_strided_slice %428 {offsets = [0, 0], sizes = [8, 96], strides = [1, 1]} : vector<8x128xf32> to vector<8x96xf32>
    %430 = arith.negf %429 : vector<8x96xf32>
    %431 = math.exp %430 : vector<8x96xf32>
    %cst_66 = arith.constant 1.000000e+00 : f32
    %432 = vector.broadcast %cst_66 : f32 to vector<8x96xf32>
    %433 = arith.addf %432, %431 : vector<8x96xf32>
    %434 = arith.divf %432, %433 : vector<8x96xf32>
    %435 = vector.extract_strided_slice %428 {offsets = [0, 96], sizes = [8, 32], strides = [1, 1]} : vector<8x128xf32> to vector<8x32xf32>
    %436 = math.tanh %435 : vector<8x32xf32>
    %437 = vector.extract_strided_slice %434 {offsets = [0, 0], sizes = [8, 32], strides = [1, 1]} : vector<8x96xf32> to vector<8x32xf32>
    %438 = vector.extract_strided_slice %434 {offsets = [0, 32], sizes = [8, 32], strides = [1, 1]} : vector<8x96xf32> to vector<8x32xf32>
    %439 = vector.extract_strided_slice %434 {offsets = [0, 64], sizes = [8, 32], strides = [1, 1]} : vector<8x96xf32> to vector<8x32xf32>
    %440 = arith.mulf %438, %405 : vector<8x32xf32>
    %441 = arith.mulf %437, %436 : vector<8x32xf32>
    %442 = arith.addf %440, %441 : vector<8x32xf32>
    %443 = math.tanh %442 : vector<8x32xf32>
    %444 = arith.mulf %439, %443 : vector<8x32xf32>
    %445 = tpu.concatenate %407, %426 in 1 : vector<8x32xf32>, vector<8x32xf32> -> vector<8x64xf32>
    %cst_67 = arith.constant dense<0.000000e+00> : vector<8x128xf32>
    %446 = tpu.matmul %445, %12, %cst_67 {dimension_numbers = #tpu.dot_dimension_numbers<[1], [0], [0], [1], [0, 0, 1, 1], [], []>} : vector<8x64xf32>, vector<64x128xf32>, vector<8x128xf32> -> vector<8x128xf32>
    %447 = arith.addf %446, %15 : vector<8x128xf32>
    %448 = vector.extract_strided_slice %447 {offsets = [0, 0], sizes = [8, 96], strides = [1, 1]} : vector<8x128xf32> to vector<8x96xf32>
    %449 = arith.negf %448 : vector<8x96xf32>
    %450 = math.exp %449 : vector<8x96xf32>
    %cst_68 = arith.constant 1.000000e+00 : f32
    %451 = vector.broadcast %cst_68 : f32 to vector<8x96xf32>
    %452 = arith.addf %451, %450 : vector<8x96xf32>
    %453 = arith.divf %451, %452 : vector<8x96xf32>
    %454 = vector.extract_strided_slice %447 {offsets = [0, 96], sizes = [8, 32], strides = [1, 1]} : vector<8x128xf32> to vector<8x32xf32>
    %455 = math.tanh %454 : vector<8x32xf32>
    %456 = vector.extract_strided_slice %453 {offsets = [0, 0], sizes = [8, 32], strides = [1, 1]} : vector<8x96xf32> to vector<8x32xf32>
    %457 = vector.extract_strided_slice %453 {offsets = [0, 32], sizes = [8, 32], strides = [1, 1]} : vector<8x96xf32> to vector<8x32xf32>
    %458 = vector.extract_strided_slice %453 {offsets = [0, 64], sizes = [8, 32], strides = [1, 1]} : vector<8x96xf32> to vector<8x32xf32>
    %459 = arith.mulf %457, %424 : vector<8x32xf32>
    %460 = arith.mulf %456, %455 : vector<8x32xf32>
    %461 = arith.addf %459, %460 : vector<8x32xf32>
    %462 = math.tanh %461 : vector<8x32xf32>
    %463 = arith.mulf %458, %462 : vector<8x32xf32>
    %cst_69 = arith.constant dense<0.000000e+00> : vector<8x128xf32>
    %464 = tpu.matmul %444, %11, %cst_69 {dimension_numbers = #tpu.dot_dimension_numbers<[1], [0], [0], [1], [0, 0, 1, 1], [], []>} : vector<8x32xf32>, vector<32x128xf32>, vector<8x128xf32> -> vector<8x128xf32>
    %465 = arith.addf %330, %464 : vector<8x128xf32>
    %466 = vector.extract_strided_slice %465 {offsets = [0, 0], sizes = [8, 96], strides = [1, 1]} : vector<8x128xf32> to vector<8x96xf32>
    %467 = arith.negf %466 : vector<8x96xf32>
    %468 = math.exp %467 : vector<8x96xf32>
    %cst_70 = arith.constant 1.000000e+00 : f32
    %469 = vector.broadcast %cst_70 : f32 to vector<8x96xf32>
    %470 = arith.addf %469, %468 : vector<8x96xf32>
    %471 = arith.divf %469, %470 : vector<8x96xf32>
    %472 = vector.extract_strided_slice %465 {offsets = [0, 96], sizes = [8, 32], strides = [1, 1]} : vector<8x128xf32> to vector<8x32xf32>
    %473 = math.tanh %472 : vector<8x32xf32>
    %474 = vector.extract_strided_slice %471 {offsets = [0, 0], sizes = [8, 32], strides = [1, 1]} : vector<8x96xf32> to vector<8x32xf32>
    %475 = vector.extract_strided_slice %471 {offsets = [0, 32], sizes = [8, 32], strides = [1, 1]} : vector<8x96xf32> to vector<8x32xf32>
    %476 = vector.extract_strided_slice %471 {offsets = [0, 64], sizes = [8, 32], strides = [1, 1]} : vector<8x96xf32> to vector<8x32xf32>
    %477 = arith.mulf %475, %442 : vector<8x32xf32>
    %478 = arith.mulf %474, %473 : vector<8x32xf32>
    %479 = arith.addf %477, %478 : vector<8x32xf32>
    %480 = math.tanh %479 : vector<8x32xf32>
    %481 = arith.mulf %476, %480 : vector<8x32xf32>
    %482 = tpu.concatenate %444, %463 in 1 : vector<8x32xf32>, vector<8x32xf32> -> vector<8x64xf32>
    %cst_71 = arith.constant dense<0.000000e+00> : vector<8x128xf32>
    %483 = tpu.matmul %482, %12, %cst_71 {dimension_numbers = #tpu.dot_dimension_numbers<[1], [0], [0], [1], [0, 0, 1, 1], [], []>} : vector<8x64xf32>, vector<64x128xf32>, vector<8x128xf32> -> vector<8x128xf32>
    %484 = arith.addf %483, %15 : vector<8x128xf32>
    %485 = vector.extract_strided_slice %484 {offsets = [0, 0], sizes = [8, 96], strides = [1, 1]} : vector<8x128xf32> to vector<8x96xf32>
    %486 = arith.negf %485 : vector<8x96xf32>
    %487 = math.exp %486 : vector<8x96xf32>
    %cst_72 = arith.constant 1.000000e+00 : f32
    %488 = vector.broadcast %cst_72 : f32 to vector<8x96xf32>
    %489 = arith.addf %488, %487 : vector<8x96xf32>
    %490 = arith.divf %488, %489 : vector<8x96xf32>
    %491 = vector.extract_strided_slice %484 {offsets = [0, 96], sizes = [8, 32], strides = [1, 1]} : vector<8x128xf32> to vector<8x32xf32>
    %492 = math.tanh %491 : vector<8x32xf32>
    %493 = vector.extract_strided_slice %490 {offsets = [0, 0], sizes = [8, 32], strides = [1, 1]} : vector<8x96xf32> to vector<8x32xf32>
    %494 = vector.extract_strided_slice %490 {offsets = [0, 32], sizes = [8, 32], strides = [1, 1]} : vector<8x96xf32> to vector<8x32xf32>
    %495 = vector.extract_strided_slice %490 {offsets = [0, 64], sizes = [8, 32], strides = [1, 1]} : vector<8x96xf32> to vector<8x32xf32>
    %496 = arith.mulf %494, %461 : vector<8x32xf32>
    %497 = arith.mulf %493, %492 : vector<8x32xf32>
    %498 = arith.addf %496, %497 : vector<8x32xf32>
    %499 = math.tanh %498 : vector<8x32xf32>
    %500 = arith.mulf %495, %499 : vector<8x32xf32>
    %cst_73 = arith.constant dense<0.000000e+00> : vector<8x128xf32>
    %501 = tpu.matmul %481, %11, %cst_73 {dimension_numbers = #tpu.dot_dimension_numbers<[1], [0], [0], [1], [0, 0, 1, 1], [], []>} : vector<8x32xf32>, vector<32x128xf32>, vector<8x128xf32> -> vector<8x128xf32>
    %502 = arith.addf %330, %501 : vector<8x128xf32>
    %503 = vector.extract_strided_slice %502 {offsets = [0, 0], sizes = [8, 96], strides = [1, 1]} : vector<8x128xf32> to vector<8x96xf32>
    %504 = arith.negf %503 : vector<8x96xf32>
    %505 = math.exp %504 : vector<8x96xf32>
    %cst_74 = arith.constant 1.000000e+00 : f32
    %506 = vector.broadcast %cst_74 : f32 to vector<8x96xf32>
    %507 = arith.addf %506, %505 : vector<8x96xf32>
    %508 = arith.divf %506, %507 : vector<8x96xf32>
    %509 = vector.extract_strided_slice %502 {offsets = [0, 96], sizes = [8, 32], strides = [1, 1]} : vector<8x128xf32> to vector<8x32xf32>
    %510 = math.tanh %509 : vector<8x32xf32>
    %511 = vector.extract_strided_slice %508 {offsets = [0, 0], sizes = [8, 32], strides = [1, 1]} : vector<8x96xf32> to vector<8x32xf32>
    %512 = vector.extract_strided_slice %508 {offsets = [0, 32], sizes = [8, 32], strides = [1, 1]} : vector<8x96xf32> to vector<8x32xf32>
    %513 = vector.extract_strided_slice %508 {offsets = [0, 64], sizes = [8, 32], strides = [1, 1]} : vector<8x96xf32> to vector<8x32xf32>
    %514 = arith.mulf %512, %479 : vector<8x32xf32>
    %515 = arith.mulf %511, %510 : vector<8x32xf32>
    %516 = arith.addf %514, %515 : vector<8x32xf32>
    %517 = math.tanh %516 : vector<8x32xf32>
    %518 = arith.mulf %513, %517 : vector<8x32xf32>
    %519 = tpu.concatenate %481, %500 in 1 : vector<8x32xf32>, vector<8x32xf32> -> vector<8x64xf32>
    %cst_75 = arith.constant dense<0.000000e+00> : vector<8x128xf32>
    %520 = tpu.matmul %519, %12, %cst_75 {dimension_numbers = #tpu.dot_dimension_numbers<[1], [0], [0], [1], [0, 0, 1, 1], [], []>} : vector<8x64xf32>, vector<64x128xf32>, vector<8x128xf32> -> vector<8x128xf32>
    %521 = arith.addf %520, %15 : vector<8x128xf32>
    %522 = vector.extract_strided_slice %521 {offsets = [0, 0], sizes = [8, 96], strides = [1, 1]} : vector<8x128xf32> to vector<8x96xf32>
    %523 = arith.negf %522 : vector<8x96xf32>
    %524 = math.exp %523 : vector<8x96xf32>
    %cst_76 = arith.constant 1.000000e+00 : f32
    %525 = vector.broadcast %cst_76 : f32 to vector<8x96xf32>
    %526 = arith.addf %525, %524 : vector<8x96xf32>
    %527 = arith.divf %525, %526 : vector<8x96xf32>
    %528 = vector.extract_strided_slice %521 {offsets = [0, 96], sizes = [8, 32], strides = [1, 1]} : vector<8x128xf32> to vector<8x32xf32>
    %529 = math.tanh %528 : vector<8x32xf32>
    %530 = vector.extract_strided_slice %527 {offsets = [0, 0], sizes = [8, 32], strides = [1, 1]} : vector<8x96xf32> to vector<8x32xf32>
    %531 = vector.extract_strided_slice %527 {offsets = [0, 32], sizes = [8, 32], strides = [1, 1]} : vector<8x96xf32> to vector<8x32xf32>
    %532 = vector.extract_strided_slice %527 {offsets = [0, 64], sizes = [8, 32], strides = [1, 1]} : vector<8x96xf32> to vector<8x32xf32>
    %533 = arith.mulf %531, %498 : vector<8x32xf32>
    %534 = arith.mulf %530, %529 : vector<8x32xf32>
    %535 = arith.addf %533, %534 : vector<8x32xf32>
    %536 = math.tanh %535 : vector<8x32xf32>
    %537 = arith.mulf %532, %536 : vector<8x32xf32>
    %cst_77 = arith.constant dense<0.000000e+00> : vector<8x128xf32>
    %538 = tpu.matmul %518, %11, %cst_77 {dimension_numbers = #tpu.dot_dimension_numbers<[1], [0], [0], [1], [0, 0, 1, 1], [], []>} : vector<8x32xf32>, vector<32x128xf32>, vector<8x128xf32> -> vector<8x128xf32>
    %539 = arith.addf %330, %538 : vector<8x128xf32>
    %540 = vector.extract_strided_slice %539 {offsets = [0, 0], sizes = [8, 96], strides = [1, 1]} : vector<8x128xf32> to vector<8x96xf32>
    %541 = arith.negf %540 : vector<8x96xf32>
    %542 = math.exp %541 : vector<8x96xf32>
    %cst_78 = arith.constant 1.000000e+00 : f32
    %543 = vector.broadcast %cst_78 : f32 to vector<8x96xf32>
    %544 = arith.addf %543, %542 : vector<8x96xf32>
    %545 = arith.divf %543, %544 : vector<8x96xf32>
    %546 = vector.extract_strided_slice %539 {offsets = [0, 96], sizes = [8, 32], strides = [1, 1]} : vector<8x128xf32> to vector<8x32xf32>
    %547 = math.tanh %546 : vector<8x32xf32>
    %548 = vector.extract_strided_slice %545 {offsets = [0, 0], sizes = [8, 32], strides = [1, 1]} : vector<8x96xf32> to vector<8x32xf32>
    %549 = vector.extract_strided_slice %545 {offsets = [0, 32], sizes = [8, 32], strides = [1, 1]} : vector<8x96xf32> to vector<8x32xf32>
    %550 = vector.extract_strided_slice %545 {offsets = [0, 64], sizes = [8, 32], strides = [1, 1]} : vector<8x96xf32> to vector<8x32xf32>
    %551 = arith.mulf %549, %516 : vector<8x32xf32>
    %552 = arith.mulf %548, %547 : vector<8x32xf32>
    %553 = arith.addf %551, %552 : vector<8x32xf32>
    %554 = math.tanh %553 : vector<8x32xf32>
    %555 = arith.mulf %550, %554 : vector<8x32xf32>
    %556 = tpu.concatenate %518, %537 in 1 : vector<8x32xf32>, vector<8x32xf32> -> vector<8x64xf32>
    %cst_79 = arith.constant dense<0.000000e+00> : vector<8x128xf32>
    %557 = tpu.matmul %556, %12, %cst_79 {dimension_numbers = #tpu.dot_dimension_numbers<[1], [0], [0], [1], [0, 0, 1, 1], [], []>} : vector<8x64xf32>, vector<64x128xf32>, vector<8x128xf32> -> vector<8x128xf32>
    %558 = arith.addf %557, %15 : vector<8x128xf32>
    %559 = vector.extract_strided_slice %558 {offsets = [0, 0], sizes = [8, 96], strides = [1, 1]} : vector<8x128xf32> to vector<8x96xf32>
    %560 = arith.negf %559 : vector<8x96xf32>
    %561 = math.exp %560 : vector<8x96xf32>
    %cst_80 = arith.constant 1.000000e+00 : f32
    %562 = vector.broadcast %cst_80 : f32 to vector<8x96xf32>
    %563 = arith.addf %562, %561 : vector<8x96xf32>
    %564 = arith.divf %562, %563 : vector<8x96xf32>
    %565 = vector.extract_strided_slice %558 {offsets = [0, 96], sizes = [8, 32], strides = [1, 1]} : vector<8x128xf32> to vector<8x32xf32>
    %566 = math.tanh %565 : vector<8x32xf32>
    %567 = vector.extract_strided_slice %564 {offsets = [0, 0], sizes = [8, 32], strides = [1, 1]} : vector<8x96xf32> to vector<8x32xf32>
    %568 = vector.extract_strided_slice %564 {offsets = [0, 32], sizes = [8, 32], strides = [1, 1]} : vector<8x96xf32> to vector<8x32xf32>
    %569 = vector.extract_strided_slice %564 {offsets = [0, 64], sizes = [8, 32], strides = [1, 1]} : vector<8x96xf32> to vector<8x32xf32>
    %570 = arith.mulf %568, %535 : vector<8x32xf32>
    %571 = arith.mulf %567, %566 : vector<8x32xf32>
    %572 = arith.addf %570, %571 : vector<8x32xf32>
    %573 = math.tanh %572 : vector<8x32xf32>
    %574 = arith.mulf %569, %573 : vector<8x32xf32>
    %cst_81 = arith.constant dense<0.000000e+00> : vector<8x128xf32>
    %575 = tpu.matmul %555, %11, %cst_81 {dimension_numbers = #tpu.dot_dimension_numbers<[1], [0], [0], [1], [0, 0, 1, 1], [], []>} : vector<8x32xf32>, vector<32x128xf32>, vector<8x128xf32> -> vector<8x128xf32>
    %576 = arith.addf %330, %575 : vector<8x128xf32>
    %577 = vector.extract_strided_slice %576 {offsets = [0, 0], sizes = [8, 96], strides = [1, 1]} : vector<8x128xf32> to vector<8x96xf32>
    %578 = arith.negf %577 : vector<8x96xf32>
    %579 = math.exp %578 : vector<8x96xf32>
    %cst_82 = arith.constant 1.000000e+00 : f32
    %580 = vector.broadcast %cst_82 : f32 to vector<8x96xf32>
    %581 = arith.addf %580, %579 : vector<8x96xf32>
    %582 = arith.divf %580, %581 : vector<8x96xf32>
    %583 = vector.extract_strided_slice %576 {offsets = [0, 96], sizes = [8, 32], strides = [1, 1]} : vector<8x128xf32> to vector<8x32xf32>
    %584 = math.tanh %583 : vector<8x32xf32>
    %585 = vector.extract_strided_slice %582 {offsets = [0, 0], sizes = [8, 32], strides = [1, 1]} : vector<8x96xf32> to vector<8x32xf32>
    %586 = vector.extract_strided_slice %582 {offsets = [0, 32], sizes = [8, 32], strides = [1, 1]} : vector<8x96xf32> to vector<8x32xf32>
    %587 = vector.extract_strided_slice %582 {offsets = [0, 64], sizes = [8, 32], strides = [1, 1]} : vector<8x96xf32> to vector<8x32xf32>
    %588 = arith.mulf %586, %553 : vector<8x32xf32>
    %589 = arith.mulf %585, %584 : vector<8x32xf32>
    %590 = arith.addf %588, %589 : vector<8x32xf32>
    %591 = math.tanh %590 : vector<8x32xf32>
    %592 = arith.mulf %587, %591 : vector<8x32xf32>
    %593 = tpu.concatenate %555, %574 in 1 : vector<8x32xf32>, vector<8x32xf32> -> vector<8x64xf32>
    %cst_83 = arith.constant dense<0.000000e+00> : vector<8x128xf32>
    %594 = tpu.matmul %593, %12, %cst_83 {dimension_numbers = #tpu.dot_dimension_numbers<[1], [0], [0], [1], [0, 0, 1, 1], [], []>} : vector<8x64xf32>, vector<64x128xf32>, vector<8x128xf32> -> vector<8x128xf32>
    %595 = arith.addf %594, %15 : vector<8x128xf32>
    %596 = vector.extract_strided_slice %595 {offsets = [0, 0], sizes = [8, 96], strides = [1, 1]} : vector<8x128xf32> to vector<8x96xf32>
    %597 = arith.negf %596 : vector<8x96xf32>
    %598 = math.exp %597 : vector<8x96xf32>
    %cst_84 = arith.constant 1.000000e+00 : f32
    %599 = vector.broadcast %cst_84 : f32 to vector<8x96xf32>
    %600 = arith.addf %599, %598 : vector<8x96xf32>
    %601 = arith.divf %599, %600 : vector<8x96xf32>
    %602 = vector.extract_strided_slice %595 {offsets = [0, 96], sizes = [8, 32], strides = [1, 1]} : vector<8x128xf32> to vector<8x32xf32>
    %603 = math.tanh %602 : vector<8x32xf32>
    %604 = vector.extract_strided_slice %601 {offsets = [0, 0], sizes = [8, 32], strides = [1, 1]} : vector<8x96xf32> to vector<8x32xf32>
    %605 = vector.extract_strided_slice %601 {offsets = [0, 32], sizes = [8, 32], strides = [1, 1]} : vector<8x96xf32> to vector<8x32xf32>
    %606 = vector.extract_strided_slice %601 {offsets = [0, 64], sizes = [8, 32], strides = [1, 1]} : vector<8x96xf32> to vector<8x32xf32>
    %607 = arith.mulf %605, %572 : vector<8x32xf32>
    %608 = arith.mulf %604, %603 : vector<8x32xf32>
    %609 = arith.addf %607, %608 : vector<8x32xf32>
    %610 = math.tanh %609 : vector<8x32xf32>
    %611 = arith.mulf %606, %610 : vector<8x32xf32>
    %612 = tpu.concatenate %592, %611 in 1 : vector<8x32xf32>, vector<8x32xf32> -> vector<8x64xf32>
    %cst_85 = arith.constant dense<0.000000e+00> : vector<8x128xf32>
    %613 = tpu.matmul %612, %12, %cst_85 {dimension_numbers = #tpu.dot_dimension_numbers<[1], [0], [0], [1], [0, 0, 1, 1], [], []>} : vector<8x64xf32>, vector<64x128xf32>, vector<8x128xf32> -> vector<8x128xf32>
    %614 = arith.addf %613, %15 : vector<8x128xf32>
    %615 = vector.extract_strided_slice %614 {offsets = [0, 0], sizes = [8, 96], strides = [1, 1]} : vector<8x128xf32> to vector<8x96xf32>
    %616 = arith.negf %615 : vector<8x96xf32>
    %617 = math.exp %616 : vector<8x96xf32>
    %cst_86 = arith.constant 1.000000e+00 : f32
    %618 = vector.broadcast %cst_86 : f32 to vector<8x96xf32>
    %619 = arith.addf %618, %617 : vector<8x96xf32>
    %620 = arith.divf %618, %619 : vector<8x96xf32>
    %621 = vector.extract_strided_slice %614 {offsets = [0, 96], sizes = [8, 32], strides = [1, 1]} : vector<8x128xf32> to vector<8x32xf32>
    %622 = math.tanh %621 : vector<8x32xf32>
    %623 = vector.extract_strided_slice %620 {offsets = [0, 0], sizes = [8, 32], strides = [1, 1]} : vector<8x96xf32> to vector<8x32xf32>
    %624 = vector.extract_strided_slice %620 {offsets = [0, 32], sizes = [8, 32], strides = [1, 1]} : vector<8x96xf32> to vector<8x32xf32>
    %625 = vector.extract_strided_slice %620 {offsets = [0, 64], sizes = [8, 32], strides = [1, 1]} : vector<8x96xf32> to vector<8x32xf32>
    %626 = arith.mulf %624, %609 : vector<8x32xf32>
    %627 = arith.mulf %623, %622 : vector<8x32xf32>
    %628 = arith.addf %626, %627 : vector<8x32xf32>
    %629 = math.tanh %628 : vector<8x32xf32>
    %630 = arith.mulf %625, %629 : vector<8x32xf32>
    %631 = tpu.concatenate %389, %426, %463, %500, %537, %574, %611, %630 in 1 : vector<8x32xf32>, vector<8x32xf32>, vector<8x32xf32>, vector<8x32xf32>, vector<8x32xf32>, vector<8x32xf32>, vector<8x32xf32>, vector<8x32xf32> -> vector<8x256xf32>
    %c0_87 = arith.constant 0 : index
    %c0_88 = arith.constant 0 : index
    %632 = vector.load %arg3[%c0_87, %c0_88] : memref<8x256xf32, #tpu.memory_space<vmem>>, vector<8x256xf32>
    tpu.vector_store %arg3[%c0_87, %c0_88], %631 {strides = array<i32>} : memref<8x256xf32, #tpu.memory_space<vmem>>, vector<8x256xf32>,
    return
  }
}

</mosaic_0001>

<llo_original>
// kernel: recurrent_autoencoder_forward.1
$region0: #{recurrent_autoencoder_forward.1}
  #allocation0 [shape = 'u32[]', space=smem, size = 0x4, offset = 0x4, fixed_abs, tag = 'smem constant byte address 0x4 - core index']
  #allocation1 [shape = 'u32[144,128]{1,0:T(1,128)}', space=vmem, size = 0x12000, scoped, tag = 'internal scratch']
  %s0 = inlined_call_operand.vmem [shape: f32[64,32], index: 0, kind: input, shape index: {}]
  %s1 = inlined_call_operand.vmem [shape: f32[144,128], index: 1, kind: input, shape index: {}]
  %s2 = inlined_call_operand.hbm [shape: f32[144,128], index: 2, kind: input, shape index: {}]
  %s3 = inlined_call_operand.vmem [shape: f32[8,256], index: 3, kind: output, shape index: {}]
  %s4 = sld [smem:[#allocation0]]
  $region26: #{recurrent_autoencoder_forward.1} parent=0
    _
  %s6 = ssub.s32 1, %s4
  %s7 = scalar_select 0, %s6, %s4
  $region1: #{recurrent_autoencoder_forward.1} parent=0
    #allocation2 [shape = 'u8[73728]{0}', space=vmem, size = 0x12000, scoped, tag = 'input window, operand 2, single buffered']
    #allocation3 [shape = 's32[1]{0}', space=sflag, size = 0x4, scoped, tag = 'scoped memory for recurrent_autoencoder_forward.1']
    %8 = vsyncpa [#allocation3], 0
    // Predicated region
    $region2: #{recurrent_autoencoder_forward.1} parent=1 // pred_check
      _
    $region3: #{recurrent_autoencoder_forward.1} parent=1 // pred_check_branch
      %10 = sbr.rel (0) target = $region5
    $region4: #{recurrent_autoencoder_forward.1} parent=1 // pred_region
      _
    $region5: #{recurrent_autoencoder_forward.1} parent=1 // pred_fallthru
      _
    // Predicated region
    $region6: #{recurrent_autoencoder_forward.1} parent=1 // pred_check
      _
    $region7: #{recurrent_autoencoder_forward.1} parent=1 // pred_check_branch
      %12 = sbr.rel (0) target = $region9
    $region8: #{recurrent_autoencoder_forward.1} parent=1 // pred_region
      _
    $region9: #{recurrent_autoencoder_forward.1} parent=1 // pred_fallthru
      _
    // Predicated region
    $region10: #{recurrent_autoencoder_forward.1} parent=1 // pred_check
      _
    $region11: #{recurrent_autoencoder_forward.1} parent=1 // pred_check_branch
      %14 = sbr.rel (0) target = $region13
    $region12: #{recurrent_autoencoder_forward.1} parent=1 // pred_region
      %s16 = ssub.s32 2304, 2304
      %17 = vsyncadd [#allocation3], %s16
      %s18 = sshll.u32 [#allocation2], 4
      %s19 = int_to_ptr.vmem [resolvable:$true] %s18
      %24 = dma.hbm_to_vmem [thread:$0]  %s2, 2304, %s19, [#allocation3], 128, 128, 8
    $region13: #{recurrent_autoencoder_forward.1} parent=1 // pred_fallthru
      _
    // Predicated region
    $region14: #{recurrent_autoencoder_forward.1} parent=1 // pred_check
      _
    $region15: #{recurrent_autoencoder_forward.1} parent=1 // pred_check_branch
      %26 = sbr.rel (0) target = $region17
    $region16: #{recurrent_autoencoder_forward.1} parent=1 // pred_region
      %27 = dma.done [#allocation3], 2304
    $region17: #{recurrent_autoencoder_forward.1} parent=1 // pred_fallthru
      _
    %v28 = vld [vmem:[%s1] sm:$0xff]
    %v29 = vld [vmem:[%s1 + $0x8] sm:$0xff]
    %v30 = vld [vmem:[%s1 + $0x10] sm:$0xff]
    %v31 = vld [vmem:[%s1 + $0x18] sm:$0xff]
    %v32 = vld [vmem:[%s1 + $0x20] sm:$0xff]
    %v33 = vld [vmem:[%s1 + $0x28] sm:$0xff]
    %v34 = vld [vmem:[%s1 + $0x30] sm:$0xff]
    %v35 = vld [vmem:[%s1 + $0x38] sm:$0xff]
    %v36 = vld [vmem:[%s1 + $0x40] sm:$0x1]
    %v37 = vld [vmem:[%s1 + $0x48] sm:$0xff]
    %v38 = vld [vmem:[%s1 + $0x50] sm:$0xff]
    %v39 = vld [vmem:[%s1 + $0x58] sm:$0xff]
    %v40 = vld [vmem:[%s1 + $0x60] sm:$0xff]
    %v41 = vld [vmem:[%s1 + $0x68] sm:$0xff]
    %v42 = vld [vmem:[%s1 + $0x70] sm:$0xff]
    %v43 = vld [vmem:[%s1 + $0x78] sm:$0xff]
    %v44 = vld [vmem:[%s1 + $0x80] sm:$0xff]
    %v45 = vld [vmem:[%s1 + $0x88] sm:$0x1]
    %v46 = vlaneseq
    %v47 = vshrl.u32 %v46, 7
    %v48 = vsub.s32 0, %v47
    %v49 = vrot.slane %v45, %v48
    %v50 = vld [vmem:[#allocation2] sm:$0xff]
    %v51 = vld [vmem:[#allocation2 + $0x8] sm:$0xff]
    %v52 = vld [vmem:[#allocation2 + $0x10] sm:$0xff]
    %v53 = vld [vmem:[#allocation2 + $0x18] sm:$0xff]
    %v54 = vld [vmem:[#allocation2 + $0x20] sm:$0xff]
    %v55 = vld [vmem:[#allocation2 + $0x28] sm:$0xff]
    %v56 = vld [vmem:[#allocation2 + $0x30] sm:$0xff]
    %v57 = vld [vmem:[#allocation2 + $0x38] sm:$0xff]
    %v58 = vld [vmem:[#allocation2 + $0x40] sm:$0x1]
    %v59 = vld [vmem:[#allocation2 + $0x48] sm:$0xff]
    %v60 = vld [vmem:[#allocation2 + $0x50] sm:$0xff]
    %v61 = vld [vmem:[#allocation2 + $0x58] sm:$0xff]
    %v62 = vld [vmem:[#allocation2 + $0x60] sm:$0xff]
    %v63 = vld [vmem:[#allocation2 + $0x68] sm:$0xff]
    %v64 = vld [vmem:[#allocation2 + $0x70] sm:$0xff]
    %v65 = vld [vmem:[#allocation2 + $0x78] sm:$0xff]
    %v66 = vld [vmem:[#allocation2 + $0x80] sm:$0xff]
    %v67 = vld [vmem:[#allocation2 + $0x88] sm:$0x1]
    %v68 = vlaneseq
    %v69 = vshrl.u32 %v68, 7
    %v70 = vsub.s32 0, %v69
    %v71 = vrot.slane %v67, %v70
    %v72 = vld [vmem:[%s0] sm:$0xff]
    %v73 = vld [vmem:[%s0 + $0x8] sm:$0xff]
    %v74 = vld [vmem:[%s0 + $0x10] sm:$0xff]
    %v75 = vld [vmem:[%s0 + $0x18] sm:$0xff]
    %v76 = vld [vmem:[%s0 + $0x20] sm:$0xff]
    %v77 = vld [vmem:[%s0 + $0x28] sm:$0xff]
    %v78 = vld [vmem:[%s0 + $0x30] sm:$0xff]
    %v79 = vld [vmem:[%s0 + $0x38] sm:$0xff]
    %v80 = vlaneseq
    %v81 = vshrl.u32 %v80, 7
    %v82 = vsub.s32 0, %v81
    %v83 = vrot.slane %v36, %v82
    %vm84 = vcmask 261120
    %v86 = vsel %vm84, %v72, 0
    %v89 = vsel %vm84, %v73, 0
    %v92 = vsel %vm84, %v74, 0
    %v95 = vsel %vm84, %v75, 0
    %v98 = vsel %vm84, %v76, 0
    %v101 = vsel %vm84, %v77, 0
    %v104 = vsel %vm84, %v78, 0
    %v107 = vsel %vm84, %v79, 0
    %109 = vmatprep.subr.mxu0 0.0
    %110 = vmatpush1.msra.mxu0 %v28
    %111 = vmatprep.subr.mxu0 0.0
    %112 = vmatpush1.msra.mxu0 %v29
    %113 = vmatprep.subr.mxu0 0.0
    %114 = vmatpush1.msra.mxu0 %v30
    %115 = vmatprep.subr.mxu0 0.0
    %116 = vmatpush1.msra.mxu0 %v31
    %117 = vmatprep.subr.mxu0 0.0
    %118 = vmatpush1.msra.mxu0 0.0
    %119 = vmatprep.subr.mxu0 0.0
    %120 = vmatpush1.msra.mxu0 0.0
    %121 = vmatprep.subr.mxu0 0.0
    %122 = vmatpush1.msra.mxu0 0.0
    %123 = vmatprep.subr.mxu0 0.0
    %124 = vmatpush1.msra.mxu0 0.0
    %125 = vmatprep.subr.mxu0 0.0
    %126 = vmatpush1.msra.mxu0 0.0
    %127 = vmatprep.subr.mxu0 0.0
    %128 = vmatpush1.msra.mxu0 0.0
    %129 = vmatprep.subr.mxu0 0.0
    %130 = vmatpush1.msra.mxu0 0.0
    %131 = vmatprep.subr.mxu0 0.0
    %132 = vmatpush1.msra.mxu0 0.0
    %133 = vmatprep.subr.mxu0 0.0
    %134 = vmatpush1.msra.mxu0 0.0
    %135 = vmatprep.subr.mxu0 0.0
    %136 = vmatpush1.msra.mxu0 0.0
    %137 = vmatprep.subr.mxu0 0.0
    %138 = vmatpush1.msra.mxu0 0.0
    %139 = vmatprep.subr.mxu0 0.0
    %140 = vmatpush1.msra.mxu0 0.0
    %141 = vmatprep.subr.mxu0 0.0
    %142 = vmatpush1.msra.mxu0 0.0
    %143 = vmatprep.subr.mxu0 0.0
    %144 = vmatpush1.msra.mxu0 0.0
    %145 = vmatprep.subr.mxu0 0.0
    %146 = vmatpush1.msra.mxu0 0.0
    %147 = vmatprep.subr.mxu0 0.0
    %148 = vmatpush1.msra.mxu0 0.0
    %149 = vmatprep.subr.mxu0 0.0
    %150 = vmatpush1.msra.mxu0 0.0
    %151 = vmatprep.subr.mxu0 0.0
    %152 = vmatpush1.msra.mxu0 0.0
    %153 = vmatprep.subr.mxu0 0.0
    %154 = vmatpush1.msra.mxu0 0.0
    %155 = vmatprep.subr.mxu0 0.0
    %156 = vmatpush1.msra.mxu0 0.0
    %157 = vmatprep.subr.mxu0 0.0
    %158 = vmatpush1.msra.mxu0 0.0
    %159 = vmatprep.subr.mxu0 0.0
    %160 = vmatpush1.msra.mxu0 0.0
    %161 = vmatprep.subr.mxu0 0.0
    %162 = vmatpush1.msra.mxu0 0.0
    %163 = vmatprep.subr.mxu0 0.0
    %164 = vmatpush1.msra.mxu0 0.0
    %165 = vmatprep.subr.mxu0 0.0
    %166 = vmatpush1.msra.mxu0 0.0
    %167 = vmatprep.subr.mxu0 0.0
    %168 = vmatpush1.msra.mxu0 0.0
    %169 = vmatprep.subr.mxu0 0.0
    %170 = vmatpush1.msra.mxu0 0.0
    %171 = vmatprep.subr.mxu0 0.0
    %172 = vmatpush1.msra.mxu0 0.0
    %173 = vmatprep.mubr.f32.mxu0 0.0
    %174 = vmatmul.mubr.f32.gmra.mrb[0].mxu0 %v86
    %v175 = vpop.f32.mrb[0].mxu0
    %v176 = vadd.f32 %v83, %v175
    %v177 = vpop.f32.mrb[0].mxu0
    %178 = vmatprep.mubr.f32.mxu0 0.0
    %179 = vmatmul.mubr.f32.gmra.mrb[0].mxu0 %v89
    %v180 = vpop.f32.mrb[0].mxu0
    %v181 = vadd.f32 %v83, %v180
    %v182 = vpop.f32.mrb[0].mxu0
    %183 = vmatprep.mubr.f32.mxu0 0.0
    %184 = vmatmul.mubr.f32.gmra.mrb[0].mxu0 %v92
    %v185 = vpop.f32.mrb[0].mxu0
    %v186 = vadd.f32 %v83, %v185
    %v187 = vpop.f32.mrb[0].mxu0
    %188 = vmatprep.mubr.f32.mxu0 0.0
    %189 = vmatmul.mubr.f32.gmra.mrb[0].mxu0 %v95
    %v190 = vpop.f32.mrb[0].mxu0
    %v191 = vadd.f32 %v83, %v190
    %v192 = vpop.f32.mrb[0].mxu0
    %193 = vmatprep.mubr.f32.mxu0 0.0
    %194 = vmatmul.mubr.f32.gmra.mrb[0].mxu0 %v98
    %v195 = vpop.f32.mrb[0].mxu0
    %v196 = vadd.f32 %v83, %v195
    %v197 = vpop.f32.mrb[0].mxu0
    %198 = vmatprep.mubr.f32.mxu0 0.0
    %199 = vmatmul.mubr.f32.gmra.mrb[0].mxu0 %v101
    %v200 = vpop.f32.mrb[0].mxu0
    %v201 = vadd.f32 %v83, %v200
    %v202 = vpop.f32.mrb[0].mxu0
    %203 = vmatprep.mubr.f32.mxu0 0.0
    %204 = vmatmul.mubr.f32.gmra.mrb[0].mxu0 %v104
    %v205 = vpop.f32.mrb[0].mxu0
    %v206 = vadd.f32 %v83, %v205
    %v207 = vpop.f32.mrb[0].mxu0
    %208 = vmatprep.mubr.f32.mxu0 0.0
    %209 = vmatmul.mubr.f32.gmra.mrb[0].mxu0 %v107
    %v210 = vpop.f32.mrb[0].mxu0
    %v211 = vadd.f32 %v83, %v210
    %v212 = vpop.f32.mrb[0].mxu0
    %213 = vdwg.mxu0
    %v215 = vsel %vm84, 0.0, 0
    %217 = vmatprep.subr.mxu0 0.0
    %218 = vmatpush1.msra.mxu0 %v32
    %219 = vmatprep.subr.mxu0 0.0
    %220 = vmatpush1.msra.mxu0 %v33
    %221 = vmatprep.subr.mxu0 0.0
    %222 = vmatpush1.msra.mxu0 %v34
    %223 = vmatprep.subr.mxu0 0.0
    %224 = vmatpush1.msra.mxu0 %v35
    %225 = vmatprep.subr.mxu0 0.0
    %226 = vmatpush1.msra.mxu0 0.0
    %227 = vmatprep.subr.mxu0 0.0
    %228 = vmatpush1.msra.mxu0 0.0
    %229 = vmatprep.subr.mxu0 0.0
    %230 = vmatpush1.msra.mxu0 0.0
    %231 = vmatprep.subr.mxu0 0.0
    %232 = vmatpush1.msra.mxu0 0.0
    %233 = vmatprep.subr.mxu0 0.0
    %234 = vmatpush1.msra.mxu0 0.0
    %235 = vmatprep.subr.mxu0 0.0
    %236 = vmatpush1.msra.mxu0 0.0
    %237 = vmatprep.subr.mxu0 0.0
    %238 = vmatpush1.msra.mxu0 0.0
    %239 = vmatprep.subr.mxu0 0.0
    %240 = vmatpush1.msra.mxu0 0.0
    %241 = vmatprep.subr.mxu0 0.0
    %242 = vmatpush1.msra.mxu0 0.0
    %243 = vmatprep.subr.mxu0 0.0
    %244 = vmatpush1.msra.mxu0 0.0
    %245 = vmatprep.subr.mxu0 0.0
    %246 = vmatpush1.msra.mxu0 0.0
    %247 = vmatprep.subr.mxu0 0.0
    %248 = vmatpush1.msra.mxu0 0.0
    %249 = vmatprep.subr.mxu0 0.0
    %250 = vmatpush1.msra.mxu0 0.0
    %251 = vmatprep.subr.mxu0 0.0
    %252 = vmatpush1.msra.mxu0 0.0
    %253 = vmatprep.subr.mxu0 0.0
    %254 = vmatpush1.msra.mxu0 0.0
    %255 = vmatprep.subr.mxu0 0.0
    %256 = vmatpush1.msra.mxu0 0.0
    %257 = vmatprep.subr.mxu0 0.0
    %258 = vmatpush1.msra.mxu0 0.0
    %259 = vmatprep.subr.mxu0 0.0
    %260 = vmatpush1.msra.mxu0 0.0
    %261 = vmatprep.subr.mxu0 0.0
    %262 = vmatpush1.msra.mxu0 0.0
    %263 = vmatprep.subr.mxu0 0.0
    %264 = vmatpush1.msra.mxu0 0.0
    %265 = vmatprep.subr.mxu0 0.0
    %266 = vmatpush1.msra.mxu0 0.0
    %267 = vmatprep.subr.mxu0 0.0
    %268 = vmatpush1.msra.mxu0 0.0
    %269 = vmatprep.subr.mxu0 0.0
    %270 = vmatpush1.msra.mxu0 0.0
    %271 = vmatprep.subr.mxu0 0.0
    %272 = vmatpush1.msra.mxu0 0.0
    %273 = vmatprep.subr.mxu0 0.0
    %274 = vmatpush1.msra.mxu0 0.0
    %275 = vmatprep.subr.mxu0 0.0
    %276 = vmatpush1.msra.mxu0 0.0
    %277 = vmatprep.subr.mxu0 0.0
    %278 = vmatpush1.msra.mxu0 0.0
    %279 = vmatprep.subr.mxu0 0.0
    %280 = vmatpush1.msra.mxu0 0.0
    %281 = vmatprep.mubr.f32.mxu0 0.0
    %282 = vmatmul.mubr.f32.gmra.mrb[0].mxu0 %v215
    %v283 = vpop.f32.mrb[0].mxu0
    %v284 = vadd.f32 0.0, %v283
    %v285 = vpop.f32.mrb[0].mxu0
    %286 = vdwg.mxu0
    %v287 = vadd.f32 %v176, %v284
    %v288 = vxor.u32 %v287, 2147483648
    %v289 = vmul.f32 %v288, 1.442695
    %v290 = vpow.pop %v289
    %v291 = vadd.f32 %v290, 1.0
    %v292 = vrcp.pop %v291
    %v293 = vmul.f32 1.0, %v292
    %v294 = vtanh.pop %v287
    %v295 = vmul.f32 %v293, 0.0
    %297 = vrot.lane.b32.xlu0 %v294, 32
    %v298 = vpop.permute.xlu0 %297
    %v300 = vmul.f32 %v293, %v298
    %302 = vrot.lane.b32.xlu0 %v300, 32
    %v303 = vpop.permute.xlu0 %302
    %v305 = vadd.f32 %v295, %v303
    %v306 = vtanh.pop %v305
    %308 = vrot.lane.b32.xlu0 %v306, 32
    %v309 = vpop.permute.xlu0 %308
    %v311 = vmul.f32 %v293, %v309
    %313 = vrot.lane.b32.xlu0 %v311, 64
    %v314 = vpop.permute.xlu0 %313
    %v315 = vsel %vm84, %v314, 0
    %317 = vmatprep.subr.mxu0 0.0
    %318 = vmatpush1.msra.mxu0 %v32
    %319 = vmatprep.subr.mxu0 0.0
    %320 = vmatpush1.msra.mxu0 %v33
    %321 = vmatprep.subr.mxu0 0.0
    %322 = vmatpush1.msra.mxu0 %v34
    %323 = vmatprep.subr.mxu0 0.0
    %324 = vmatpush1.msra.mxu0 %v35
    %325 = vmatprep.subr.mxu0 0.0
    %326 = vmatpush1.msra.mxu0 0.0
    %327 = vmatprep.subr.mxu0 0.0
    %328 = vmatpush1.msra.mxu0 0.0
    %329 = vmatprep.subr.mxu0 0.0
    %330 = vmatpush1.msra.mxu0 0.0
    %331 = vmatprep.subr.mxu0 0.0
    %332 = vmatpush1.msra.mxu0 0.0
    %333 = vmatprep.subr.mxu0 0.0
    %334 = vmatpush1.msra.mxu0 0.0
    %335 = vmatprep.subr.mxu0 0.0
    %336 = vmatpush1.msra.mxu0 0.0
    %337 = vmatprep.subr.mxu0 0.0
    %338 = vmatpush1.msra.mxu0 0.0
    %339 = vmatprep.subr.mxu0 0.0
    %340 = vmatpush1.msra.mxu0 0.0
    %341 = vmatprep.subr.mxu0 0.0
    %342 = vmatpush1.msra.mxu0 0.0
    %343 = vmatprep.subr.mxu0 0.0
    %344 = vmatpush1.msra.mxu0 0.0
    %345 = vmatprep.subr.mxu0 0.0
    %346 = vmatpush1.msra.mxu0 0.0
    %347 = vmatprep.subr.mxu0 0.0
    %348 = vmatpush1.msra.mxu0 0.0
    %349 = vmatprep.subr.mxu0 0.0
    %350 = vmatpush1.msra.mxu0 0.0
    %351 = vmatprep.subr.mxu0 0.0
    %352 = vmatpush1.msra.mxu0 0.0
    %353 = vmatprep.subr.mxu0 0.0
    %354 = vmatpush1.msra.mxu0 0.0
    %355 = vmatprep.subr.mxu0 0.0
    %356 = vmatpush1.msra.mxu0 0.0
    %357 = vmatprep.subr.mxu0 0.0
    %358 = vmatpush1.msra.mxu0 0.0
    %359 = vmatprep.subr.mxu0 0.0
    %360 = vmatpush1.msra.mxu0 0.0
    %361 = vmatprep.subr.mxu0 0.0
    %362 = vmatpush1.msra.mxu0 0.0
    %363 = vmatprep.subr.mxu0 0.0
    %364 = vmatpush1.msra.mxu0 0.0
    %365 = vmatprep.subr.mxu0 0.0
    %366 = vmatpush1.msra.mxu0 0.0
    %367 = vmatprep.subr.mxu0 0.0
    %368 = vmatpush1.msra.mxu0 0.0
    %369 = vmatprep.subr.mxu0 0.0
    %370 = vmatpush1.msra.mxu0 0.0
    %371 = vmatprep.subr.mxu0 0.0
    %372 = vmatpush1.msra.mxu0 0.0
    %373 = vmatprep.subr.mxu0 0.0
    %374 = vmatpush1.msra.mxu0 0.0
    %375 = vmatprep.subr.mxu0 0.0
    %376 = vmatpush1.msra.mxu0 0.0
    %377 = vmatprep.subr.mxu0 0.0
    %378 = vmatpush1.msra.mxu0 0.0
    %379 = vmatprep.subr.mxu0 0.0
    %380 = vmatpush1.msra.mxu0 0.0
    %381 = vmatprep.mubr.f32.mxu0 0.0
    %382 = vmatmul.mubr.f32.gmra.mrb[0].mxu0 %v315
    %v383 = vpop.f32.mrb[0].mxu0
    %v384 = vadd.f32 0.0, %v383
    %v385 = vpop.f32.mrb[0].mxu0
    %386 = vdwg.mxu0
    %v387 = vadd.f32 %v181, %v384
    %v388 = vxor.u32 %v387, 2147483648
    %v389 = vmul.f32 %v388, 1.442695
    %v390 = vpow.pop %v389
    %v391 = vadd.f32 %v390, 1.0
    %v392 = vrcp.pop %v391
    %v393 = vmul.f32 1.0, %v392
    %v394 = vtanh.pop %v387
    %v395 = vmul.f32 %v393, %v305
    %397 = vrot.lane.b32.xlu0 %v394, 32
    %v398 = vpop.permute.xlu0 %397
    %v400 = vmul.f32 %v393, %v398
    %402 = vrot.lane.b32.xlu0 %v400, 32
    %v403 = vpop.permute.xlu0 %402
    %v405 = vadd.f32 %v395, %v403
    %v406 = vtanh.pop %v405
    %408 = vrot.lane.b32.xlu0 %v406, 32
    %v409 = vpop.permute.xlu0 %408
    %v411 = vmul.f32 %v393, %v409
    %v413 = vsel %vm84, %v314, 0.0
    %vm414 = vcmask 523264
    %v416 = vsel %vm414, %v413, 0
    %418 = vmatprep.subr.mxu0 0.0
    %419 = vmatpush1.msra.mxu0 %v37
    %420 = vmatprep.subr.mxu0 0.0
    %421 = vmatpush1.msra.mxu0 %v38
    %422 = vmatprep.subr.mxu0 0.0
    %423 = vmatpush1.msra.mxu0 %v39
    %424 = vmatprep.subr.mxu0 0.0
    %425 = vmatpush1.msra.mxu0 %v40
    %426 = vmatprep.subr.mxu0 0.0
    %427 = vmatpush1.msra.mxu0 %v41
    %428 = vmatprep.subr.mxu0 0.0
    %429 = vmatpush1.msra.mxu0 %v42
    %430 = vmatprep.subr.mxu0 0.0
    %431 = vmatpush1.msra.mxu0 %v43
    %432 = vmatprep.subr.mxu0 0.0
    %433 = vmatpush1.msra.mxu0 %v44
    %434 = vmatprep.subr.mxu0 0.0
    %435 = vmatpush1.msra.mxu0 0.0
    %436 = vmatprep.subr.mxu0 0.0
    %437 = vmatpush1.msra.mxu0 0.0
    %438 = vmatprep.subr.mxu0 0.0
    %439 = vmatpush1.msra.mxu0 0.0
    %440 = vmatprep.subr.mxu0 0.0
    %441 = vmatpush1.msra.mxu0 0.0
    %442 = vmatprep.subr.mxu0 0.0
    %443 = vmatpush1.msra.mxu0 0.0
    %444 = vmatprep.subr.mxu0 0.0
    %445 = vmatpush1.msra.mxu0 0.0
    %446 = vmatprep.subr.mxu0 0.0
    %447 = vmatpush1.msra.mxu0 0.0
    %448 = vmatprep.subr.mxu0 0.0
    %449 = vmatpush1.msra.mxu0 0.0
    %450 = vmatprep.subr.mxu0 0.0
    %451 = vmatpush1.msra.mxu0 0.0
    %452 = vmatprep.subr.mxu0 0.0
    %453 = vmatpush1.msra.mxu0 0.0
    %454 = vmatprep.subr.mxu0 0.0
    %455 = vmatpush1.msra.mxu0 0.0
    %456 = vmatprep.subr.mxu0 0.0
    %457 = vmatpush1.msra.mxu0 0.0
    %458 = vmatprep.subr.mxu0 0.0
    %459 = vmatpush1.msra.mxu0 0.0
    %460 = vmatprep.subr.mxu0 0.0
    %461 = vmatpush1.msra.mxu0 0.0
    %462 = vmatprep.subr.mxu0 0.0
    %463 = vmatpush1.msra.mxu0 0.0
    %464 = vmatprep.subr.mxu0 0.0
    %465 = vmatpush1.msra.mxu0 0.0
    %466 = vmatprep.subr.mxu0 0.0
    %467 = vmatpush1.msra.mxu0 0.0
    %468 = vmatprep.subr.mxu0 0.0
    %469 = vmatpush1.msra.mxu0 0.0
    %470 = vmatprep.subr.mxu0 0.0
    %471 = vmatpush1.msra.mxu0 0.0
    %472 = vmatprep.subr.mxu0 0.0
    %473 = vmatpush1.msra.mxu0 0.0
    %474 = vmatprep.subr.mxu0 0.0
    %475 = vmatpush1.msra.mxu0 0.0
    %476 = vmatprep.subr.mxu0 0.0
    %477 = vmatpush1.msra.mxu0 0.0
    %478 = vmatprep.subr.mxu0 0.0
    %479 = vmatpush1.msra.mxu0 0.0
    %480 = vmatprep.subr.mxu0 0.0
    %481 = vmatpush1.msra.mxu0 0.0
    %482 = vmatprep.mubr.f32.mxu0 0.0
    %483 = vmatmul.mubr.f32.gmra.mrb[0].mxu0 %v416
    %v484 = vpop.f32.mrb[0].mxu0
    %v485 = vadd.f32 %v49, %v484
    %v486 = vpop.f32.mrb[0].mxu0
    %487 = vdwg.mxu0
    %v488 = vxor.u32 %v485, 2147483648
    %v489 = vmul.f32 %v488, 1.442695
    %v490 = vpow.pop %v489
    %v491 = vadd.f32 %v490, 1.0
    %v492 = vrcp.pop %v491
    %v493 = vmul.f32 1.0, %v492
    %v494 = vtanh.pop %v485
    %v495 = vmul.f32 %v493, 0.0
    %497 = vrot.lane.b32.xlu0 %v494, 32
    %v498 = vpop.permute.xlu0 %497
    %v500 = vmul.f32 %v493, %v498
    %502 = vrot.lane.b32.xlu0 %v500, 32
    %v503 = vpop.permute.xlu0 %502
    %v505 = vadd.f32 %v495, %v503
    %v506 = vtanh.pop %v505
    %508 = vrot.lane.b32.xlu0 %v506, 32
    %v509 = vpop.permute.xlu0 %508
    %v511 = vmul.f32 %v493, %v509
    %513 = vrot.lane.b32.xlu0 %v411, 64
    %v514 = vpop.permute.xlu0 %513
    %v515 = vsel %vm84, %v514, 0
    %517 = vmatprep.subr.mxu0 0.0
    %518 = vmatpush1.msra.mxu0 %v32
    %519 = vmatprep.subr.mxu0 0.0
    %520 = vmatpush1.msra.mxu0 %v33
    %521 = vmatprep.subr.mxu0 0.0
    %522 = vmatpush1.msra.mxu0 %v34
    %523 = vmatprep.subr.mxu0 0.0
    %524 = vmatpush1.msra.mxu0 %v35
    %525 = vmatprep.subr.mxu0 0.0
    %526 = vmatpush1.msra.mxu0 0.0
    %527 = vmatprep.subr.mxu0 0.0
    %528 = vmatpush1.msra.mxu0 0.0
    %529 = vmatprep.subr.mxu0 0.0
    %530 = vmatpush1.msra.mxu0 0.0
    %531 = vmatprep.subr.mxu0 0.0
    %532 = vmatpush1.msra.mxu0 0.0
    %533 = vmatprep.subr.mxu0 0.0
    %534 = vmatpush1.msra.mxu0 0.0
    %535 = vmatprep.subr.mxu0 0.0
    %536 = vmatpush1.msra.mxu0 0.0
    %537 = vmatprep.subr.mxu0 0.0
    %538 = vmatpush1.msra.mxu0 0.0
    %539 = vmatprep.subr.mxu0 0.0
    %540 = vmatpush1.msra.mxu0 0.0
    %541 = vmatprep.subr.mxu0 0.0
    %542 = vmatpush1.msra.mxu0 0.0
    %543 = vmatprep.subr.mxu0 0.0
    %544 = vmatpush1.msra.mxu0 0.0
    %545 = vmatprep.subr.mxu0 0.0
    %546 = vmatpush1.msra.mxu0 0.0
    %547 = vmatprep.subr.mxu0 0.0
    %548 = vmatpush1.msra.mxu0 0.0
    %549 = vmatprep.subr.mxu0 0.0
    %550 = vmatpush1.msra.mxu0 0.0
    %551 = vmatprep.subr.mxu0 0.0
    %552 = vmatpush1.msra.mxu0 0.0
    %553 = vmatprep.subr.mxu0 0.0
    %554 = vmatpush1.msra.mxu0 0.0
    %555 = vmatprep.subr.mxu0 0.0
    %556 = vmatpush1.msra.mxu0 0.0
    %557 = vmatprep.subr.mxu0 0.0
    %558 = vmatpush1.msra.mxu0 0.0
    %559 = vmatprep.subr.mxu0 0.0
    %560 = vmatpush1.msra.mxu0 0.0
    %561 = vmatprep.subr.mxu0 0.0
    %562 = vmatpush1.msra.mxu0 0.0
    %563 = vmatprep.subr.mxu0 0.0
    %564 = vmatpush1.msra.mxu0 0.0
    %565 = vmatprep.subr.mxu0 0.0
    %566 = vmatpush1.msra.mxu0 0.0
    %567 = vmatprep.subr.mxu0 0.0
    %568 = vmatpush1.msra.mxu0 0.0
    %569 = vmatprep.subr.mxu0 0.0
    %570 = vmatpush1.msra.mxu0 0.0
    %571 = vmatprep.subr.mxu0 0.0
    %572 = vmatpush1.msra.mxu0 0.0
    %573 = vmatprep.subr.mxu0 0.0
    %574 = vmatpush1.msra.mxu0 0.0
    %575 = vmatprep.subr.mxu0 0.0
    %576 = vmatpush1.msra.mxu0 0.0
    %577 = vmatprep.subr.mxu0 0.0
    %578 = vmatpush1.msra.mxu0 0.0
    %579 = vmatprep.subr.mxu0 0.0
    %580 = vmatpush1.msra.mxu0 0.0
    %581 = vmatprep.mubr.f32.mxu0 0.0
    %582 = vmatmul.mubr.f32.gmra.mrb[0].mxu0 %v515
    %v583 = vpop.f32.mrb[0].mxu0
    %v584 = vadd.f32 0.0, %v583
    %v585 = vpop.f32.mrb[0].mxu0
    %586 = vdwg.mxu0
    %v587 = vadd.f32 %v186, %v584
    %v588 = vxor.u32 %v587, 2147483648
    %v589 = vmul.f32 %v588, 1.442695
    %v590 = vpow.pop %v589
    %v591 = vadd.f32 %v590, 1.0
    %v592 = vrcp.pop %v591
    %v593 = vmul.f32 1.0, %v592
    %v594 = vtanh.pop %v587
    %v595 = vmul.f32 %v593, %v405
    %597 = vrot.lane.b32.xlu0 %v594, 32
    %v598 = vpop.permute.xlu0 %597
    %v600 = vmul.f32 %v593, %v598
    %602 = vrot.lane.b32.xlu0 %v600, 32
    %v603 = vpop.permute.xlu0 %602
    %v605 = vadd.f32 %v595, %v603
    %v606 = vtanh.pop %v605
    %608 = vrot.lane.b32.xlu0 %v606, 32
    %v609 = vpop.permute.xlu0 %608
    %v611 = vmul.f32 %v593, %v609
    %614 = vrot.lane.b32.xlu0 %v511, 96
    %v615 = vpop.permute.xlu0 %614
    %v617 = vsel %vm84, %v514, %v615
    %v619 = vsel %vm414, %v617, 0
    %621 = vmatprep.subr.mxu0 0.0
    %622 = vmatpush1.msra.mxu0 %v37
    %623 = vmatprep.subr.mxu0 0.0
    %624 = vmatpush1.msra.mxu0 %v38
    %625 = vmatprep.subr.mxu0 0.0
    %626 = vmatpush1.msra.mxu0 %v39
    %627 = vmatprep.subr.mxu0 0.0
    %628 = vmatpush1.msra.mxu0 %v40
    %629 = vmatprep.subr.mxu0 0.0
    %630 = vmatpush1.msra.mxu0 %v41
    %631 = vmatprep.subr.mxu0 0.0
    %632 = vmatpush1.msra.mxu0 %v42
    %633 = vmatprep.subr.mxu0 0.0
    %634 = vmatpush1.msra.mxu0 %v43
    %635 = vmatprep.subr.mxu0 0.0
    %636 = vmatpush1.msra.mxu0 %v44
    %637 = vmatprep.subr.mxu0 0.0
    %638 = vmatpush1.msra.mxu0 0.0
    %639 = vmatprep.subr.mxu0 0.0
    %640 = vmatpush1.msra.mxu0 0.0
    %641 = vmatprep.subr.mxu0 0.0
    %642 = vmatpush1.msra.mxu0 0.0
    %643 = vmatprep.subr.mxu0 0.0
    %644 = vmatpush1.msra.mxu0 0.0
    %645 = vmatprep.subr.mxu0 0.0
    %646 = vmatpush1.msra.mxu0 0.0
    %647 = vmatprep.subr.mxu0 0.0
    %648 = vmatpush1.msra.mxu0 0.0
    %649 = vmatprep.subr.mxu0 0.0
    %650 = vmatpush1.msra.mxu0 0.0
    %651 = vmatprep.subr.mxu0 0.0
    %652 = vmatpush1.msra.mxu0 0.0
    %653 = vmatprep.subr.mxu0 0.0
    %654 = vmatpush1.msra.mxu0 0.0
    %655 = vmatprep.subr.mxu0 0.0
    %656 = vmatpush1.msra.mxu0 0.0
    %657 = vmatprep.subr.mxu0 0.0
    %658 = vmatpush1.msra.mxu0 0.0
    %659 = vmatprep.subr.mxu0 0.0
    %660 = vmatpush1.msra.mxu0 0.0
    %661 = vmatprep.subr.mxu0 0.0
    %662 = vmatpush1.msra.mxu0 0.0
    %663 = vmatprep.subr.mxu0 0.0
    %664 = vmatpush1.msra.mxu0 0.0
    %665 = vmatprep.subr.mxu0 0.0
    %666 = vmatpush1.msra.mxu0 0.0
    %667 = vmatprep.subr.mxu0 0.0
    %668 = vmatpush1.msra.mxu0 0.0
    %669 = vmatprep.subr.mxu0 0.0
    %670 = vmatpush1.msra.mxu0 0.0
    %671 = vmatprep.subr.mxu0 0.0
    %672 = vmatpush1.msra.mxu0 0.0
    %673 = vmatprep.subr.mxu0 0.0
    %674 = vmatpush1.msra.mxu0 0.0
    %675 = vmatprep.subr.mxu0 0.0
    %676 = vmatpush1.msra.mxu0 0.0
    %677 = vmatprep.subr.mxu0 0.0
    %678 = vmatpush1.msra.mxu0 0.0
    %679 = vmatprep.subr.mxu0 0.0
    %680 = vmatpush1.msra.mxu0 0.0
    %681 = vmatprep.subr.mxu0 0.0
    %682 = vmatpush1.msra.mxu0 0.0
    %683 = vmatprep.subr.mxu0 0.0
    %684 = vmatpush1.msra.mxu0 0.0
    %685 = vmatprep.mubr.f32.mxu0 0.0
    %686 = vmatmul.mubr.f32.gmra.mrb[0].mxu0 %v619
    %v687 = vpop.f32.mrb[0].mxu0
    %v688 = vadd.f32 %v49, %v687
    %v689 = vpop.f32.mrb[0].mxu0
    %690 = vdwg.mxu0
    %v691 = vxor.u32 %v688, 2147483648
    %v692 = vmul.f32 %v691, 1.442695
    %v693 = vpow.pop %v692
    %v694 = vadd.f32 %v693, 1.0
    %v695 = vrcp.pop %v694
    %v696 = vmul.f32 1.0, %v695
    %v697 = vtanh.pop %v688
    %v698 = vmul.f32 %v696, %v505
    %700 = vrot.lane.b32.xlu0 %v697, 32
    %v701 = vpop.permute.xlu0 %700
    %v703 = vmul.f32 %v696, %v701
    %705 = vrot.lane.b32.xlu0 %v703, 32
    %v706 = vpop.permute.xlu0 %705
    %v708 = vadd.f32 %v698, %v706
    %v709 = vtanh.pop %v708
    %711 = vrot.lane.b32.xlu0 %v709, 32
    %v712 = vpop.permute.xlu0 %711
    %v714 = vmul.f32 %v696, %v712
    %716 = vrot.lane.b32.xlu0 %v611, 64
    %v717 = vpop.permute.xlu0 %716
    %v718 = vsel %vm84, %v717, 0
    %720 = vmatprep.subr.mxu0 0.0
    %721 = vmatpush1.msra.mxu0 %v32
    %722 = vmatprep.subr.mxu0 0.0
    %723 = vmatpush1.msra.mxu0 %v33
    %724 = vmatprep.subr.mxu0 0.0
    %725 = vmatpush1.msra.mxu0 %v34
    %726 = vmatprep.subr.mxu0 0.0
    %727 = vmatpush1.msra.mxu0 %v35
    %728 = vmatprep.subr.mxu0 0.0
    %729 = vmatpush1.msra.mxu0 0.0
    %730 = vmatprep.subr.mxu0 0.0
    %731 = vmatpush1.msra.mxu0 0.0
    %732 = vmatprep.subr.mxu0 0.0
    %733 = vmatpush1.msra.mxu0 0.0
    %734 = vmatprep.subr.mxu0 0.0
    %735 = vmatpush1.msra.mxu0 0.0
    %736 = vmatprep.subr.mxu0 0.0
    %737 = vmatpush1.msra.mxu0 0.0
    %738 = vmatprep.subr.mxu0 0.0
    %739 = vmatpush1.msra.mxu0 0.0
    %740 = vmatprep.subr.mxu0 0.0
    %741 = vmatpush1.msra.mxu0 0.0
    %742 = vmatprep.subr.mxu0 0.0
    %743 = vmatpush1.msra.mxu0 0.0
    %744 = vmatprep.subr.mxu0 0.0
    %745 = vmatpush1.msra.mxu0 0.0
    %746 = vmatprep.subr.mxu0 0.0
    %747 = vmatpush1.msra.mxu0 0.0
    %748 = vmatprep.subr.mxu0 0.0
    %749 = vmatpush1.msra.mxu0 0.0
    %750 = vmatprep.subr.mxu0 0.0
    %751 = vmatpush1.msra.mxu0 0.0
    %752 = vmatprep.subr.mxu0 0.0
    %753 = vmatpush1.msra.mxu0 0.0
    %754 = vmatprep.subr.mxu0 0.0
    %755 = vmatpush1.msra.mxu0 0.0
    %756 = vmatprep.subr.mxu0 0.0
    %757 = vmatpush1.msra.mxu0 0.0
    %758 = vmatprep.subr.mxu0 0.0
    %759 = vmatpush1.msra.mxu0 0.0
    %760 = vmatprep.subr.mxu0 0.0
    %761 = vmatpush1.msra.mxu0 0.0
    %762 = vmatprep.subr.mxu0 0.0
    %763 = vmatpush1.msra.mxu0 0.0
    %764 = vmatprep.subr.mxu0 0.0
    %765 = vmatpush1.msra.mxu0 0.0
    %766 = vmatprep.subr.mxu0 0.0
    %767 = vmatpush1.msra.mxu0 0.0
    %768 = vmatprep.subr.mxu0 0.0
    %769 = vmatpush1.msra.mxu0 0.0
    %770 = vmatprep.subr.mxu0 0.0
    %771 = vmatpush1.msra.mxu0 0.0
    %772 = vmatprep.subr.mxu0 0.0
    %773 = vmatpush1.msra.mxu0 0.0
    %774 = vmatprep.subr.mxu0 0.0
    %775 = vmatpush1.msra.mxu0 0.0
    %776 = vmatprep.subr.mxu0 0.0
    %777 = vmatpush1.msra.mxu0 0.0
    %778 = vmatprep.subr.mxu0 0.0
    %779 = vmatpush1.msra.mxu0 0.0
    %780 = vmatprep.subr.mxu0 0.0
    %781 = vmatpush1.msra.mxu0 0.0
    %782 = vmatprep.subr.mxu0 0.0
    %783 = vmatpush1.msra.mxu0 0.0
    %784 = vmatprep.mubr.f32.mxu0 0.0
    %785 = vmatmul.mubr.f32.gmra.mrb[0].mxu0 %v718
    %v786 = vpop.f32.mrb[0].mxu0
    %v787 = vadd.f32 0.0, %v786
    %v788 = vpop.f32.mrb[0].mxu0
    %789 = vdwg.mxu0
    %v790 = vadd.f32 %v191, %v787
    %v791 = vxor.u32 %v790, 2147483648
    %v792 = vmul.f32 %v791, 1.442695
    %v793 = vpow.pop %v792
    %v794 = vadd.f32 %v793, 1.0
    %v795 = vrcp.pop %v794
    %v796 = vmul.f32 1.0, %v795
    %v797 = vtanh.pop %v790
    %v798 = vmul.f32 %v796, %v605
    %800 = vrot.lane.b32.xlu0 %v797, 32
    %v801 = vpop.permute.xlu0 %800
    %v803 = vmul.f32 %v796, %v801
    %805 = vrot.lane.b32.xlu0 %v803, 32
    %v806 = vpop.permute.xlu0 %805
    %v808 = vadd.f32 %v798, %v806
    %v809 = vtanh.pop %v808
    %811 = vrot.lane.b32.xlu0 %v809, 32
    %v812 = vpop.permute.xlu0 %811
    %v814 = vmul.f32 %v796, %v812
    %817 = vrot.lane.b32.xlu0 %v714, 96
    %v818 = vpop.permute.xlu0 %817
    %v820 = vsel %vm84, %v717, %v818
    %v822 = vsel %vm414, %v820, 0
    %824 = vmatprep.subr.mxu0 0.0
    %825 = vmatpush1.msra.mxu0 %v37
    %826 = vmatprep.subr.mxu0 0.0
    %827 = vmatpush1.msra.mxu0 %v38
    %828 = vmatprep.subr.mxu0 0.0
    %829 = vmatpush1.msra.mxu0 %v39
    %830 = vmatprep.subr.mxu0 0.0
    %831 = vmatpush1.msra.mxu0 %v40
    %832 = vmatprep.subr.mxu0 0.0
    %833 = vmatpush1.msra.mxu0 %v41
    %834 = vmatprep.subr.mxu0 0.0
    %835 = vmatpush1.msra.mxu0 %v42
    %836 = vmatprep.subr.mxu0 0.0
    %837 = vmatpush1.msra.mxu0 %v43
    %838 = vmatprep.subr.mxu0 0.0
    %839 = vmatpush1.msra.mxu0 %v44
    %840 = vmatprep.subr.mxu0 0.0
    %841 = vmatpush1.msra.mxu0 0.0
    %842 = vmatprep.subr.mxu0 0.0
    %843 = vmatpush1.msra.mxu0 0.0
    %844 = vmatprep.subr.mxu0 0.0
    %845 = vmatpush1.msra.mxu0 0.0
    %846 = vmatprep.subr.mxu0 0.0
    %847 = vmatpush1.msra.mxu0 0.0
    %848 = vmatprep.subr.mxu0 0.0
    %849 = vmatpush1.msra.mxu0 0.0
    %850 = vmatprep.subr.mxu0 0.0
    %851 = vmatpush1.msra.mxu0 0.0
    %852 = vmatprep.subr.mxu0 0.0
    %853 = vmatpush1.msra.mxu0 0.0
    %854 = vmatprep.subr.mxu0 0.0
    %855 = vmatpush1.msra.mxu0 0.0
    %856 = vmatprep.subr.mxu0 0.0
    %857 = vmatpush1.msra.mxu0 0.0
    %858 = vmatprep.subr.mxu0 0.0
    %859 = vmatpush1.msra.mxu0 0.0
    %860 = vmatprep.subr.mxu0 0.0
    %861 = vmatpush1.msra.mxu0 0.0
    %862 = vmatprep.subr.mxu0 0.0
    %863 = vmatpush1.msra.mxu0 0.0
    %864 = vmatprep.subr.mxu0 0.0
    %865 = vmatpush1.msra.mxu0 0.0
    %866 = vmatprep.subr.mxu0 0.0
    %867 = vmatpush1.msra.mxu0 0.0
    %868 = vmatprep.subr.mxu0 0.0
    %869 = vmatpush1.msra.mxu0 0.0
    %870 = vmatprep.subr.mxu0 0.0
    %871 = vmatpush1.msra.mxu0 0.0
    %872 = vmatprep.subr.mxu0 0.0
    %873 = vmatpush1.msra.mxu0 0.0
    %874 = vmatprep.subr.mxu0 0.0
    %875 = vmatpush1.msra.mxu0 0.0
    %876 = vmatprep.subr.mxu0 0.0
    %877 = vmatpush1.msra.mxu0 0.0
    %878 = vmatprep.subr.mxu0 0.0
    %879 = vmatpush1.msra.mxu0 0.0
    %880 = vmatprep.subr.mxu0 0.0
    %881 = vmatpush1.msra.mxu0 0.0
    %882 = vmatprep.subr.mxu0 0.0
    %883 = vmatpush1.msra.mxu0 0.0
    %884 = vmatprep.subr.mxu0 0.0
    %885 = vmatpush1.msra.mxu0 0.0
    %886 = vmatprep.subr.mxu0 0.0
    %887 = vmatpush1.msra.mxu0 0.0
    %888 = vmatprep.mubr.f32.mxu0 0.0
    %889 = vmatmul.mubr.f32.gmra.mrb[0].mxu0 %v822
    %v890 = vpop.f32.mrb[0].mxu0
    %v891 = vadd.f32 %v49, %v890
    %v892 = vpop.f32.mrb[0].mxu0
    %893 = vdwg.mxu0
    %v894 = vxor.u32 %v891, 2147483648
    %v895 = vmul.f32 %v894, 1.442695
    %v896 = vpow.pop %v895
    %v897 = vadd.f32 %v896, 1.0
    %v898 = vrcp.pop %v897
    %v899 = vmul.f32 1.0, %v898
    %v900 = vtanh.pop %v891
    %v901 = vmul.f32 %v899, %v708
    %903 = vrot.lane.b32.xlu0 %v900, 32
    %v904 = vpop.permute.xlu0 %903
    %v906 = vmul.f32 %v899, %v904
    %908 = vrot.lane.b32.xlu0 %v906, 32
    %v909 = vpop.permute.xlu0 %908
    %v911 = vadd.f32 %v901, %v909
    %v912 = vtanh.pop %v911
    %914 = vrot.lane.b32.xlu0 %v912, 32
    %v915 = vpop.permute.xlu0 %914
    %v917 = vmul.f32 %v899, %v915
    %919 = vrot.lane.b32.xlu0 %v814, 64
    %v920 = vpop.permute.xlu0 %919
    %v921 = vsel %vm84, %v920, 0
    %923 = vmatprep.subr.mxu0 0.0
    %924 = vmatpush1.msra.mxu0 %v32
    %925 = vmatprep.subr.mxu0 0.0
    %926 = vmatpush1.msra.mxu0 %v33
    %927 = vmatprep.subr.mxu0 0.0
    %928 = vmatpush1.msra.mxu0 %v34
    %929 = vmatprep.subr.mxu0 0.0
    %930 = vmatpush1.msra.mxu0 %v35
    %931 = vmatprep.subr.mxu0 0.0
    %932 = vmatpush1.msra.mxu0 0.0
    %933 = vmatprep.subr.mxu0 0.0
    %934 = vmatpush1.msra.mxu0 0.0
    %935 = vmatprep.subr.mxu0 0.0
    %936 = vmatpush1.msra.mxu0 0.0
    %937 = vmatprep.subr.mxu0 0.0
    %938 = vmatpush1.msra.mxu0 0.0
    %939 = vmatprep.subr.mxu0 0.0
    %940 = vmatpush1.msra.mxu0 0.0
    %941 = vmatprep.subr.mxu0 0.0
    %942 = vmatpush1.msra.mxu0 0.0
    %943 = vmatprep.subr.mxu0 0.0
    %944 = vmatpush1.msra.mxu0 0.0
    %945 = vmatprep.subr.mxu0 0.0
    %946 = vmatpush1.msra.mxu0 0.0
    %947 = vmatprep.subr.mxu0 0.0
    %948 = vmatpush1.msra.mxu0 0.0
    %949 = vmatprep.subr.mxu0 0.0
    %950 = vmatpush1.msra.mxu0 0.0
    %951 = vmatprep.subr.mxu0 0.0
    %952 = vmatpush1.msra.mxu0 0.0
    %953 = vmatprep.subr.mxu0 0.0
    %954 = vmatpush1.msra.mxu0 0.0
    %955 = vmatprep.subr.mxu0 0.0
    %956 = vmatpush1.msra.mxu0 0.0
    %957 = vmatprep.subr.mxu0 0.0
    %958 = vmatpush1.msra.mxu0 0.0
    %959 = vmatprep.subr.mxu0 0.0
    %960 = vmatpush1.msra.mxu0 0.0
    %961 = vmatprep.subr.mxu0 0.0
    %962 = vmatpush1.msra.mxu0 0.0
    %963 = vmatprep.subr.mxu0 0.0
    %964 = vmatpush1.msra.mxu0 0.0
    %965 = vmatprep.subr.mxu0 0.0
    %966 = vmatpush1.msra.mxu0 0.0
    %967 = vmatprep.subr.mxu0 0.0
    %968 = vmatpush1.msra.mxu0 0.0
    %969 = vmatprep.subr.mxu0 0.0
    %970 = vmatpush1.msra.mxu0 0.0
    %971 = vmatprep.subr.mxu0 0.0
    %972 = vmatpush1.msra.mxu0 0.0
    %973 = vmatprep.subr.mxu0 0.0
    %974 = vmatpush1.msra.mxu0 0.0
    %975 = vmatprep.subr.mxu0 0.0
    %976 = vmatpush1.msra.mxu0 0.0
    %977 = vmatprep.subr.mxu0 0.0
    %978 = vmatpush1.msra.mxu0 0.0
    %979 = vmatprep.subr.mxu0 0.0
    %980 = vmatpush1.msra.mxu0 0.0
    %981 = vmatprep.subr.mxu0 0.0
    %982 = vmatpush1.msra.mxu0 0.0
    %983 = vmatprep.subr.mxu0 0.0
    %984 = vmatpush1.msra.mxu0 0.0
    %985 = vmatprep.subr.mxu0 0.0
    %986 = vmatpush1.msra.mxu0 0.0
    %987 = vmatprep.mubr.f32.mxu0 0.0
    %988 = vmatmul.mubr.f32.gmra.mrb[0].mxu0 %v921
    %v989 = vpop.f32.mrb[0].mxu0
    %v990 = vadd.f32 0.0, %v989
    %v991 = vpop.f32.mrb[0].mxu0
    %992 = vdwg.mxu0
    %v993 = vadd.f32 %v196, %v990
    %v994 = vxor.u32 %v993, 2147483648
    %v995 = vmul.f32 %v994, 1.442695
    %v996 = vpow.pop %v995
    %v997 = vadd.f32 %v996, 1.0
    %v998 = vrcp.pop %v997
    %v999 = vmul.f32 1.0, %v998
    %v1000 = vtanh.pop %v993
    %v1001 = vmul.f32 %v999, %v808
    %1003 = vrot.lane.b32.xlu0 %v1000, 32
    %v1004 = vpop.permute.xlu0 %1003
    %v1006 = vmul.f32 %v999, %v1004
    %1008 = vrot.lane.b32.xlu0 %v1006, 32
    %v1009 = vpop.permute.xlu0 %1008
    %v1011 = vadd.f32 %v1001, %v1009
    %v1012 = vtanh.pop %v1011
    %1014 = vrot.lane.b32.xlu0 %v1012, 32
    %v1015 = vpop.permute.xlu0 %1014
    %v1017 = vmul.f32 %v999, %v1015
    %1020 = vrot.lane.b32.xlu0 %v917, 96
    %v1021 = vpop.permute.xlu0 %1020
    %v1023 = vsel %vm84, %v920, %v1021
    %v1025 = vsel %vm414, %v1023, 0
    %1027 = vmatprep.subr.mxu0 0.0
    %1028 = vmatpush1.msra.mxu0 %v37
    %1029 = vmatprep.subr.mxu0 0.0
    %1030 = vmatpush1.msra.mxu0 %v38
    %1031 = vmatprep.subr.mxu0 0.0
    %1032 = vmatpush1.msra.mxu0 %v39
    %1033 = vmatprep.subr.mxu0 0.0
    %1034 = vmatpush1.msra.mxu0 %v40
    %1035 = vmatprep.subr.mxu0 0.0
    %1036 = vmatpush1.msra.mxu0 %v41
    %1037 = vmatprep.subr.mxu0 0.0
    %1038 = vmatpush1.msra.mxu0 %v42
    %1039 = vmatprep.subr.mxu0 0.0
    %1040 = vmatpush1.msra.mxu0 %v43
    %1041 = vmatprep.subr.mxu0 0.0
    %1042 = vmatpush1.msra.mxu0 %v44
    %1043 = vmatprep.subr.mxu0 0.0
    %1044 = vmatpush1.msra.mxu0 0.0
    %1045 = vmatprep.subr.mxu0 0.0
    %1046 = vmatpush1.msra.mxu0 0.0
    %1047 = vmatprep.subr.mxu0 0.0
    %1048 = vmatpush1.msra.mxu0 0.0
    %1049 = vmatprep.subr.mxu0 0.0
    %1050 = vmatpush1.msra.mxu0 0.0
    %1051 = vmatprep.subr.mxu0 0.0
    %1052 = vmatpush1.msra.mxu0 0.0
    %1053 = vmatprep.subr.mxu0 0.0
    %1054 = vmatpush1.msra.mxu0 0.0
    %1055 = vmatprep.subr.mxu0 0.0
    %1056 = vmatpush1.msra.mxu0 0.0
    %1057 = vmatprep.subr.mxu0 0.0
    %1058 = vmatpush1.msra.mxu0 0.0
    %1059 = vmatprep.subr.mxu0 0.0
    %1060 = vmatpush1.msra.mxu0 0.0
    %1061 = vmatprep.subr.mxu0 0.0
    %1062 = vmatpush1.msra.mxu0 0.0
    %1063 = vmatprep.subr.mxu0 0.0
    %1064 = vmatpush1.msra.mxu0 0.0
    %1065 = vmatprep.subr.mxu0 0.0
    %1066 = vmatpush1.msra.mxu0 0.0
    %1067 = vmatprep.subr.mxu0 0.0
    %1068 = vmatpush1.msra.mxu0 0.0
    %1069 = vmatprep.subr.mxu0 0.0
    %1070 = vmatpush1.msra.mxu0 0.0
    %1071 = vmatprep.subr.mxu0 0.0
    %1072 = vmatpush1.msra.mxu0 0.0
    %1073 = vmatprep.subr.mxu0 0.0
    %1074 = vmatpush1.msra.mxu0 0.0
    %1075 = vmatprep.subr.mxu0 0.0
    %1076 = vmatpush1.msra.mxu0 0.0
    %1077 = vmatprep.subr.mxu0 0.0
    %1078 = vmatpush1.msra.mxu0 0.0
    %1079 = vmatprep.subr.mxu0 0.0
    %1080 = vmatpush1.msra.mxu0 0.0
    %1081 = vmatprep.subr.mxu0 0.0
    %1082 = vmatpush1.msra.mxu0 0.0
    %1083 = vmatprep.subr.mxu0 0.0
    %1084 = vmatpush1.msra.mxu0 0.0
    %1085 = vmatprep.subr.mxu0 0.0
    %1086 = vmatpush1.msra.mxu0 0.0
    %1087 = vmatprep.subr.mxu0 0.0
    %1088 = vmatpush1.msra.mxu0 0.0
    %1089 = vmatprep.subr.mxu0 0.0
    %1090 = vmatpush1.msra.mxu0 0.0
    %1091 = vmatprep.mubr.f32.mxu0 0.0
    %1092 = vmatmul.mubr.f32.gmra.mrb[0].mxu0 %v1025
    %v1093 = vpop.f32.mrb[0].mxu0
    %v1094 = vadd.f32 %v49, %v1093
    %v1095 = vpop.f32.mrb[0].mxu0
    %1096 = vdwg.mxu0
    %v1097 = vxor.u32 %v1094, 2147483648
    %v1098 = vmul.f32 %v1097, 1.442695
    %v1099 = vpow.pop %v1098
    %v1100 = vadd.f32 %v1099, 1.0
    %v1101 = vrcp.pop %v1100
    %v1102 = vmul.f32 1.0, %v1101
    %v1103 = vtanh.pop %v1094
    %v1104 = vmul.f32 %v1102, %v911
    %1106 = vrot.lane.b32.xlu0 %v1103, 32
    %v1107 = vpop.permute.xlu0 %1106
    %v1109 = vmul.f32 %v1102, %v1107
    %1111 = vrot.lane.b32.xlu0 %v1109, 32
    %v1112 = vpop.permute.xlu0 %1111
    %v1114 = vadd.f32 %v1104, %v1112
    %v1115 = vtanh.pop %v1114
    %1117 = vrot.lane.b32.xlu0 %v1115, 32
    %v1118 = vpop.permute.xlu0 %1117
    %v1120 = vmul.f32 %v1102, %v1118
    %1122 = vrot.lane.b32.xlu0 %v1017, 64
    %v1123 = vpop.permute.xlu0 %1122
    %v1124 = vsel %vm84, %v1123, 0
    %1126 = vmatprep.subr.mxu0 0.0
    %1127 = vmatpush1.msra.mxu0 %v32
    %1128 = vmatprep.subr.mxu0 0.0
    %1129 = vmatpush1.msra.mxu0 %v33
    %1130 = vmatprep.subr.mxu0 0.0
    %1131 = vmatpush1.msra.mxu0 %v34
    %1132 = vmatprep.subr.mxu0 0.0
    %1133 = vmatpush1.msra.mxu0 %v35
    %1134 = vmatprep.subr.mxu0 0.0
    %1135 = vmatpush1.msra.mxu0 0.0
    %1136 = vmatprep.subr.mxu0 0.0
    %1137 = vmatpush1.msra.mxu0 0.0
    %1138 = vmatprep.subr.mxu0 0.0
    %1139 = vmatpush1.msra.mxu0 0.0
    %1140 = vmatprep.subr.mxu0 0.0
    %1141 = vmatpush1.msra.mxu0 0.0
    %1142 = vmatprep.subr.mxu0 0.0
    %1143 = vmatpush1.msra.mxu0 0.0
    %1144 = vmatprep.subr.mxu0 0.0
    %1145 = vmatpush1.msra.mxu0 0.0
    %1146 = vmatprep.subr.mxu0 0.0
    %1147 = vmatpush1.msra.mxu0 0.0
    %1148 = vmatprep.subr.mxu0 0.0
    %1149 = vmatpush1.msra.mxu0 0.0
    %1150 = vmatprep.subr.mxu0 0.0
    %1151 = vmatpush1.msra.mxu0 0.0
    %1152 = vmatprep.subr.mxu0 0.0
    %1153 = vmatpush1.msra.mxu0 0.0
    %1154 = vmatprep.subr.mxu0 0.0
    %1155 = vmatpush1.msra.mxu0 0.0
    %1156 = vmatprep.subr.mxu0 0.0
    %1157 = vmatpush1.msra.mxu0 0.0
    %1158 = vmatprep.subr.mxu0 0.0
    %1159 = vmatpush1.msra.mxu0 0.0
    %1160 = vmatprep.subr.mxu0 0.0
    %1161 = vmatpush1.msra.mxu0 0.0
    %1162 = vmatprep.subr.mxu0 0.0
    %1163 = vmatpush1.msra.mxu0 0.0
    %1164 = vmatprep.subr.mxu0 0.0
    %1165 = vmatpush1.msra.mxu0 0.0
    %1166 = vmatprep.subr.mxu0 0.0
    %1167 = vmatpush1.msra.mxu0 0.0
    %1168 = vmatprep.subr.mxu0 0.0
    %1169 = vmatpush1.msra.mxu0 0.0
    %1170 = vmatprep.subr.mxu0 0.0
    %1171 = vmatpush1.msra.mxu0 0.0
    %1172 = vmatprep.subr.mxu0 0.0
    %1173 = vmatpush1.msra.mxu0 0.0
    %1174 = vmatprep.subr.mxu0 0.0
    %1175 = vmatpush1.msra.mxu0 0.0
    %1176 = vmatprep.subr.mxu0 0.0
    %1177 = vmatpush1.msra.mxu0 0.0
    %1178 = vmatprep.subr.mxu0 0.0
    %1179 = vmatpush1.msra.mxu0 0.0
    %1180 = vmatprep.subr.mxu0 0.0
    %1181 = vmatpush1.msra.mxu0 0.0
    %1182 = vmatprep.subr.mxu0 0.0
    %1183 = vmatpush1.msra.mxu0 0.0
    %1184 = vmatprep.subr.mxu0 0.0
    %1185 = vmatpush1.msra.mxu0 0.0
    %1186 = vmatprep.subr.mxu0 0.0
    %1187 = vmatpush1.msra.mxu0 0.0
    %1188 = vmatprep.subr.mxu0 0.0
    %1189 = vmatpush1.msra.mxu0 0.0
    %1190 = vmatprep.mubr.f32.mxu0 0.0
    %1191 = vmatmul.mubr.f32.gmra.mrb[0].mxu0 %v1124
    %v1192 = vpop.f32.mrb[0].mxu0
    %v1193 = vadd.f32 0.0, %v1192
    %v1194 = vpop.f32.mrb[0].mxu0
    %1195 = vdwg.mxu0
    %v1196 = vadd.f32 %v201, %v1193
    %v1197 = vxor.u32 %v1196, 2147483648
    %v1198 = vmul.f32 %v1197, 1.442695
    %v1199 = vpow.pop %v1198
    %v1200 = vadd.f32 %v1199, 1.0
    %v1201 = vrcp.pop %v1200
    %v1202 = vmul.f32 1.0, %v1201
    %v1203 = vtanh.pop %v1196
    %v1204 = vmul.f32 %v1202, %v1011
    %1206 = vrot.lane.b32.xlu0 %v1203, 32
    %v1207 = vpop.permute.xlu0 %1206
    %v1209 = vmul.f32 %v1202, %v1207
    %1211 = vrot.lane.b32.xlu0 %v1209, 32
    %v1212 = vpop.permute.xlu0 %1211
    %v1214 = vadd.f32 %v1204, %v1212
    %v1215 = vtanh.pop %v1214
    %1217 = vrot.lane.b32.xlu0 %v1215, 32
    %v1218 = vpop.permute.xlu0 %1217
    %v1220 = vmul.f32 %v1202, %v1218
    %1223 = vrot.lane.b32.xlu0 %v1120, 96
    %v1224 = vpop.permute.xlu0 %1223
    %v1226 = vsel %vm84, %v1123, %v1224
    %v1228 = vsel %vm414, %v1226, 0
    %1230 = vmatprep.subr.mxu0 0.0
    %1231 = vmatpush1.msra.mxu0 %v37
    %1232 = vmatprep.subr.mxu0 0.0
    %1233 = vmatpush1.msra.mxu0 %v38
    %1234 = vmatprep.subr.mxu0 0.0
    %1235 = vmatpush1.msra.mxu0 %v39
    %1236 = vmatprep.subr.mxu0 0.0
    %1237 = vmatpush1.msra.mxu0 %v40
    %1238 = vmatprep.subr.mxu0 0.0
    %1239 = vmatpush1.msra.mxu0 %v41
    %1240 = vmatprep.subr.mxu0 0.0
    %1241 = vmatpush1.msra.mxu0 %v42
    %1242 = vmatprep.subr.mxu0 0.0
    %1243 = vmatpush1.msra.mxu0 %v43
    %1244 = vmatprep.subr.mxu0 0.0
    %1245 = vmatpush1.msra.mxu0 %v44
    %1246 = vmatprep.subr.mxu0 0.0
    %1247 = vmatpush1.msra.mxu0 0.0
    %1248 = vmatprep.subr.mxu0 0.0
    %1249 = vmatpush1.msra.mxu0 0.0
    %1250 = vmatprep.subr.mxu0 0.0
    %1251 = vmatpush1.msra.mxu0 0.0
    %1252 = vmatprep.subr.mxu0 0.0
    %1253 = vmatpush1.msra.mxu0 0.0
    %1254 = vmatprep.subr.mxu0 0.0
    %1255 = vmatpush1.msra.mxu0 0.0
    %1256 = vmatprep.subr.mxu0 0.0
    %1257 = vmatpush1.msra.mxu0 0.0
    %1258 = vmatprep.subr.mxu0 0.0
    %1259 = vmatpush1.msra.mxu0 0.0
    %1260 = vmatprep.subr.mxu0 0.0
    %1261 = vmatpush1.msra.mxu0 0.0
    %1262 = vmatprep.subr.mxu0 0.0
    %1263 = vmatpush1.msra.mxu0 0.0
    %1264 = vmatprep.subr.mxu0 0.0
    %1265 = vmatpush1.msra.mxu0 0.0
    %1266 = vmatprep.subr.mxu0 0.0
    %1267 = vmatpush1.msra.mxu0 0.0
    %1268 = vmatprep.subr.mxu0 0.0
    %1269 = vmatpush1.msra.mxu0 0.0
    %1270 = vmatprep.subr.mxu0 0.0
    %1271 = vmatpush1.msra.mxu0 0.0
    %1272 = vmatprep.subr.mxu0 0.0
    %1273 = vmatpush1.msra.mxu0 0.0
    %1274 = vmatprep.subr.mxu0 0.0
    %1275 = vmatpush1.msra.mxu0 0.0
    %1276 = vmatprep.subr.mxu0 0.0
    %1277 = vmatpush1.msra.mxu0 0.0
    %1278 = vmatprep.subr.mxu0 0.0
    %1279 = vmatpush1.msra.mxu0 0.0
    %1280 = vmatprep.subr.mxu0 0.0
    %1281 = vmatpush1.msra.mxu0 0.0
    %1282 = vmatprep.subr.mxu0 0.0
    %1283 = vmatpush1.msra.mxu0 0.0
    %1284 = vmatprep.subr.mxu0 0.0
    %1285 = vmatpush1.msra.mxu0 0.0
    %1286 = vmatprep.subr.mxu0 0.0
    %1287 = vmatpush1.msra.mxu0 0.0
    %1288 = vmatprep.subr.mxu0 0.0
    %1289 = vmatpush1.msra.mxu0 0.0
    %1290 = vmatprep.subr.mxu0 0.0
    %1291 = vmatpush1.msra.mxu0 0.0
    %1292 = vmatprep.subr.mxu0 0.0
    %1293 = vmatpush1.msra.mxu0 0.0
    %1294 = vmatprep.mubr.f32.mxu0 0.0
    %1295 = vmatmul.mubr.f32.gmra.mrb[0].mxu0 %v1228
    %v1296 = vpop.f32.mrb[0].mxu0
    %v1297 = vadd.f32 %v49, %v1296
    %v1298 = vpop.f32.mrb[0].mxu0
    %1299 = vdwg.mxu0
    %v1300 = vxor.u32 %v1297, 2147483648
    %v1301 = vmul.f32 %v1300, 1.442695
    %v1302 = vpow.pop %v1301
    %v1303 = vadd.f32 %v1302, 1.0
    %v1304 = vrcp.pop %v1303
    %v1305 = vmul.f32 1.0, %v1304
    %v1306 = vtanh.pop %v1297
    %v1307 = vmul.f32 %v1305, %v1114
    %1309 = vrot.lane.b32.xlu0 %v1306, 32
    %v1310 = vpop.permute.xlu0 %1309
    %v1312 = vmul.f32 %v1305, %v1310
    %1314 = vrot.lane.b32.xlu0 %v1312, 32
    %v1315 = vpop.permute.xlu0 %1314
    %v1317 = vadd.f32 %v1307, %v1315
    %v1318 = vtanh.pop %v1317
    %1320 = vrot.lane.b32.xlu0 %v1318, 32
    %v1321 = vpop.permute.xlu0 %1320
    %v1323 = vmul.f32 %v1305, %v1321
    %1325 = vrot.lane.b32.xlu0 %v1220, 64
    %v1326 = vpop.permute.xlu0 %1325
    %v1327 = vsel %vm84, %v1326, 0
    %1329 = vmatprep.subr.mxu0 0.0
    %1330 = vmatpush1.msra.mxu0 %v32
    %1331 = vmatprep.subr.mxu0 0.0
    %1332 = vmatpush1.msra.mxu0 %v33
    %1333 = vmatprep.subr.mxu0 0.0
    %1334 = vmatpush1.msra.mxu0 %v34
    %1335 = vmatprep.subr.mxu0 0.0
    %1336 = vmatpush1.msra.mxu0 %v35
    %1337 = vmatprep.subr.mxu0 0.0
    %1338 = vmatpush1.msra.mxu0 0.0
    %1339 = vmatprep.subr.mxu0 0.0
    %1340 = vmatpush1.msra.mxu0 0.0
    %1341 = vmatprep.subr.mxu0 0.0
    %1342 = vmatpush1.msra.mxu0 0.0
    %1343 = vmatprep.subr.mxu0 0.0
    %1344 = vmatpush1.msra.mxu0 0.0
    %1345 = vmatprep.subr.mxu0 0.0
    %1346 = vmatpush1.msra.mxu0 0.0
    %1347 = vmatprep.subr.mxu0 0.0
    %1348 = vmatpush1.msra.mxu0 0.0
    %1349 = vmatprep.subr.mxu0 0.0
    %1350 = vmatpush1.msra.mxu0 0.0
    %1351 = vmatprep.subr.mxu0 0.0
    %1352 = vmatpush1.msra.mxu0 0.0
    %1353 = vmatprep.subr.mxu0 0.0
    %1354 = vmatpush1.msra.mxu0 0.0
    %1355 = vmatprep.subr.mxu0 0.0
    %1356 = vmatpush1.msra.mxu0 0.0
    %1357 = vmatprep.subr.mxu0 0.0
    %1358 = vmatpush1.msra.mxu0 0.0
    %1359 = vmatprep.subr.mxu0 0.0
    %1360 = vmatpush1.msra.mxu0 0.0
    %1361 = vmatprep.subr.mxu0 0.0
    %1362 = vmatpush1.msra.mxu0 0.0
    %1363 = vmatprep.subr.mxu0 0.0
    %1364 = vmatpush1.msra.mxu0 0.0
    %1365 = vmatprep.subr.mxu0 0.0
    %1366 = vmatpush1.msra.mxu0 0.0
    %1367 = vmatprep.subr.mxu0 0.0
    %1368 = vmatpush1.msra.mxu0 0.0
    %1369 = vmatprep.subr.mxu0 0.0
    %1370 = vmatpush1.msra.mxu0 0.0
    %1371 = vmatprep.subr.mxu0 0.0
    %1372 = vmatpush1.msra.mxu0 0.0
    %1373 = vmatprep.subr.mxu0 0.0
    %1374 = vmatpush1.msra.mxu0 0.0
    %1375 = vmatprep.subr.mxu0 0.0
    %1376 = vmatpush1.msra.mxu0 0.0
    %1377 = vmatprep.subr.mxu0 0.0
    %1378 = vmatpush1.msra.mxu0 0.0
    %1379 = vmatprep.subr.mxu0 0.0
    %1380 = vmatpush1.msra.mxu0 0.0
    %1381 = vmatprep.subr.mxu0 0.0
    %1382 = vmatpush1.msra.mxu0 0.0
    %1383 = vmatprep.subr.mxu0 0.0
    %1384 = vmatpush1.msra.mxu0 0.0
    %1385 = vmatprep.subr.mxu0 0.0
    %1386 = vmatpush1.msra.mxu0 0.0
    %1387 = vmatprep.subr.mxu0 0.0
    %1388 = vmatpush1.msra.mxu0 0.0
    %1389 = vmatprep.subr.mxu0 0.0
    %1390 = vmatpush1.msra.mxu0 0.0
    %1391 = vmatprep.subr.mxu0 0.0
    %1392 = vmatpush1.msra.mxu0 0.0
    %1393 = vmatprep.mubr.f32.mxu0 0.0
    %1394 = vmatmul.mubr.f32.gmra.mrb[0].mxu0 %v1327
    %v1395 = vpop.f32.mrb[0].mxu0
    %v1396 = vadd.f32 0.0, %v1395
    %v1397 = vpop.f32.mrb[0].mxu0
    %1398 = vdwg.mxu0
    %v1399 = vadd.f32 %v206, %v1396
    %v1400 = vxor.u32 %v1399, 2147483648
    %v1401 = vmul.f32 %v1400, 1.442695
    %v1402 = vpow.pop %v1401
    %v1403 = vadd.f32 %v1402, 1.0
    %v1404 = vrcp.pop %v1403
    %v1405 = vmul.f32 1.0, %v1404
    %v1406 = vtanh.pop %v1399
    %v1407 = vmul.f32 %v1405, %v1214
    %1409 = vrot.lane.b32.xlu0 %v1406, 32
    %v1410 = vpop.permute.xlu0 %1409
    %v1412 = vmul.f32 %v1405, %v1410
    %1414 = vrot.lane.b32.xlu0 %v1412, 32
    %v1415 = vpop.permute.xlu0 %1414
    %v1417 = vadd.f32 %v1407, %v1415
    %v1418 = vtanh.pop %v1417
    %1420 = vrot.lane.b32.xlu0 %v1418, 32
    %v1421 = vpop.permute.xlu0 %1420
    %v1423 = vmul.f32 %v1405, %v1421
    %1426 = vrot.lane.b32.xlu0 %v1323, 96
    %v1427 = vpop.permute.xlu0 %1426
    %v1429 = vsel %vm84, %v1326, %v1427
    %v1431 = vsel %vm414, %v1429, 0
    %1433 = vmatprep.subr.mxu0 0.0
    %1434 = vmatpush1.msra.mxu0 %v37
    %1435 = vmatprep.subr.mxu0 0.0
    %1436 = vmatpush1.msra.mxu0 %v38
    %1437 = vmatprep.subr.mxu0 0.0
    %1438 = vmatpush1.msra.mxu0 %v39
    %1439 = vmatprep.subr.mxu0 0.0
    %1440 = vmatpush1.msra.mxu0 %v40
    %1441 = vmatprep.subr.mxu0 0.0
    %1442 = vmatpush1.msra.mxu0 %v41
    %1443 = vmatprep.subr.mxu0 0.0
    %1444 = vmatpush1.msra.mxu0 %v42
    %1445 = vmatprep.subr.mxu0 0.0
    %1446 = vmatpush1.msra.mxu0 %v43
    %1447 = vmatprep.subr.mxu0 0.0
    %1448 = vmatpush1.msra.mxu0 %v44
    %1449 = vmatprep.subr.mxu0 0.0
    %1450 = vmatpush1.msra.mxu0 0.0
    %1451 = vmatprep.subr.mxu0 0.0
    %1452 = vmatpush1.msra.mxu0 0.0
    %1453 = vmatprep.subr.mxu0 0.0
    %1454 = vmatpush1.msra.mxu0 0.0
    %1455 = vmatprep.subr.mxu0 0.0
    %1456 = vmatpush1.msra.mxu0 0.0
    %1457 = vmatprep.subr.mxu0 0.0
    %1458 = vmatpush1.msra.mxu0 0.0
    %1459 = vmatprep.subr.mxu0 0.0
    %1460 = vmatpush1.msra.mxu0 0.0
    %1461 = vmatprep.subr.mxu0 0.0
    %1462 = vmatpush1.msra.mxu0 0.0
    %1463 = vmatprep.subr.mxu0 0.0
    %1464 = vmatpush1.msra.mxu0 0.0
    %1465 = vmatprep.subr.mxu0 0.0
    %1466 = vmatpush1.msra.mxu0 0.0
    %1467 = vmatprep.subr.mxu0 0.0
    %1468 = vmatpush1.msra.mxu0 0.0
    %1469 = vmatprep.subr.mxu0 0.0
    %1470 = vmatpush1.msra.mxu0 0.0
    %1471 = vmatprep.subr.mxu0 0.0
    %1472 = vmatpush1.msra.mxu0 0.0
    %1473 = vmatprep.subr.mxu0 0.0
    %1474 = vmatpush1.msra.mxu0 0.0
    %1475 = vmatprep.subr.mxu0 0.0
    %1476 = vmatpush1.msra.mxu0 0.0
    %1477 = vmatprep.subr.mxu0 0.0
    %1478 = vmatpush1.msra.mxu0 0.0
    %1479 = vmatprep.subr.mxu0 0.0
    %1480 = vmatpush1.msra.mxu0 0.0
    %1481 = vmatprep.subr.mxu0 0.0
    %1482 = vmatpush1.msra.mxu0 0.0
    %1483 = vmatprep.subr.mxu0 0.0
    %1484 = vmatpush1.msra.mxu0 0.0
    %1485 = vmatprep.subr.mxu0 0.0
    %1486 = vmatpush1.msra.mxu0 0.0
    %1487 = vmatprep.subr.mxu0 0.0
    %1488 = vmatpush1.msra.mxu0 0.0
    %1489 = vmatprep.subr.mxu0 0.0
    %1490 = vmatpush1.msra.mxu0 0.0
    %1491 = vmatprep.subr.mxu0 0.0
    %1492 = vmatpush1.msra.mxu0 0.0
    %1493 = vmatprep.subr.mxu0 0.0
    %1494 = vmatpush1.msra.mxu0 0.0
    %1495 = vmatprep.subr.mxu0 0.0
    %1496 = vmatpush1.msra.mxu0 0.0
    %1497 = vmatprep.mubr.f32.mxu0 0.0
    %1498 = vmatmul.mubr.f32.gmra.mrb[0].mxu0 %v1431
    %v1499 = vpop.f32.mrb[0].mxu0
    %v1500 = vadd.f32 %v49, %v1499
    %v1501 = vpop.f32.mrb[0].mxu0
    %1502 = vdwg.mxu0
    %v1503 = vxor.u32 %v1500, 2147483648
    %v1504 = vmul.f32 %v1503, 1.442695
    %v1505 = vpow.pop %v1504
    %v1506 = vadd.f32 %v1505, 1.0
    %v1507 = vrcp.pop %v1506
    %v1508 = vmul.f32 1.0, %v1507
    %v1509 = vtanh.pop %v1500
    %v1510 = vmul.f32 %v1508, %v1317
    %1512 = vrot.lane.b32.xlu0 %v1509, 32
    %v1513 = vpop.permute.xlu0 %1512
    %v1515 = vmul.f32 %v1508, %v1513
    %1517 = vrot.lane.b32.xlu0 %v1515, 32
    %v1518 = vpop.permute.xlu0 %1517
    %v1520 = vadd.f32 %v1510, %v1518
    %v1521 = vtanh.pop %v1520
    %1523 = vrot.lane.b32.xlu0 %v1521, 32
    %v1524 = vpop.permute.xlu0 %1523
    %v1526 = vmul.f32 %v1508, %v1524
    %1528 = vrot.lane.b32.xlu0 %v1423, 64
    %v1529 = vpop.permute.xlu0 %1528
    %v1530 = vsel %vm84, %v1529, 0
    %1532 = vmatprep.subr.mxu0 0.0
    %1533 = vmatpush1.msra.mxu0 %v32
    %1534 = vmatprep.subr.mxu0 0.0
    %1535 = vmatpush1.msra.mxu0 %v33
    %1536 = vmatprep.subr.mxu0 0.0
    %1537 = vmatpush1.msra.mxu0 %v34
    %1538 = vmatprep.subr.mxu0 0.0
    %1539 = vmatpush1.msra.mxu0 %v35
    %1540 = vmatprep.subr.mxu0 0.0
    %1541 = vmatpush1.msra.mxu0 0.0
    %1542 = vmatprep.subr.mxu0 0.0
    %1543 = vmatpush1.msra.mxu0 0.0
    %1544 = vmatprep.subr.mxu0 0.0
    %1545 = vmatpush1.msra.mxu0 0.0
    %1546 = vmatprep.subr.mxu0 0.0
    %1547 = vmatpush1.msra.mxu0 0.0
    %1548 = vmatprep.subr.mxu0 0.0
    %1549 = vmatpush1.msra.mxu0 0.0
    %1550 = vmatprep.subr.mxu0 0.0
    %1551 = vmatpush1.msra.mxu0 0.0
    %1552 = vmatprep.subr.mxu0 0.0
    %1553 = vmatpush1.msra.mxu0 0.0
    %1554 = vmatprep.subr.mxu0 0.0
    %1555 = vmatpush1.msra.mxu0 0.0
    %1556 = vmatprep.subr.mxu0 0.0
    %1557 = vmatpush1.msra.mxu0 0.0
    %1558 = vmatprep.subr.mxu0 0.0
    %1559 = vmatpush1.msra.mxu0 0.0
    %1560 = vmatprep.subr.mxu0 0.0
    %1561 = vmatpush1.msra.mxu0 0.0
    %1562 = vmatprep.subr.mxu0 0.0
    %1563 = vmatpush1.msra.mxu0 0.0
    %1564 = vmatprep.subr.mxu0 0.0
    %1565 = vmatpush1.msra.mxu0 0.0
    %1566 = vmatprep.subr.mxu0 0.0
    %1567 = vmatpush1.msra.mxu0 0.0
    %1568 = vmatprep.subr.mxu0 0.0
    %1569 = vmatpush1.msra.mxu0 0.0
    %1570 = vmatprep.subr.mxu0 0.0
    %1571 = vmatpush1.msra.mxu0 0.0
    %1572 = vmatprep.subr.mxu0 0.0
    %1573 = vmatpush1.msra.mxu0 0.0
    %1574 = vmatprep.subr.mxu0 0.0
    %1575 = vmatpush1.msra.mxu0 0.0
    %1576 = vmatprep.subr.mxu0 0.0
    %1577 = vmatpush1.msra.mxu0 0.0
    %1578 = vmatprep.subr.mxu0 0.0
    %1579 = vmatpush1.msra.mxu0 0.0
    %1580 = vmatprep.subr.mxu0 0.0
    %1581 = vmatpush1.msra.mxu0 0.0
    %1582 = vmatprep.subr.mxu0 0.0
    %1583 = vmatpush1.msra.mxu0 0.0
    %1584 = vmatprep.subr.mxu0 0.0
    %1585 = vmatpush1.msra.mxu0 0.0
    %1586 = vmatprep.subr.mxu0 0.0
    %1587 = vmatpush1.msra.mxu0 0.0
    %1588 = vmatprep.subr.mxu0 0.0
    %1589 = vmatpush1.msra.mxu0 0.0
    %1590 = vmatprep.subr.mxu0 0.0
    %1591 = vmatpush1.msra.mxu0 0.0
    %1592 = vmatprep.subr.mxu0 0.0
    %1593 = vmatpush1.msra.mxu0 0.0
    %1594 = vmatprep.subr.mxu0 0.0
    %1595 = vmatpush1.msra.mxu0 0.0
    %1596 = vmatprep.mubr.f32.mxu0 0.0
    %1597 = vmatmul.mubr.f32.gmra.mrb[0].mxu0 %v1530
    %v1598 = vpop.f32.mrb[0].mxu0
    %v1599 = vadd.f32 0.0, %v1598
    %v1600 = vpop.f32.mrb[0].mxu0
    %1601 = vdwg.mxu0
    %v1602 = vadd.f32 %v211, %v1599
    %v1603 = vxor.u32 %v1602, 2147483648
    %v1604 = vmul.f32 %v1603, 1.442695
    %v1605 = vpow.pop %v1604
    %v1606 = vadd.f32 %v1605, 1.0
    %v1607 = vrcp.pop %v1606
    %v1608 = vmul.f32 1.0, %v1607
    %v1609 = vtanh.pop %v1602
    %v1610 = vmul.f32 %v1608, %v1417
    %1612 = vrot.lane.b32.xlu0 %v1609, 32
    %v1613 = vpop.permute.xlu0 %1612
    %v1615 = vmul.f32 %v1608, %v1613
    %1617 = vrot.lane.b32.xlu0 %v1615, 32
    %v1618 = vpop.permute.xlu0 %1617
    %v1620 = vadd.f32 %v1610, %v1618
    %v1621 = vtanh.pop %v1620
    %1623 = vrot.lane.b32.xlu0 %v1621, 32
    %v1624 = vpop.permute.xlu0 %1623
    %v1626 = vmul.f32 %v1608, %v1624
    %1629 = vrot.lane.b32.xlu0 %v1526, 96
    %v1630 = vpop.permute.xlu0 %1629
    %v1632 = vsel %vm84, %v1529, %v1630
    %v1634 = vsel %vm414, %v1632, 0
    %1636 = vmatprep.subr.mxu0 0.0
    %1637 = vmatpush1.msra.mxu0 %v37
    %1638 = vmatprep.subr.mxu0 0.0
    %1639 = vmatpush1.msra.mxu0 %v38
    %1640 = vmatprep.subr.mxu0 0.0
    %1641 = vmatpush1.msra.mxu0 %v39
    %1642 = vmatprep.subr.mxu0 0.0
    %1643 = vmatpush1.msra.mxu0 %v40
    %1644 = vmatprep.subr.mxu0 0.0
    %1645 = vmatpush1.msra.mxu0 %v41
    %1646 = vmatprep.subr.mxu0 0.0
    %1647 = vmatpush1.msra.mxu0 %v42
    %1648 = vmatprep.subr.mxu0 0.0
    %1649 = vmatpush1.msra.mxu0 %v43
    %1650 = vmatprep.subr.mxu0 0.0
    %1651 = vmatpush1.msra.mxu0 %v44
    %1652 = vmatprep.subr.mxu0 0.0
    %1653 = vmatpush1.msra.mxu0 0.0
    %1654 = vmatprep.subr.mxu0 0.0
    %1655 = vmatpush1.msra.mxu0 0.0
    %1656 = vmatprep.subr.mxu0 0.0
    %1657 = vmatpush1.msra.mxu0 0.0
    %1658 = vmatprep.subr.mxu0 0.0
    %1659 = vmatpush1.msra.mxu0 0.0
    %1660 = vmatprep.subr.mxu0 0.0
    %1661 = vmatpush1.msra.mxu0 0.0
    %1662 = vmatprep.subr.mxu0 0.0
    %1663 = vmatpush1.msra.mxu0 0.0
    %1664 = vmatprep.subr.mxu0 0.0
    %1665 = vmatpush1.msra.mxu0 0.0
    %1666 = vmatprep.subr.mxu0 0.0
    %1667 = vmatpush1.msra.mxu0 0.0
    %1668 = vmatprep.subr.mxu0 0.0
    %1669 = vmatpush1.msra.mxu0 0.0
    %1670 = vmatprep.subr.mxu0 0.0
    %1671 = vmatpush1.msra.mxu0 0.0
    %1672 = vmatprep.subr.mxu0 0.0
    %1673 = vmatpush1.msra.mxu0 0.0
    %1674 = vmatprep.subr.mxu0 0.0
    %1675 = vmatpush1.msra.mxu0 0.0
    %1676 = vmatprep.subr.mxu0 0.0
    %1677 = vmatpush1.msra.mxu0 0.0
    %1678 = vmatprep.subr.mxu0 0.0
    %1679 = vmatpush1.msra.mxu0 0.0
    %1680 = vmatprep.subr.mxu0 0.0
    %1681 = vmatpush1.msra.mxu0 0.0
    %1682 = vmatprep.subr.mxu0 0.0
    %1683 = vmatpush1.msra.mxu0 0.0
    %1684 = vmatprep.subr.mxu0 0.0
    %1685 = vmatpush1.msra.mxu0 0.0
    %1686 = vmatprep.subr.mxu0 0.0
    %1687 = vmatpush1.msra.mxu0 0.0
    %1688 = vmatprep.subr.mxu0 0.0
    %1689 = vmatpush1.msra.mxu0 0.0
    %1690 = vmatprep.subr.mxu0 0.0
    %1691 = vmatpush1.msra.mxu0 0.0
    %1692 = vmatprep.subr.mxu0 0.0
    %1693 = vmatpush1.msra.mxu0 0.0
    %1694 = vmatprep.subr.mxu0 0.0
    %1695 = vmatpush1.msra.mxu0 0.0
    %1696 = vmatprep.subr.mxu0 0.0
    %1697 = vmatpush1.msra.mxu0 0.0
    %1698 = vmatprep.subr.mxu0 0.0
    %1699 = vmatpush1.msra.mxu0 0.0
    %1700 = vmatprep.mubr.f32.mxu0 0.0
    %1701 = vmatmul.mubr.f32.gmra.mrb[0].mxu0 %v1634
    %v1702 = vpop.f32.mrb[0].mxu0
    %v1703 = vadd.f32 %v49, %v1702
    %v1704 = vpop.f32.mrb[0].mxu0
    %1705 = vdwg.mxu0
    %v1706 = vxor.u32 %v1703, 2147483648
    %v1707 = vmul.f32 %v1706, 1.442695
    %v1708 = vpow.pop %v1707
    %v1709 = vadd.f32 %v1708, 1.0
    %v1710 = vrcp.pop %v1709
    %v1711 = vmul.f32 1.0, %v1710
    %v1712 = vtanh.pop %v1703
    %v1713 = vmul.f32 %v1711, %v1520
    %1715 = vrot.lane.b32.xlu0 %v1712, 32
    %v1716 = vpop.permute.xlu0 %1715
    %v1718 = vmul.f32 %v1711, %v1716
    %1720 = vrot.lane.b32.xlu0 %v1718, 32
    %v1721 = vpop.permute.xlu0 %1720
    %v1723 = vadd.f32 %v1713, %v1721
    %v1724 = vtanh.pop %v1723
    %1726 = vrot.lane.b32.xlu0 %v1724, 32
    %v1727 = vpop.permute.xlu0 %1726
    %v1729 = vmul.f32 %v1711, %v1727
    %1731 = vrot.lane.b32.xlu0 %v1626, 64
    %v1732 = vpop.permute.xlu0 %1731
    %1735 = vrot.lane.b32.xlu0 %v1729, 96
    %v1736 = vpop.permute.xlu0 %1735
    %v1738 = vsel %vm84, %v1732, %v1736
    %v1740 = vsel %vm414, %v1738, 0
    %1742 = vmatprep.subr.mxu0 0.0
    %1743 = vmatpush1.msra.mxu0 %v37
    %1744 = vmatprep.subr.mxu0 0.0
    %1745 = vmatpush1.msra.mxu0 %v38
    %1746 = vmatprep.subr.mxu0 0.0
    %1747 = vmatpush1.msra.mxu0 %v39
    %1748 = vmatprep.subr.mxu0 0.0
    %1749 = vmatpush1.msra.mxu0 %v40
    %1750 = vmatprep.subr.mxu0 0.0
    %1751 = vmatpush1.msra.mxu0 %v41
    %1752 = vmatprep.subr.mxu0 0.0
    %1753 = vmatpush1.msra.mxu0 %v42
    %1754 = vmatprep.subr.mxu0 0.0
    %1755 = vmatpush1.msra.mxu0 %v43
    %1756 = vmatprep.subr.mxu0 0.0
    %1757 = vmatpush1.msra.mxu0 %v44
    %1758 = vmatprep.subr.mxu0 0.0
    %1759 = vmatpush1.msra.mxu0 0.0
    %1760 = vmatprep.subr.mxu0 0.0
    %1761 = vmatpush1.msra.mxu0 0.0
    %1762 = vmatprep.subr.mxu0 0.0
    %1763 = vmatpush1.msra.mxu0 0.0
    %1764 = vmatprep.subr.mxu0 0.0
    %1765 = vmatpush1.msra.mxu0 0.0
    %1766 = vmatprep.subr.mxu0 0.0
    %1767 = vmatpush1.msra.mxu0 0.0
    %1768 = vmatprep.subr.mxu0 0.0
    %1769 = vmatpush1.msra.mxu0 0.0
    %1770 = vmatprep.subr.mxu0 0.0
    %1771 = vmatpush1.msra.mxu0 0.0
    %1772 = vmatprep.subr.mxu0 0.0
    %1773 = vmatpush1.msra.mxu0 0.0
    %1774 = vmatprep.subr.mxu0 0.0
    %1775 = vmatpush1.msra.mxu0 0.0
    %1776 = vmatprep.subr.mxu0 0.0
    %1777 = vmatpush1.msra.mxu0 0.0
    %1778 = vmatprep.subr.mxu0 0.0
    %1779 = vmatpush1.msra.mxu0 0.0
    %1780 = vmatprep.subr.mxu0 0.0
    %1781 = vmatpush1.msra.mxu0 0.0
    %1782 = vmatprep.subr.mxu0 0.0
    %1783 = vmatpush1.msra.mxu0 0.0
    %1784 = vmatprep.subr.mxu0 0.0
    %1785 = vmatpush1.msra.mxu0 0.0
    %1786 = vmatprep.subr.mxu0 0.0
    %1787 = vmatpush1.msra.mxu0 0.0
    %1788 = vmatprep.subr.mxu0 0.0
    %1789 = vmatpush1.msra.mxu0 0.0
    %1790 = vmatprep.subr.mxu0 0.0
    %1791 = vmatpush1.msra.mxu0 0.0
    %1792 = vmatprep.subr.mxu0 0.0
    %1793 = vmatpush1.msra.mxu0 0.0
    %1794 = vmatprep.subr.mxu0 0.0
    %1795 = vmatpush1.msra.mxu0 0.0
    %1796 = vmatprep.subr.mxu0 0.0
    %1797 = vmatpush1.msra.mxu0 0.0
    %1798 = vmatprep.subr.mxu0 0.0
    %1799 = vmatpush1.msra.mxu0 0.0
    %1800 = vmatprep.subr.mxu0 0.0
    %1801 = vmatpush1.msra.mxu0 0.0
    %1802 = vmatprep.subr.mxu0 0.0
    %1803 = vmatpush1.msra.mxu0 0.0
    %1804 = vmatprep.subr.mxu0 0.0
    %1805 = vmatpush1.msra.mxu0 0.0
    %1806 = vmatprep.mubr.f32.mxu0 0.0
    %1807 = vmatmul.mubr.f32.gmra.mrb[0].mxu0 %v1740
    %v1808 = vpop.f32.mrb[0].mxu0
    %v1809 = vadd.f32 %v49, %v1808
    %v1810 = vpop.f32.mrb[0].mxu0
    %1811 = vdwg.mxu0
    %v1812 = vxor.u32 %v1809, 2147483648
    %v1813 = vmul.f32 %v1812, 1.442695
    %v1814 = vpow.pop %v1813
    %v1815 = vadd.f32 %v1814, 1.0
    %v1816 = vrcp.pop %v1815
    %v1817 = vmul.f32 1.0, %v1816
    %v1818 = vtanh.pop %v1809
    %v1819 = vmul.f32 %v1817, %v1723
    %1821 = vrot.lane.b32.xlu0 %v1818, 32
    %v1822 = vpop.permute.xlu0 %1821
    %v1824 = vmul.f32 %v1817, %v1822
    %1826 = vrot.lane.b32.xlu0 %v1824, 32
    %v1827 = vpop.permute.xlu0 %1826
    %v1829 = vadd.f32 %v1819, %v1827
    %v1830 = vtanh.pop %v1829
    %1832 = vrot.lane.b32.xlu0 %v1830, 32
    %v1833 = vpop.permute.xlu0 %1832
    %v1835 = vmul.f32 %v1817, %v1833
    %v1836 = vlaneseq
    %v1837 = vshrl.u32 %v1836, 7
    %v1838 = vsub.s32 0, %v1837
    %v1839 = vrot.slane %v58, %v1838
    %1841 = vrot.lane.b32.xlu0 %v1835, 64
    %v1842 = vpop.permute.xlu0 %1841
    %v1843 = vsel %vm84, %v1842, 0
    %1845 = vmatprep.subr.mxu0 0.0
    %1846 = vmatpush1.msra.mxu0 %v50
    %1847 = vmatprep.subr.mxu0 0.0
    %1848 = vmatpush1.msra.mxu0 %v51
    %1849 = vmatprep.subr.mxu0 0.0
    %1850 = vmatpush1.msra.mxu0 %v52
    %1851 = vmatprep.subr.mxu0 0.0
    %1852 = vmatpush1.msra.mxu0 %v53
    %1853 = vmatprep.subr.mxu0 0.0
    %1854 = vmatpush1.msra.mxu0 0.0
    %1855 = vmatprep.subr.mxu0 0.0
    %1856 = vmatpush1.msra.mxu0 0.0
    %1857 = vmatprep.subr.mxu0 0.0
    %1858 = vmatpush1.msra.mxu0 0.0
    %1859 = vmatprep.subr.mxu0 0.0
    %1860 = vmatpush1.msra.mxu0 0.0
    %1861 = vmatprep.subr.mxu0 0.0
    %1862 = vmatpush1.msra.mxu0 0.0
    %1863 = vmatprep.subr.mxu0 0.0
    %1864 = vmatpush1.msra.mxu0 0.0
    %1865 = vmatprep.subr.mxu0 0.0
    %1866 = vmatpush1.msra.mxu0 0.0
    %1867 = vmatprep.subr.mxu0 0.0
    %1868 = vmatpush1.msra.mxu0 0.0
    %1869 = vmatprep.subr.mxu0 0.0
    %1870 = vmatpush1.msra.mxu0 0.0
    %1871 = vmatprep.subr.mxu0 0.0
    %1872 = vmatpush1.msra.mxu0 0.0
    %1873 = vmatprep.subr.mxu0 0.0
    %1874 = vmatpush1.msra.mxu0 0.0
    %1875 = vmatprep.subr.mxu0 0.0
    %1876 = vmatpush1.msra.mxu0 0.0
    %1877 = vmatprep.subr.mxu0 0.0
    %1878 = vmatpush1.msra.mxu0 0.0
    %1879 = vmatprep.subr.mxu0 0.0
    %1880 = vmatpush1.msra.mxu0 0.0
    %1881 = vmatprep.subr.mxu0 0.0
    %1882 = vmatpush1.msra.mxu0 0.0
    %1883 = vmatprep.subr.mxu0 0.0
    %1884 = vmatpush1.msra.mxu0 0.0
    %1885 = vmatprep.subr.mxu0 0.0
    %1886 = vmatpush1.msra.mxu0 0.0
    %1887 = vmatprep.subr.mxu0 0.0
    %1888 = vmatpush1.msra.mxu0 0.0
    %1889 = vmatprep.subr.mxu0 0.0
    %1890 = vmatpush1.msra.mxu0 0.0
    %1891 = vmatprep.subr.mxu0 0.0
    %1892 = vmatpush1.msra.mxu0 0.0
    %1893 = vmatprep.subr.mxu0 0.0
    %1894 = vmatpush1.msra.mxu0 0.0
    %1895 = vmatprep.subr.mxu0 0.0
    %1896 = vmatpush1.msra.mxu0 0.0
    %1897 = vmatprep.subr.mxu0 0.0
    %1898 = vmatpush1.msra.mxu0 0.0
    %1899 = vmatprep.subr.mxu0 0.0
    %1900 = vmatpush1.msra.mxu0 0.0
    %1901 = vmatprep.subr.mxu0 0.0
    %1902 = vmatpush1.msra.mxu0 0.0
    %1903 = vmatprep.subr.mxu0 0.0
    %1904 = vmatpush1.msra.mxu0 0.0
    %1905 = vmatprep.subr.mxu0 0.0
    %1906 = vmatpush1.msra.mxu0 0.0
    %1907 = vmatprep.subr.mxu0 0.0
    %1908 = vmatpush1.msra.mxu0 0.0
    %1909 = vmatprep.mubr.f32.mxu0 0.0
    %1910 = vmatmul.mubr.f32.gmra.mrb[0].mxu0 %v1843
    %v1911 = vpop.f32.mrb[0].mxu0
    %v1912 = vadd.f32 %v1839, %v1911
    %v1913 = vpop.f32.mrb[0].mxu0
    %1914 = vdwg.mxu0
    %1915 = vmatprep.subr.mxu0 0.0
    %1916 = vmatpush1.msra.mxu0 %v54
    %1917 = vmatprep.subr.mxu0 0.0
    %1918 = vmatpush1.msra.mxu0 %v55
    %1919 = vmatprep.subr.mxu0 0.0
    %1920 = vmatpush1.msra.mxu0 %v56
    %1921 = vmatprep.subr.mxu0 0.0
    %1922 = vmatpush1.msra.mxu0 %v57
    %1923 = vmatprep.subr.mxu0 0.0
    %1924 = vmatpush1.msra.mxu0 0.0
    %1925 = vmatprep.subr.mxu0 0.0
    %1926 = vmatpush1.msra.mxu0 0.0
    %1927 = vmatprep.subr.mxu0 0.0
    %1928 = vmatpush1.msra.mxu0 0.0
    %1929 = vmatprep.subr.mxu0 0.0
    %1930 = vmatpush1.msra.mxu0 0.0
    %1931 = vmatprep.subr.mxu0 0.0
    %1932 = vmatpush1.msra.mxu0 0.0
    %1933 = vmatprep.subr.mxu0 0.0
    %1934 = vmatpush1.msra.mxu0 0.0
    %1935 = vmatprep.subr.mxu0 0.0
    %1936 = vmatpush1.msra.mxu0 0.0
    %1937 = vmatprep.subr.mxu0 0.0
    %1938 = vmatpush1.msra.mxu0 0.0
    %1939 = vmatprep.subr.mxu0 0.0
    %1940 = vmatpush1.msra.mxu0 0.0
    %1941 = vmatprep.subr.mxu0 0.0
    %1942 = vmatpush1.msra.mxu0 0.0
    %1943 = vmatprep.subr.mxu0 0.0
    %1944 = vmatpush1.msra.mxu0 0.0
    %1945 = vmatprep.subr.mxu0 0.0
    %1946 = vmatpush1.msra.mxu0 0.0
    %1947 = vmatprep.subr.mxu0 0.0
    %1948 = vmatpush1.msra.mxu0 0.0
    %1949 = vmatprep.subr.mxu0 0.0
    %1950 = vmatpush1.msra.mxu0 0.0
    %1951 = vmatprep.subr.mxu0 0.0
    %1952 = vmatpush1.msra.mxu0 0.0
    %1953 = vmatprep.subr.mxu0 0.0
    %1954 = vmatpush1.msra.mxu0 0.0
    %1955 = vmatprep.subr.mxu0 0.0
    %1956 = vmatpush1.msra.mxu0 0.0
    %1957 = vmatprep.subr.mxu0 0.0
    %1958 = vmatpush1.msra.mxu0 0.0
    %1959 = vmatprep.subr.mxu0 0.0
    %1960 = vmatpush1.msra.mxu0 0.0
    %1961 = vmatprep.subr.mxu0 0.0
    %1962 = vmatpush1.msra.mxu0 0.0
    %1963 = vmatprep.subr.mxu0 0.0
    %1964 = vmatpush1.msra.mxu0 0.0
    %1965 = vmatprep.subr.mxu0 0.0
    %1966 = vmatpush1.msra.mxu0 0.0
    %1967 = vmatprep.subr.mxu0 0.0
    %1968 = vmatpush1.msra.mxu0 0.0
    %1969 = vmatprep.subr.mxu0 0.0
    %1970 = vmatpush1.msra.mxu0 0.0
    %1971 = vmatprep.subr.mxu0 0.0
    %1972 = vmatpush1.msra.mxu0 0.0
    %1973 = vmatprep.subr.mxu0 0.0
    %1974 = vmatpush1.msra.mxu0 0.0
    %1975 = vmatprep.subr.mxu0 0.0
    %1976 = vmatpush1.msra.mxu0 0.0
    %1977 = vmatprep.subr.mxu0 0.0
    %1978 = vmatpush1.msra.mxu0 0.0
    %1979 = vmatprep.mubr.f32.mxu0 0.0
    %1980 = vmatmul.mubr.f32.gmra.mrb[0].mxu0 %v215
    %v1981 = vpop.f32.mrb[0].mxu0
    %v1982 = vadd.f32 0.0, %v1981
    %v1983 = vpop.f32.mrb[0].mxu0
    %1984 = vdwg.mxu0
    %v1985 = vadd.f32 %v1912, %v1982
    %v1986 = vxor.u32 %v1985, 2147483648
    %v1987 = vmul.f32 %v1986, 1.442695
    %v1988 = vpow.pop %v1987
    %v1989 = vadd.f32 %v1988, 1.0
    %v1990 = vrcp.pop %v1989
    %v1991 = vmul.f32 1.0, %v1990
    %v1992 = vtanh.pop %v1985
    %v1993 = vmul.f32 %v1991, 0.0
    %1995 = vrot.lane.b32.xlu0 %v1992, 32
    %v1996 = vpop.permute.xlu0 %1995
    %v1998 = vmul.f32 %v1991, %v1996
    %2000 = vrot.lane.b32.xlu0 %v1998, 32
    %v2001 = vpop.permute.xlu0 %2000
    %v2003 = vadd.f32 %v1993, %v2001
    %v2004 = vtanh.pop %v2003
    %2006 = vrot.lane.b32.xlu0 %v2004, 32
    %v2007 = vpop.permute.xlu0 %2006
    %v2009 = vmul.f32 %v1991, %v2007
    %2011 = vrot.lane.b32.xlu0 %v2009, 64
    %v2012 = vpop.permute.xlu0 %2011
    %v2013 = vsel %vm84, %v2012, 0
    %2015 = vmatprep.subr.mxu0 0.0
    %2016 = vmatpush1.msra.mxu0 %v54
    %2017 = vmatprep.subr.mxu0 0.0
    %2018 = vmatpush1.msra.mxu0 %v55
    %2019 = vmatprep.subr.mxu0 0.0
    %2020 = vmatpush1.msra.mxu0 %v56
    %2021 = vmatprep.subr.mxu0 0.0
    %2022 = vmatpush1.msra.mxu0 %v57
    %2023 = vmatprep.subr.mxu0 0.0
    %2024 = vmatpush1.msra.mxu0 0.0
    %2025 = vmatprep.subr.mxu0 0.0
    %2026 = vmatpush1.msra.mxu0 0.0
    %2027 = vmatprep.subr.mxu0 0.0
    %2028 = vmatpush1.msra.mxu0 0.0
    %2029 = vmatprep.subr.mxu0 0.0
    %2030 = vmatpush1.msra.mxu0 0.0
    %2031 = vmatprep.subr.mxu0 0.0
    %2032 = vmatpush1.msra.mxu0 0.0
    %2033 = vmatprep.subr.mxu0 0.0
    %2034 = vmatpush1.msra.mxu0 0.0
    %2035 = vmatprep.subr.mxu0 0.0
    %2036 = vmatpush1.msra.mxu0 0.0
    %2037 = vmatprep.subr.mxu0 0.0
    %2038 = vmatpush1.msra.mxu0 0.0
    %2039 = vmatprep.subr.mxu0 0.0
    %2040 = vmatpush1.msra.mxu0 0.0
    %2041 = vmatprep.subr.mxu0 0.0
    %2042 = vmatpush1.msra.mxu0 0.0
    %2043 = vmatprep.subr.mxu0 0.0
    %2044 = vmatpush1.msra.mxu0 0.0
    %2045 = vmatprep.subr.mxu0 0.0
    %2046 = vmatpush1.msra.mxu0 0.0
    %2047 = vmatprep.subr.mxu0 0.0
    %2048 = vmatpush1.msra.mxu0 0.0
    %2049 = vmatprep.subr.mxu0 0.0
    %2050 = vmatpush1.msra.mxu0 0.0
    %2051 = vmatprep.subr.mxu0 0.0
    %2052 = vmatpush1.msra.mxu0 0.0
    %2053 = vmatprep.subr.mxu0 0.0
    %2054 = vmatpush1.msra.mxu0 0.0
    %2055 = vmatprep.subr.mxu0 0.0
    %2056 = vmatpush1.msra.mxu0 0.0
    %2057 = vmatprep.subr.mxu0 0.0
    %2058 = vmatpush1.msra.mxu0 0.0
    %2059 = vmatprep.subr.mxu0 0.0
    %2060 = vmatpush1.msra.mxu0 0.0
    %2061 = vmatprep.subr.mxu0 0.0
    %2062 = vmatpush1.msra.mxu0 0.0
    %2063 = vmatprep.subr.mxu0 0.0
    %2064 = vmatpush1.msra.mxu0 0.0
    %2065 = vmatprep.subr.mxu0 0.0
    %2066 = vmatpush1.msra.mxu0 0.0
    %2067 = vmatprep.subr.mxu0 0.0
    %2068 = vmatpush1.msra.mxu0 0.0
    %2069 = vmatprep.subr.mxu0 0.0
    %2070 = vmatpush1.msra.mxu0 0.0
    %2071 = vmatprep.subr.mxu0 0.0
    %2072 = vmatpush1.msra.mxu0 0.0
    %2073 = vmatprep.subr.mxu0 0.0
    %2074 = vmatpush1.msra.mxu0 0.0
    %2075 = vmatprep.subr.mxu0 0.0
    %2076 = vmatpush1.msra.mxu0 0.0
    %2077 = vmatprep.subr.mxu0 0.0
    %2078 = vmatpush1.msra.mxu0 0.0
    %2079 = vmatprep.mubr.f32.mxu0 0.0
    %2080 = vmatmul.mubr.f32.gmra.mrb[0].mxu0 %v2013
    %v2081 = vpop.f32.mrb[0].mxu0
    %v2082 = vadd.f32 0.0, %v2081
    %v2083 = vpop.f32.mrb[0].mxu0
    %2084 = vdwg.mxu0
    %v2085 = vadd.f32 %v1912, %v2082
    %v2086 = vxor.u32 %v2085, 2147483648
    %v2087 = vmul.f32 %v2086, 1.442695
    %v2088 = vpow.pop %v2087
    %v2089 = vadd.f32 %v2088, 1.0
    %v2090 = vrcp.pop %v2089
    %v2091 = vmul.f32 1.0, %v2090
    %v2092 = vtanh.pop %v2085
    %v2093 = vmul.f32 %v2091, %v2003
    %2095 = vrot.lane.b32.xlu0 %v2092, 32
    %v2096 = vpop.permute.xlu0 %2095
    %v2098 = vmul.f32 %v2091, %v2096
    %2100 = vrot.lane.b32.xlu0 %v2098, 32
    %v2101 = vpop.permute.xlu0 %2100
    %v2103 = vadd.f32 %v2093, %v2101
    %v2104 = vtanh.pop %v2103
    %2106 = vrot.lane.b32.xlu0 %v2104, 32
    %v2107 = vpop.permute.xlu0 %2106
    %v2109 = vmul.f32 %v2091, %v2107
    %v2111 = vsel %vm84, %v2012, 0.0
    %v2113 = vsel %vm414, %v2111, 0
    %2115 = vmatprep.subr.mxu0 0.0
    %2116 = vmatpush1.msra.mxu0 %v59
    %2117 = vmatprep.subr.mxu0 0.0
    %2118 = vmatpush1.msra.mxu0 %v60
    %2119 = vmatprep.subr.mxu0 0.0
    %2120 = vmatpush1.msra.mxu0 %v61
    %2121 = vmatprep.subr.mxu0 0.0
    %2122 = vmatpush1.msra.mxu0 %v62
    %2123 = vmatprep.subr.mxu0 0.0
    %2124 = vmatpush1.msra.mxu0 %v63
    %2125 = vmatprep.subr.mxu0 0.0
    %2126 = vmatpush1.msra.mxu0 %v64
    %2127 = vmatprep.subr.mxu0 0.0
    %2128 = vmatpush1.msra.mxu0 %v65
    %2129 = vmatprep.subr.mxu0 0.0
    %2130 = vmatpush1.msra.mxu0 %v66
    %2131 = vmatprep.subr.mxu0 0.0
    %2132 = vmatpush1.msra.mxu0 0.0
    %2133 = vmatprep.subr.mxu0 0.0
    %2134 = vmatpush1.msra.mxu0 0.0
    %2135 = vmatprep.subr.mxu0 0.0
    %2136 = vmatpush1.msra.mxu0 0.0
    %2137 = vmatprep.subr.mxu0 0.0
    %2138 = vmatpush1.msra.mxu0 0.0
    %2139 = vmatprep.subr.mxu0 0.0
    %2140 = vmatpush1.msra.mxu0 0.0
    %2141 = vmatprep.subr.mxu0 0.0
    %2142 = vmatpush1.msra.mxu0 0.0
    %2143 = vmatprep.subr.mxu0 0.0
    %2144 = vmatpush1.msra.mxu0 0.0
    %2145 = vmatprep.subr.mxu0 0.0
    %2146 = vmatpush1.msra.mxu0 0.0
    %2147 = vmatprep.subr.mxu0 0.0
    %2148 = vmatpush1.msra.mxu0 0.0
    %2149 = vmatprep.subr.mxu0 0.0
    %2150 = vmatpush1.msra.mxu0 0.0
    %2151 = vmatprep.subr.mxu0 0.0
    %2152 = vmatpush1.msra.mxu0 0.0
    %2153 = vmatprep.subr.mxu0 0.0
    %2154 = vmatpush1.msra.mxu0 0.0
    %2155 = vmatprep.subr.mxu0 0.0
    %2156 = vmatpush1.msra.mxu0 0.0
    %2157 = vmatprep.subr.mxu0 0.0
    %2158 = vmatpush1.msra.mxu0 0.0
    %2159 = vmatprep.subr.mxu0 0.0
    %2160 = vmatpush1.msra.mxu0 0.0
    %2161 = vmatprep.subr.mxu0 0.0
    %2162 = vmatpush1.msra.mxu0 0.0
    %2163 = vmatprep.subr.mxu0 0.0
    %2164 = vmatpush1.msra.mxu0 0.0
    %2165 = vmatprep.subr.mxu0 0.0
    %2166 = vmatpush1.msra.mxu0 0.0
    %2167 = vmatprep.subr.mxu0 0.0
    %2168 = vmatpush1.msra.mxu0 0.0
    %2169 = vmatprep.subr.mxu0 0.0
    %2170 = vmatpush1.msra.mxu0 0.0
    %2171 = vmatprep.subr.mxu0 0.0
    %2172 = vmatpush1.msra.mxu0 0.0
    %2173 = vmatprep.subr.mxu0 0.0
    %2174 = vmatpush1.msra.mxu0 0.0
    %2175 = vmatprep.subr.mxu0 0.0
    %2176 = vmatpush1.msra.mxu0 0.0
    %2177 = vmatprep.subr.mxu0 0.0
    %2178 = vmatpush1.msra.mxu0 0.0
    %2179 = vmatprep.mubr.f32.mxu0 0.0
    %2180 = vmatmul.mubr.f32.gmra.mrb[0].mxu0 %v2113
    %v2181 = vpop.f32.mrb[0].mxu0
    %v2182 = vadd.f32 %v71, %v2181
    %v2183 = vpop.f32.mrb[0].mxu0
    %2184 = vdwg.mxu0
    %v2185 = vxor.u32 %v2182, 2147483648
    %v2186 = vmul.f32 %v2185, 1.442695
    %v2187 = vpow.pop %v2186
    %v2188 = vadd.f32 %v2187, 1.0
    %v2189 = vrcp.pop %v2188
    %v2190 = vmul.f32 1.0, %v2189
    %v2191 = vtanh.pop %v2182
    %v2192 = vmul.f32 %v2190, 0.0
    %2194 = vrot.lane.b32.xlu0 %v2191, 32
    %v2195 = vpop.permute.xlu0 %2194
    %v2197 = vmul.f32 %v2190, %v2195
    %2199 = vrot.lane.b32.xlu0 %v2197, 32
    %v2200 = vpop.permute.xlu0 %2199
    %v2202 = vadd.f32 %v2192, %v2200
    %v2203 = vtanh.pop %v2202
    %2205 = vrot.lane.b32.xlu0 %v2203, 32
    %v2206 = vpop.permute.xlu0 %2205
    %v2208 = vmul.f32 %v2190, %v2206
    %2210 = vrot.lane.b32.xlu0 %v2109, 64
    %v2211 = vpop.permute.xlu0 %2210
    %v2212 = vsel %vm84, %v2211, 0
    %2214 = vmatprep.subr.mxu0 0.0
    %2215 = vmatpush1.msra.mxu0 %v54
    %2216 = vmatprep.subr.mxu0 0.0
    %2217 = vmatpush1.msra.mxu0 %v55
    %2218 = vmatprep.subr.mxu0 0.0
    %2219 = vmatpush1.msra.mxu0 %v56
    %2220 = vmatprep.subr.mxu0 0.0
    %2221 = vmatpush1.msra.mxu0 %v57
    %2222 = vmatprep.subr.mxu0 0.0
    %2223 = vmatpush1.msra.mxu0 0.0
    %2224 = vmatprep.subr.mxu0 0.0
    %2225 = vmatpush1.msra.mxu0 0.0
    %2226 = vmatprep.subr.mxu0 0.0
    %2227 = vmatpush1.msra.mxu0 0.0
    %2228 = vmatprep.subr.mxu0 0.0
    %2229 = vmatpush1.msra.mxu0 0.0
    %2230 = vmatprep.subr.mxu0 0.0
    %2231 = vmatpush1.msra.mxu0 0.0
    %2232 = vmatprep.subr.mxu0 0.0
    %2233 = vmatpush1.msra.mxu0 0.0
    %2234 = vmatprep.subr.mxu0 0.0
    %2235 = vmatpush1.msra.mxu0 0.0
    %2236 = vmatprep.subr.mxu0 0.0
    %2237 = vmatpush1.msra.mxu0 0.0
    %2238 = vmatprep.subr.mxu0 0.0
    %2239 = vmatpush1.msra.mxu0 0.0
    %2240 = vmatprep.subr.mxu0 0.0
    %2241 = vmatpush1.msra.mxu0 0.0
    %2242 = vmatprep.subr.mxu0 0.0
    %2243 = vmatpush1.msra.mxu0 0.0
    %2244 = vmatprep.subr.mxu0 0.0
    %2245 = vmatpush1.msra.mxu0 0.0
    %2246 = vmatprep.subr.mxu0 0.0
    %2247 = vmatpush1.msra.mxu0 0.0
    %2248 = vmatprep.subr.mxu0 0.0
    %2249 = vmatpush1.msra.mxu0 0.0
    %2250 = vmatprep.subr.mxu0 0.0
    %2251 = vmatpush1.msra.mxu0 0.0
    %2252 = vmatprep.subr.mxu0 0.0
    %2253 = vmatpush1.msra.mxu0 0.0
    %2254 = vmatprep.subr.mxu0 0.0
    %2255 = vmatpush1.msra.mxu0 0.0
    %2256 = vmatprep.subr.mxu0 0.0
    %2257 = vmatpush1.msra.mxu0 0.0
    %2258 = vmatprep.subr.mxu0 0.0
    %2259 = vmatpush1.msra.mxu0 0.0
    %2260 = vmatprep.subr.mxu0 0.0
    %2261 = vmatpush1.msra.mxu0 0.0
    %2262 = vmatprep.subr.mxu0 0.0
    %2263 = vmatpush1.msra.mxu0 0.0
    %2264 = vmatprep.subr.mxu0 0.0
    %2265 = vmatpush1.msra.mxu0 0.0
    %2266 = vmatprep.subr.mxu0 0.0
    %2267 = vmatpush1.msra.mxu0 0.0
    %2268 = vmatprep.subr.mxu0 0.0
    %2269 = vmatpush1.msra.mxu0 0.0
    %2270 = vmatprep.subr.mxu0 0.0
    %2271 = vmatpush1.msra.mxu0 0.0
    %2272 = vmatprep.subr.mxu0 0.0
    %2273 = vmatpush1.msra.mxu0 0.0
    %2274 = vmatprep.subr.mxu0 0.0
    %2275 = vmatpush1.msra.mxu0 0.0
    %2276 = vmatprep.subr.mxu0 0.0
    %2277 = vmatpush1.msra.mxu0 0.0
    %2278 = vmatprep.mubr.f32.mxu0 0.0
    %2279 = vmatmul.mubr.f32.gmra.mrb[0].mxu0 %v2212
    %v2280 = vpop.f32.mrb[0].mxu0
    %v2281 = vadd.f32 0.0, %v2280
    %v2282 = vpop.f32.mrb[0].mxu0
    %2283 = vdwg.mxu0
    %v2284 = vadd.f32 %v1912, %v2281
    %v2285 = vxor.u32 %v2284, 2147483648
    %v2286 = vmul.f32 %v2285, 1.442695
    %v2287 = vpow.pop %v2286
    %v2288 = vadd.f32 %v2287, 1.0
    %v2289 = vrcp.pop %v2288
    %v2290 = vmul.f32 1.0, %v2289
    %v2291 = vtanh.pop %v2284
    %v2292 = vmul.f32 %v2290, %v2103
    %2294 = vrot.lane.b32.xlu0 %v2291, 32
    %v2295 = vpop.permute.xlu0 %2294
    %v2297 = vmul.f32 %v2290, %v2295
    %2299 = vrot.lane.b32.xlu0 %v2297, 32
    %v2300 = vpop.permute.xlu0 %2299
    %v2302 = vadd.f32 %v2292, %v2300
    %v2303 = vtanh.pop %v2302
    %2305 = vrot.lane.b32.xlu0 %v2303, 32
    %v2306 = vpop.permute.xlu0 %2305
    %v2308 = vmul.f32 %v2290, %v2306
    %2311 = vrot.lane.b32.xlu0 %v2208, 96
    %v2312 = vpop.permute.xlu0 %2311
    %v2314 = vsel %vm84, %v2211, %v2312
    %v2316 = vsel %vm414, %v2314, 0
    %2318 = vmatprep.subr.mxu0 0.0
    %2319 = vmatpush1.msra.mxu0 %v59
    %2320 = vmatprep.subr.mxu0 0.0
    %2321 = vmatpush1.msra.mxu0 %v60
    %2322 = vmatprep.subr.mxu0 0.0
    %2323 = vmatpush1.msra.mxu0 %v61
    %2324 = vmatprep.subr.mxu0 0.0
    %2325 = vmatpush1.msra.mxu0 %v62
    %2326 = vmatprep.subr.mxu0 0.0
    %2327 = vmatpush1.msra.mxu0 %v63
    %2328 = vmatprep.subr.mxu0 0.0
    %2329 = vmatpush1.msra.mxu0 %v64
    %2330 = vmatprep.subr.mxu0 0.0
    %2331 = vmatpush1.msra.mxu0 %v65
    %2332 = vmatprep.subr.mxu0 0.0
    %2333 = vmatpush1.msra.mxu0 %v66
    %2334 = vmatprep.subr.mxu0 0.0
    %2335 = vmatpush1.msra.mxu0 0.0
    %2336 = vmatprep.subr.mxu0 0.0
    %2337 = vmatpush1.msra.mxu0 0.0
    %2338 = vmatprep.subr.mxu0 0.0
    %2339 = vmatpush1.msra.mxu0 0.0
    %2340 = vmatprep.subr.mxu0 0.0
    %2341 = vmatpush1.msra.mxu0 0.0
    %2342 = vmatprep.subr.mxu0 0.0
    %2343 = vmatpush1.msra.mxu0 0.0
    %2344 = vmatprep.subr.mxu0 0.0
    %2345 = vmatpush1.msra.mxu0 0.0
    %2346 = vmatprep.subr.mxu0 0.0
    %2347 = vmatpush1.msra.mxu0 0.0
    %2348 = vmatprep.subr.mxu0 0.0
    %2349 = vmatpush1.msra.mxu0 0.0
    %2350 = vmatprep.subr.mxu0 0.0
    %2351 = vmatpush1.msra.mxu0 0.0
    %2352 = vmatprep.subr.mxu0 0.0
    %2353 = vmatpush1.msra.mxu0 0.0
    %2354 = vmatprep.subr.mxu0 0.0
    %2355 = vmatpush1.msra.mxu0 0.0
    %2356 = vmatprep.subr.mxu0 0.0
    %2357 = vmatpush1.msra.mxu0 0.0
    %2358 = vmatprep.subr.mxu0 0.0
    %2359 = vmatpush1.msra.mxu0 0.0
    %2360 = vmatprep.subr.mxu0 0.0
    %2361 = vmatpush1.msra.mxu0 0.0
    %2362 = vmatprep.subr.mxu0 0.0
    %2363 = vmatpush1.msra.mxu0 0.0
    %2364 = vmatprep.subr.mxu0 0.0
    %2365 = vmatpush1.msra.mxu0 0.0
    %2366 = vmatprep.subr.mxu0 0.0
    %2367 = vmatpush1.msra.mxu0 0.0
    %2368 = vmatprep.subr.mxu0 0.0
    %2369 = vmatpush1.msra.mxu0 0.0
    %2370 = vmatprep.subr.mxu0 0.0
    %2371 = vmatpush1.msra.mxu0 0.0
    %2372 = vmatprep.subr.mxu0 0.0
    %2373 = vmatpush1.msra.mxu0 0.0
    %2374 = vmatprep.subr.mxu0 0.0
    %2375 = vmatpush1.msra.mxu0 0.0
    %2376 = vmatprep.subr.mxu0 0.0
    %2377 = vmatpush1.msra.mxu0 0.0
    %2378 = vmatprep.subr.mxu0 0.0
    %2379 = vmatpush1.msra.mxu0 0.0
    %2380 = vmatprep.subr.mxu0 0.0
    %2381 = vmatpush1.msra.mxu0 0.0
    %2382 = vmatprep.mubr.f32.mxu0 0.0
    %2383 = vmatmul.mubr.f32.gmra.mrb[0].mxu0 %v2316
    %v2384 = vpop.f32.mrb[0].mxu0
    %v2385 = vadd.f32 %v71, %v2384
    %v2386 = vpop.f32.mrb[0].mxu0
    %2387 = vdwg.mxu0
    %v2388 = vxor.u32 %v2385, 2147483648
    %v2389 = vmul.f32 %v2388, 1.442695
    %v2390 = vpow.pop %v2389
    %v2391 = vadd.f32 %v2390, 1.0
    %v2392 = vrcp.pop %v2391
    %v2393 = vmul.f32 1.0, %v2392
    %v2394 = vtanh.pop %v2385
    %v2395 = vmul.f32 %v2393, %v2202
    %2397 = vrot.lane.b32.xlu0 %v2394, 32
    %v2398 = vpop.permute.xlu0 %2397
    %v2400 = vmul.f32 %v2393, %v2398
    %2402 = vrot.lane.b32.xlu0 %v2400, 32
    %v2403 = vpop.permute.xlu0 %2402
    %v2405 = vadd.f32 %v2395, %v2403
    %v2406 = vtanh.pop %v2405
    %2408 = vrot.lane.b32.xlu0 %v2406, 32
    %v2409 = vpop.permute.xlu0 %2408
    %v2411 = vmul.f32 %v2393, %v2409
    %2413 = vrot.lane.b32.xlu0 %v2308, 64
    %v2414 = vpop.permute.xlu0 %2413
    %v2415 = vsel %vm84, %v2414, 0
    %2417 = vmatprep.subr.mxu0 0.0
    %2418 = vmatpush1.msra.mxu0 %v54
    %2419 = vmatprep.subr.mxu0 0.0
    %2420 = vmatpush1.msra.mxu0 %v55
    %2421 = vmatprep.subr.mxu0 0.0
    %2422 = vmatpush1.msra.mxu0 %v56
    %2423 = vmatprep.subr.mxu0 0.0
    %2424 = vmatpush1.msra.mxu0 %v57
    %2425 = vmatprep.subr.mxu0 0.0
    %2426 = vmatpush1.msra.mxu0 0.0
    %2427 = vmatprep.subr.mxu0 0.0
    %2428 = vmatpush1.msra.mxu0 0.0
    %2429 = vmatprep.subr.mxu0 0.0
    %2430 = vmatpush1.msra.mxu0 0.0
    %2431 = vmatprep.subr.mxu0 0.0
    %2432 = vmatpush1.msra.mxu0 0.0
    %2433 = vmatprep.subr.mxu0 0.0
    %2434 = vmatpush1.msra.mxu0 0.0
    %2435 = vmatprep.subr.mxu0 0.0
    %2436 = vmatpush1.msra.mxu0 0.0
    %2437 = vmatprep.subr.mxu0 0.0
    %2438 = vmatpush1.msra.mxu0 0.0
    %2439 = vmatprep.subr.mxu0 0.0
    %2440 = vmatpush1.msra.mxu0 0.0
    %2441 = vmatprep.subr.mxu0 0.0
    %2442 = vmatpush1.msra.mxu0 0.0
    %2443 = vmatprep.subr.mxu0 0.0
    %2444 = vmatpush1.msra.mxu0 0.0
    %2445 = vmatprep.subr.mxu0 0.0
    %2446 = vmatpush1.msra.mxu0 0.0
    %2447 = vmatprep.subr.mxu0 0.0
    %2448 = vmatpush1.msra.mxu0 0.0
    %2449 = vmatprep.subr.mxu0 0.0
    %2450 = vmatpush1.msra.mxu0 0.0
    %2451 = vmatprep.subr.mxu0 0.0
    %2452 = vmatpush1.msra.mxu0 0.0
    %2453 = vmatprep.subr.mxu0 0.0
    %2454 = vmatpush1.msra.mxu0 0.0
    %2455 = vmatprep.subr.mxu0 0.0
    %2456 = vmatpush1.msra.mxu0 0.0
    %2457 = vmatprep.subr.mxu0 0.0
    %2458 = vmatpush1.msra.mxu0 0.0
    %2459 = vmatprep.subr.mxu0 0.0
    %2460 = vmatpush1.msra.mxu0 0.0
    %2461 = vmatprep.subr.mxu0 0.0
    %2462 = vmatpush1.msra.mxu0 0.0
    %2463 = vmatprep.subr.mxu0 0.0
    %2464 = vmatpush1.msra.mxu0 0.0
    %2465 = vmatprep.subr.mxu0 0.0
    %2466 = vmatpush1.msra.mxu0 0.0
    %2467 = vmatprep.subr.mxu0 0.0
    %2468 = vmatpush1.msra.mxu0 0.0
    %2469 = vmatprep.subr.mxu0 0.0
    %2470 = vmatpush1.msra.mxu0 0.0
    %2471 = vmatprep.subr.mxu0 0.0
    %2472 = vmatpush1.msra.mxu0 0.0
    %2473 = vmatprep.subr.mxu0 0.0
    %2474 = vmatpush1.msra.mxu0 0.0
    %2475 = vmatprep.subr.mxu0 0.0
    %2476 = vmatpush1.msra.mxu0 0.0
    %2477 = vmatprep.subr.mxu0 0.0
    %2478 = vmatpush1.msra.mxu0 0.0
    %2479 = vmatprep.subr.mxu0 0.0
    %2480 = vmatpush1.msra.mxu0 0.0
    %2481 = vmatprep.mubr.f32.mxu0 0.0
    %2482 = vmatmul.mubr.f32.gmra.mrb[0].mxu0 %v2415
    %v2483 = vpop.f32.mrb[0].mxu0
    %v2484 = vadd.f32 0.0, %v2483
    %v2485 = vpop.f32.mrb[0].mxu0
    %2486 = vdwg.mxu0
    %v2487 = vadd.f32 %v1912, %v2484
    %v2488 = vxor.u32 %v2487, 2147483648
    %v2489 = vmul.f32 %v2488, 1.442695
    %v2490 = vpow.pop %v2489
    %v2491 = vadd.f32 %v2490, 1.0
    %v2492 = vrcp.pop %v2491
    %v2493 = vmul.f32 1.0, %v2492
    %v2494 = vtanh.pop %v2487
    %v2495 = vmul.f32 %v2493, %v2302
    %2497 = vrot.lane.b32.xlu0 %v2494, 32
    %v2498 = vpop.permute.xlu0 %2497
    %v2500 = vmul.f32 %v2493, %v2498
    %2502 = vrot.lane.b32.xlu0 %v2500, 32
    %v2503 = vpop.permute.xlu0 %2502
    %v2505 = vadd.f32 %v2495, %v2503
    %v2506 = vtanh.pop %v2505
    %2508 = vrot.lane.b32.xlu0 %v2506, 32
    %v2509 = vpop.permute.xlu0 %2508
    %v2511 = vmul.f32 %v2493, %v2509
    %2514 = vrot.lane.b32.xlu0 %v2411, 96
    %v2515 = vpop.permute.xlu0 %2514
    %v2517 = vsel %vm84, %v2414, %v2515
    %v2519 = vsel %vm414, %v2517, 0
    %2521 = vmatprep.subr.mxu0 0.0
    %2522 = vmatpush1.msra.mxu0 %v59
    %2523 = vmatprep.subr.mxu0 0.0
    %2524 = vmatpush1.msra.mxu0 %v60
    %2525 = vmatprep.subr.mxu0 0.0
    %2526 = vmatpush1.msra.mxu0 %v61
    %2527 = vmatprep.subr.mxu0 0.0
    %2528 = vmatpush1.msra.mxu0 %v62
    %2529 = vmatprep.subr.mxu0 0.0
    %2530 = vmatpush1.msra.mxu0 %v63
    %2531 = vmatprep.subr.mxu0 0.0
    %2532 = vmatpush1.msra.mxu0 %v64
    %2533 = vmatprep.subr.mxu0 0.0
    %2534 = vmatpush1.msra.mxu0 %v65
    %2535 = vmatprep.subr.mxu0 0.0
    %2536 = vmatpush1.msra.mxu0 %v66
    %2537 = vmatprep.subr.mxu0 0.0
    %2538 = vmatpush1.msra.mxu0 0.0
    %2539 = vmatprep.subr.mxu0 0.0
    %2540 = vmatpush1.msra.mxu0 0.0
    %2541 = vmatprep.subr.mxu0 0.0
    %2542 = vmatpush1.msra.mxu0 0.0
    %2543 = vmatprep.subr.mxu0 0.0
    %2544 = vmatpush1.msra.mxu0 0.0
    %2545 = vmatprep.subr.mxu0 0.0
    %2546 = vmatpush1.msra.mxu0 0.0
    %2547 = vmatprep.subr.mxu0 0.0
    %2548 = vmatpush1.msra.mxu0 0.0
    %2549 = vmatprep.subr.mxu0 0.0
    %2550 = vmatpush1.msra.mxu0 0.0
    %2551 = vmatprep.subr.mxu0 0.0
    %2552 = vmatpush1.msra.mxu0 0.0
    %2553 = vmatprep.subr.mxu0 0.0
    %2554 = vmatpush1.msra.mxu0 0.0
    %2555 = vmatprep.subr.mxu0 0.0
    %2556 = vmatpush1.msra.mxu0 0.0
    %2557 = vmatprep.subr.mxu0 0.0
    %2558 = vmatpush1.msra.mxu0 0.0
    %2559 = vmatprep.subr.mxu0 0.0
    %2560 = vmatpush1.msra.mxu0 0.0
    %2561 = vmatprep.subr.mxu0 0.0
    %2562 = vmatpush1.msra.mxu0 0.0
    %2563 = vmatprep.subr.mxu0 0.0
    %2564 = vmatpush1.msra.mxu0 0.0
    %2565 = vmatprep.subr.mxu0 0.0
    %2566 = vmatpush1.msra.mxu0 0.0
    %2567 = vmatprep.subr.mxu0 0.0
    %2568 = vmatpush1.msra.mxu0 0.0
    %2569 = vmatprep.subr.mxu0 0.0
    %2570 = vmatpush1.msra.mxu0 0.0
    %2571 = vmatprep.subr.mxu0 0.0
    %2572 = vmatpush1.msra.mxu0 0.0
    %2573 = vmatprep.subr.mxu0 0.0
    %2574 = vmatpush1.msra.mxu0 0.0
    %2575 = vmatprep.subr.mxu0 0.0
    %2576 = vmatpush1.msra.mxu0 0.0
    %2577 = vmatprep.subr.mxu0 0.0
    %2578 = vmatpush1.msra.mxu0 0.0
    %2579 = vmatprep.subr.mxu0 0.0
    %2580 = vmatpush1.msra.mxu0 0.0
    %2581 = vmatprep.subr.mxu0 0.0
    %2582 = vmatpush1.msra.mxu0 0.0
    %2583 = vmatprep.subr.mxu0 0.0
    %2584 = vmatpush1.msra.mxu0 0.0
    %2585 = vmatprep.mubr.f32.mxu0 0.0
    %2586 = vmatmul.mubr.f32.gmra.mrb[0].mxu0 %v2519
    %v2587 = vpop.f32.mrb[0].mxu0
    %v2588 = vadd.f32 %v71, %v2587
    %v2589 = vpop.f32.mrb[0].mxu0
    %2590 = vdwg.mxu0
    %v2591 = vxor.u32 %v2588, 2147483648
    %v2592 = vmul.f32 %v2591, 1.442695
    %v2593 = vpow.pop %v2592
    %v2594 = vadd.f32 %v2593, 1.0
    %v2595 = vrcp.pop %v2594
    %v2596 = vmul.f32 1.0, %v2595
    %v2597 = vtanh.pop %v2588
    %v2598 = vmul.f32 %v2596, %v2405
    %2600 = vrot.lane.b32.xlu0 %v2597, 32
    %v2601 = vpop.permute.xlu0 %2600
    %v2603 = vmul.f32 %v2596, %v2601
    %2605 = vrot.lane.b32.xlu0 %v2603, 32
    %v2606 = vpop.permute.xlu0 %2605
    %v2608 = vadd.f32 %v2598, %v2606
    %v2609 = vtanh.pop %v2608
    %2611 = vrot.lane.b32.xlu0 %v2609, 32
    %v2612 = vpop.permute.xlu0 %2611
    %v2614 = vmul.f32 %v2596, %v2612
    %2616 = vrot.lane.b32.xlu0 %v2511, 64
    %v2617 = vpop.permute.xlu0 %2616
    %v2618 = vsel %vm84, %v2617, 0
    %2620 = vmatprep.subr.mxu0 0.0
    %2621 = vmatpush1.msra.mxu0 %v54
    %2622 = vmatprep.subr.mxu0 0.0
    %2623 = vmatpush1.msra.mxu0 %v55
    %2624 = vmatprep.subr.mxu0 0.0
    %2625 = vmatpush1.msra.mxu0 %v56
    %2626 = vmatprep.subr.mxu0 0.0
    %2627 = vmatpush1.msra.mxu0 %v57
    %2628 = vmatprep.subr.mxu0 0.0
    %2629 = vmatpush1.msra.mxu0 0.0
    %2630 = vmatprep.subr.mxu0 0.0
    %2631 = vmatpush1.msra.mxu0 0.0
    %2632 = vmatprep.subr.mxu0 0.0
    %2633 = vmatpush1.msra.mxu0 0.0
    %2634 = vmatprep.subr.mxu0 0.0
    %2635 = vmatpush1.msra.mxu0 0.0
    %2636 = vmatprep.subr.mxu0 0.0
    %2637 = vmatpush1.msra.mxu0 0.0
    %2638 = vmatprep.subr.mxu0 0.0
    %2639 = vmatpush1.msra.mxu0 0.0
    %2640 = vmatprep.subr.mxu0 0.0
    %2641 = vmatpush1.msra.mxu0 0.0
    %2642 = vmatprep.subr.mxu0 0.0
    %2643 = vmatpush1.msra.mxu0 0.0
    %2644 = vmatprep.subr.mxu0 0.0
    %2645 = vmatpush1.msra.mxu0 0.0
    %2646 = vmatprep.subr.mxu0 0.0
    %2647 = vmatpush1.msra.mxu0 0.0
    %2648 = vmatprep.subr.mxu0 0.0
    %2649 = vmatpush1.msra.mxu0 0.0
    %2650 = vmatprep.subr.mxu0 0.0
    %2651 = vmatpush1.msra.mxu0 0.0
    %2652 = vmatprep.subr.mxu0 0.0
    %2653 = vmatpush1.msra.mxu0 0.0
    %2654 = vmatprep.subr.mxu0 0.0
    %2655 = vmatpush1.msra.mxu0 0.0
    %2656 = vmatprep.subr.mxu0 0.0
    %2657 = vmatpush1.msra.mxu0 0.0
    %2658 = vmatprep.subr.mxu0 0.0
    %2659 = vmatpush1.msra.mxu0 0.0
    %2660 = vmatprep.subr.mxu0 0.0
    %2661 = vmatpush1.msra.mxu0 0.0
    %2662 = vmatprep.subr.mxu0 0.0
    %2663 = vmatpush1.msra.mxu0 0.0
    %2664 = vmatprep.subr.mxu0 0.0
    %2665 = vmatpush1.msra.mxu0 0.0
    %2666 = vmatprep.subr.mxu0 0.0
    %2667 = vmatpush1.msra.mxu0 0.0
    %2668 = vmatprep.subr.mxu0 0.0
    %2669 = vmatpush1.msra.mxu0 0.0
    %2670 = vmatprep.subr.mxu0 0.0
    %2671 = vmatpush1.msra.mxu0 0.0
    %2672 = vmatprep.subr.mxu0 0.0
    %2673 = vmatpush1.msra.mxu0 0.0
    %2674 = vmatprep.subr.mxu0 0.0
    %2675 = vmatpush1.msra.mxu0 0.0
    %2676 = vmatprep.subr.mxu0 0.0
    %2677 = vmatpush1.msra.mxu0 0.0
    %2678 = vmatprep.subr.mxu0 0.0
    %2679 = vmatpush1.msra.mxu0 0.0
    %2680 = vmatprep.subr.mxu0 0.0
    %2681 = vmatpush1.msra.mxu0 0.0
    %2682 = vmatprep.subr.mxu0 0.0
    %2683 = vmatpush1.msra.mxu0 0.0
    %2684 = vmatprep.mubr.f32.mxu0 0.0
    %2685 = vmatmul.mubr.f32.gmra.mrb[0].mxu0 %v2618
    %v2686 = vpop.f32.mrb[0].mxu0
    %v2687 = vadd.f32 0.0, %v2686
    %v2688 = vpop.f32.mrb[0].mxu0
    %2689 = vdwg.mxu0
    %v2690 = vadd.f32 %v1912, %v2687
    %v2691 = vxor.u32 %v2690, 2147483648
    %v2692 = vmul.f32 %v2691, 1.442695
    %v2693 = vpow.pop %v2692
    %v2694 = vadd.f32 %v2693, 1.0
    %v2695 = vrcp.pop %v2694
    %v2696 = vmul.f32 1.0, %v2695
    %v2697 = vtanh.pop %v2690
    %v2698 = vmul.f32 %v2696, %v2505
    %2700 = vrot.lane.b32.xlu0 %v2697, 32
    %v2701 = vpop.permute.xlu0 %2700
    %v2703 = vmul.f32 %v2696, %v2701
    %2705 = vrot.lane.b32.xlu0 %v2703, 32
    %v2706 = vpop.permute.xlu0 %2705
    %v2708 = vadd.f32 %v2698, %v2706
    %v2709 = vtanh.pop %v2708
    %2711 = vrot.lane.b32.xlu0 %v2709, 32
    %v2712 = vpop.permute.xlu0 %2711
    %v2714 = vmul.f32 %v2696, %v2712
    %2717 = vrot.lane.b32.xlu0 %v2614, 96
    %v2718 = vpop.permute.xlu0 %2717
    %v2720 = vsel %vm84, %v2617, %v2718
    %v2722 = vsel %vm414, %v2720, 0
    %2724 = vmatprep.subr.mxu0 0.0
    %2725 = vmatpush1.msra.mxu0 %v59
    %2726 = vmatprep.subr.mxu0 0.0
    %2727 = vmatpush1.msra.mxu0 %v60
    %2728 = vmatprep.subr.mxu0 0.0
    %2729 = vmatpush1.msra.mxu0 %v61
    %2730 = vmatprep.subr.mxu0 0.0
    %2731 = vmatpush1.msra.mxu0 %v62
    %2732 = vmatprep.subr.mxu0 0.0
    %2733 = vmatpush1.msra.mxu0 %v63
    %2734 = vmatprep.subr.mxu0 0.0
    %2735 = vmatpush1.msra.mxu0 %v64
    %2736 = vmatprep.subr.mxu0 0.0
    %2737 = vmatpush1.msra.mxu0 %v65
    %2738 = vmatprep.subr.mxu0 0.0
    %2739 = vmatpush1.msra.mxu0 %v66
    %2740 = vmatprep.subr.mxu0 0.0
    %2741 = vmatpush1.msra.mxu0 0.0
    %2742 = vmatprep.subr.mxu0 0.0
    %2743 = vmatpush1.msra.mxu0 0.0
    %2744 = vmatprep.subr.mxu0 0.0
    %2745 = vmatpush1.msra.mxu0 0.0
    %2746 = vmatprep.subr.mxu0 0.0
    %2747 = vmatpush1.msra.mxu0 0.0
    %2748 = vmatprep.subr.mxu0 0.0
    %2749 = vmatpush1.msra.mxu0 0.0
    %2750 = vmatprep.subr.mxu0 0.0
    %2751 = vmatpush1.msra.mxu0 0.0
    %2752 = vmatprep.subr.mxu0 0.0
    %2753 = vmatpush1.msra.mxu0 0.0
    %2754 = vmatprep.subr.mxu0 0.0
    %2755 = vmatpush1.msra.mxu0 0.0
    %2756 = vmatprep.subr.mxu0 0.0
    %2757 = vmatpush1.msra.mxu0 0.0
    %2758 = vmatprep.subr.mxu0 0.0
    %2759 = vmatpush1.msra.mxu0 0.0
    %2760 = vmatprep.subr.mxu0 0.0
    %2761 = vmatpush1.msra.mxu0 0.0
    %2762 = vmatprep.subr.mxu0 0.0
    %2763 = vmatpush1.msra.mxu0 0.0
    %2764 = vmatprep.subr.mxu0 0.0
    %2765 = vmatpush1.msra.mxu0 0.0
    %2766 = vmatprep.subr.mxu0 0.0
    %2767 = vmatpush1.msra.mxu0 0.0
    %2768 = vmatprep.subr.mxu0 0.0
    %2769 = vmatpush1.msra.mxu0 0.0
    %2770 = vmatprep.subr.mxu0 0.0
    %2771 = vmatpush1.msra.mxu0 0.0
    %2772 = vmatprep.subr.mxu0 0.0
    %2773 = vmatpush1.msra.mxu0 0.0
    %2774 = vmatprep.subr.mxu0 0.0
    %2775 = vmatpush1.msra.mxu0 0.0
    %2776 = vmatprep.subr.mxu0 0.0
    %2777 = vmatpush1.msra.mxu0 0.0
    %2778 = vmatprep.subr.mxu0 0.0
    %2779 = vmatpush1.msra.mxu0 0.0
    %2780 = vmatprep.subr.mxu0 0.0
    %2781 = vmatpush1.msra.mxu0 0.0
    %2782 = vmatprep.subr.mxu0 0.0
    %2783 = vmatpush1.msra.mxu0 0.0
    %2784 = vmatprep.subr.mxu0 0.0
    %2785 = vmatpush1.msra.mxu0 0.0
    %2786 = vmatprep.subr.mxu0 0.0
    %2787 = vmatpush1.msra.mxu0 0.0
    %2788 = vmatprep.mubr.f32.mxu0 0.0
    %2789 = vmatmul.mubr.f32.gmra.mrb[0].mxu0 %v2722
    %v2790 = vpop.f32.mrb[0].mxu0
    %v2791 = vadd.f32 %v71, %v2790
    %v2792 = vpop.f32.mrb[0].mxu0
    %2793 = vdwg.mxu0
    %v2794 = vxor.u32 %v2791, 2147483648
    %v2795 = vmul.f32 %v2794, 1.442695
    %v2796 = vpow.pop %v2795
    %v2797 = vadd.f32 %v2796, 1.0
    %v2798 = vrcp.pop %v2797
    %v2799 = vmul.f32 1.0, %v2798
    %v2800 = vtanh.pop %v2791
    %v2801 = vmul.f32 %v2799, %v2608
    %2803 = vrot.lane.b32.xlu0 %v2800, 32
    %v2804 = vpop.permute.xlu0 %2803
    %v2806 = vmul.f32 %v2799, %v2804
    %2808 = vrot.lane.b32.xlu0 %v2806, 32
    %v2809 = vpop.permute.xlu0 %2808
    %v2811 = vadd.f32 %v2801, %v2809
    %v2812 = vtanh.pop %v2811
    %2814 = vrot.lane.b32.xlu0 %v2812, 32
    %v2815 = vpop.permute.xlu0 %2814
    %v2817 = vmul.f32 %v2799, %v2815
    %2819 = vrot.lane.b32.xlu0 %v2714, 64
    %v2820 = vpop.permute.xlu0 %2819
    %v2821 = vsel %vm84, %v2820, 0
    %2823 = vmatprep.subr.mxu0 0.0
    %2824 = vmatpush1.msra.mxu0 %v54
    %2825 = vmatprep.subr.mxu0 0.0
    %2826 = vmatpush1.msra.mxu0 %v55
    %2827 = vmatprep.subr.mxu0 0.0
    %2828 = vmatpush1.msra.mxu0 %v56
    %2829 = vmatprep.subr.mxu0 0.0
    %2830 = vmatpush1.msra.mxu0 %v57
    %2831 = vmatprep.subr.mxu0 0.0
    %2832 = vmatpush1.msra.mxu0 0.0
    %2833 = vmatprep.subr.mxu0 0.0
    %2834 = vmatpush1.msra.mxu0 0.0
    %2835 = vmatprep.subr.mxu0 0.0
    %2836 = vmatpush1.msra.mxu0 0.0
    %2837 = vmatprep.subr.mxu0 0.0
    %2838 = vmatpush1.msra.mxu0 0.0
    %2839 = vmatprep.subr.mxu0 0.0
    %2840 = vmatpush1.msra.mxu0 0.0
    %2841 = vmatprep.subr.mxu0 0.0
    %2842 = vmatpush1.msra.mxu0 0.0
    %2843 = vmatprep.subr.mxu0 0.0
    %2844 = vmatpush1.msra.mxu0 0.0
    %2845 = vmatprep.subr.mxu0 0.0
    %2846 = vmatpush1.msra.mxu0 0.0
    %2847 = vmatprep.subr.mxu0 0.0
    %2848 = vmatpush1.msra.mxu0 0.0
    %2849 = vmatprep.subr.mxu0 0.0
    %2850 = vmatpush1.msra.mxu0 0.0
    %2851 = vmatprep.subr.mxu0 0.0
    %2852 = vmatpush1.msra.mxu0 0.0
    %2853 = vmatprep.subr.mxu0 0.0
    %2854 = vmatpush1.msra.mxu0 0.0
    %2855 = vmatprep.subr.mxu0 0.0
    %2856 = vmatpush1.msra.mxu0 0.0
    %2857 = vmatprep.subr.mxu0 0.0
    %2858 = vmatpush1.msra.mxu0 0.0
    %2859 = vmatprep.subr.mxu0 0.0
    %2860 = vmatpush1.msra.mxu0 0.0
    %2861 = vmatprep.subr.mxu0 0.0
    %2862 = vmatpush1.msra.mxu0 0.0
    %2863 = vmatprep.subr.mxu0 0.0
    %2864 = vmatpush1.msra.mxu0 0.0
    %2865 = vmatprep.subr.mxu0 0.0
    %2866 = vmatpush1.msra.mxu0 0.0
    %2867 = vmatprep.subr.mxu0 0.0
    %2868 = vmatpush1.msra.mxu0 0.0
    %2869 = vmatprep.subr.mxu0 0.0
    %2870 = vmatpush1.msra.mxu0 0.0
    %2871 = vmatprep.subr.mxu0 0.0
    %2872 = vmatpush1.msra.mxu0 0.0
    %2873 = vmatprep.subr.mxu0 0.0
    %2874 = vmatpush1.msra.mxu0 0.0
    %2875 = vmatprep.subr.mxu0 0.0
    %2876 = vmatpush1.msra.mxu0 0.0
    %2877 = vmatprep.subr.mxu0 0.0
    %2878 = vmatpush1.msra.mxu0 0.0
    %2879 = vmatprep.subr.mxu0 0.0
    %2880 = vmatpush1.msra.mxu0 0.0
    %2881 = vmatprep.subr.mxu0 0.0
    %2882 = vmatpush1.msra.mxu0 0.0
    %2883 = vmatprep.subr.mxu0 0.0
    %2884 = vmatpush1.msra.mxu0 0.0
    %2885 = vmatprep.subr.mxu0 0.0
    %2886 = vmatpush1.msra.mxu0 0.0
    %2887 = vmatprep.mubr.f32.mxu0 0.0
    %2888 = vmatmul.mubr.f32.gmra.mrb[0].mxu0 %v2821
    %v2889 = vpop.f32.mrb[0].mxu0
    %v2890 = vadd.f32 0.0, %v2889
    %v2891 = vpop.f32.mrb[0].mxu0
    %2892 = vdwg.mxu0
    %v2893 = vadd.f32 %v1912, %v2890
    %v2894 = vxor.u32 %v2893, 2147483648
    %v2895 = vmul.f32 %v2894, 1.442695
    %v2896 = vpow.pop %v2895
    %v2897 = vadd.f32 %v2896, 1.0
    %v2898 = vrcp.pop %v2897
    %v2899 = vmul.f32 1.0, %v2898
    %v2900 = vtanh.pop %v2893
    %v2901 = vmul.f32 %v2899, %v2708
    %2903 = vrot.lane.b32.xlu0 %v2900, 32
    %v2904 = vpop.permute.xlu0 %2903
    %v2906 = vmul.f32 %v2899, %v2904
    %2908 = vrot.lane.b32.xlu0 %v2906, 32
    %v2909 = vpop.permute.xlu0 %2908
    %v2911 = vadd.f32 %v2901, %v2909
    %v2912 = vtanh.pop %v2911
    %2914 = vrot.lane.b32.xlu0 %v2912, 32
    %v2915 = vpop.permute.xlu0 %2914
    %v2917 = vmul.f32 %v2899, %v2915
    %2920 = vrot.lane.b32.xlu0 %v2817, 96
    %v2921 = vpop.permute.xlu0 %2920
    %v2923 = vsel %vm84, %v2820, %v2921
    %v2925 = vsel %vm414, %v2923, 0
    %2927 = vmatprep.subr.mxu0 0.0
    %2928 = vmatpush1.msra.mxu0 %v59
    %2929 = vmatprep.subr.mxu0 0.0
    %2930 = vmatpush1.msra.mxu0 %v60
    %2931 = vmatprep.subr.mxu0 0.0
    %2932 = vmatpush1.msra.mxu0 %v61
    %2933 = vmatprep.subr.mxu0 0.0
    %2934 = vmatpush1.msra.mxu0 %v62
    %2935 = vmatprep.subr.mxu0 0.0
    %2936 = vmatpush1.msra.mxu0 %v63
    %2937 = vmatprep.subr.mxu0 0.0
    %2938 = vmatpush1.msra.mxu0 %v64
    %2939 = vmatprep.subr.mxu0 0.0
    %2940 = vmatpush1.msra.mxu0 %v65
    %2941 = vmatprep.subr.mxu0 0.0
    %2942 = vmatpush1.msra.mxu0 %v66
    %2943 = vmatprep.subr.mxu0 0.0
    %2944 = vmatpush1.msra.mxu0 0.0
    %2945 = vmatprep.subr.mxu0 0.0
    %2946 = vmatpush1.msra.mxu0 0.0
    %2947 = vmatprep.subr.mxu0 0.0
    %2948 = vmatpush1.msra.mxu0 0.0
    %2949 = vmatprep.subr.mxu0 0.0
    %2950 = vmatpush1.msra.mxu0 0.0
    %2951 = vmatprep.subr.mxu0 0.0
    %2952 = vmatpush1.msra.mxu0 0.0
    %2953 = vmatprep.subr.mxu0 0.0
    %2954 = vmatpush1.msra.mxu0 0.0
    %2955 = vmatprep.subr.mxu0 0.0
    %2956 = vmatpush1.msra.mxu0 0.0
    %2957 = vmatprep.subr.mxu0 0.0
    %2958 = vmatpush1.msra.mxu0 0.0
    %2959 = vmatprep.subr.mxu0 0.0
    %2960 = vmatpush1.msra.mxu0 0.0
    %2961 = vmatprep.subr.mxu0 0.0
    %2962 = vmatpush1.msra.mxu0 0.0
    %2963 = vmatprep.subr.mxu0 0.0
    %2964 = vmatpush1.msra.mxu0 0.0
    %2965 = vmatprep.subr.mxu0 0.0
    %2966 = vmatpush1.msra.mxu0 0.0
    %2967 = vmatprep.subr.mxu0 0.0
    %2968 = vmatpush1.msra.mxu0 0.0
    %2969 = vmatprep.subr.mxu0 0.0
    %2970 = vmatpush1.msra.mxu0 0.0
    %2971 = vmatprep.subr.mxu0 0.0
    %2972 = vmatpush1.msra.mxu0 0.0
    %2973 = vmatprep.subr.mxu0 0.0
    %2974 = vmatpush1.msra.mxu0 0.0
    %2975 = vmatprep.subr.mxu0 0.0
    %2976 = vmatpush1.msra.mxu0 0.0
    %2977 = vmatprep.subr.mxu0 0.0
    %2978 = vmatpush1.msra.mxu0 0.0
    %2979 = vmatprep.subr.mxu0 0.0
    %2980 = vmatpush1.msra.mxu0 0.0
    %2981 = vmatprep.subr.mxu0 0.0
    %2982 = vmatpush1.msra.mxu0 0.0
    %2983 = vmatprep.subr.mxu0 0.0
    %2984 = vmatpush1.msra.mxu0 0.0
    %2985 = vmatprep.subr.mxu0 0.0
    %2986 = vmatpush1.msra.mxu0 0.0
    %2987 = vmatprep.subr.mxu0 0.0
    %2988 = vmatpush1.msra.mxu0 0.0
    %2989 = vmatprep.subr.mxu0 0.0
    %2990 = vmatpush1.msra.mxu0 0.0
    %2991 = vmatprep.mubr.f32.mxu0 0.0
    %2992 = vmatmul.mubr.f32.gmra.mrb[0].mxu0 %v2925
    %v2993 = vpop.f32.mrb[0].mxu0
    %v2994 = vadd.f32 %v71, %v2993
    %v2995 = vpop.f32.mrb[0].mxu0
    %2996 = vdwg.mxu0
    %v2997 = vxor.u32 %v2994, 2147483648
    %v2998 = vmul.f32 %v2997, 1.442695
    %v2999 = vpow.pop %v2998
    %v3000 = vadd.f32 %v2999, 1.0
    %v3001 = vrcp.pop %v3000
    %v3002 = vmul.f32 1.0, %v3001
    %v3003 = vtanh.pop %v2994
    %v3004 = vmul.f32 %v3002, %v2811
    %3006 = vrot.lane.b32.xlu0 %v3003, 32
    %v3007 = vpop.permute.xlu0 %3006
    %v3009 = vmul.f32 %v3002, %v3007
    %3011 = vrot.lane.b32.xlu0 %v3009, 32
    %v3012 = vpop.permute.xlu0 %3011
    %v3014 = vadd.f32 %v3004, %v3012
    %v3015 = vtanh.pop %v3014
    %3017 = vrot.lane.b32.xlu0 %v3015, 32
    %v3018 = vpop.permute.xlu0 %3017
    %v3020 = vmul.f32 %v3002, %v3018
    %3022 = vrot.lane.b32.xlu0 %v2917, 64
    %v3023 = vpop.permute.xlu0 %3022
    %v3024 = vsel %vm84, %v3023, 0
    %3026 = vmatprep.subr.mxu0 0.0
    %3027 = vmatpush1.msra.mxu0 %v54
    %3028 = vmatprep.subr.mxu0 0.0
    %3029 = vmatpush1.msra.mxu0 %v55
    %3030 = vmatprep.subr.mxu0 0.0
    %3031 = vmatpush1.msra.mxu0 %v56
    %3032 = vmatprep.subr.mxu0 0.0
    %3033 = vmatpush1.msra.mxu0 %v57
    %3034 = vmatprep.subr.mxu0 0.0
    %3035 = vmatpush1.msra.mxu0 0.0
    %3036 = vmatprep.subr.mxu0 0.0
    %3037 = vmatpush1.msra.mxu0 0.0
    %3038 = vmatprep.subr.mxu0 0.0
    %3039 = vmatpush1.msra.mxu0 0.0
    %3040 = vmatprep.subr.mxu0 0.0
    %3041 = vmatpush1.msra.mxu0 0.0
    %3042 = vmatprep.subr.mxu0 0.0
    %3043 = vmatpush1.msra.mxu0 0.0
    %3044 = vmatprep.subr.mxu0 0.0
    %3045 = vmatpush1.msra.mxu0 0.0
    %3046 = vmatprep.subr.mxu0 0.0
    %3047 = vmatpush1.msra.mxu0 0.0
    %3048 = vmatprep.subr.mxu0 0.0
    %3049 = vmatpush1.msra.mxu0 0.0
    %3050 = vmatprep.subr.mxu0 0.0
    %3051 = vmatpush1.msra.mxu0 0.0
    %3052 = vmatprep.subr.mxu0 0.0
    %3053 = vmatpush1.msra.mxu0 0.0
    %3054 = vmatprep.subr.mxu0 0.0
    %3055 = vmatpush1.msra.mxu0 0.0
    %3056 = vmatprep.subr.mxu0 0.0
    %3057 = vmatpush1.msra.mxu0 0.0
    %3058 = vmatprep.subr.mxu0 0.0
    %3059 = vmatpush1.msra.mxu0 0.0
    %3060 = vmatprep.subr.mxu0 0.0
    %3061 = vmatpush1.msra.mxu0 0.0
    %3062 = vmatprep.subr.mxu0 0.0
    %3063 = vmatpush1.msra.mxu0 0.0
    %3064 = vmatprep.subr.mxu0 0.0
    %3065 = vmatpush1.msra.mxu0 0.0
    %3066 = vmatprep.subr.mxu0 0.0
    %3067 = vmatpush1.msra.mxu0 0.0
    %3068 = vmatprep.subr.mxu0 0.0
    %3069 = vmatpush1.msra.mxu0 0.0
    %3070 = vmatprep.subr.mxu0 0.0
    %3071 = vmatpush1.msra.mxu0 0.0
    %3072 = vmatprep.subr.mxu0 0.0
    %3073 = vmatpush1.msra.mxu0 0.0
    %3074 = vmatprep.subr.mxu0 0.0
    %3075 = vmatpush1.msra.mxu0 0.0
    %3076 = vmatprep.subr.mxu0 0.0
    %3077 = vmatpush1.msra.mxu0 0.0
    %3078 = vmatprep.subr.mxu0 0.0
    %3079 = vmatpush1.msra.mxu0 0.0
    %3080 = vmatprep.subr.mxu0 0.0
    %3081 = vmatpush1.msra.mxu0 0.0
    %3082 = vmatprep.subr.mxu0 0.0
    %3083 = vmatpush1.msra.mxu0 0.0
    %3084 = vmatprep.subr.mxu0 0.0
    %3085 = vmatpush1.msra.mxu0 0.0
    %3086 = vmatprep.subr.mxu0 0.0
    %3087 = vmatpush1.msra.mxu0 0.0
    %3088 = vmatprep.subr.mxu0 0.0
    %3089 = vmatpush1.msra.mxu0 0.0
    %3090 = vmatprep.mubr.f32.mxu0 0.0
    %3091 = vmatmul.mubr.f32.gmra.mrb[0].mxu0 %v3024
    %v3092 = vpop.f32.mrb[0].mxu0
    %v3093 = vadd.f32 0.0, %v3092
    %v3094 = vpop.f32.mrb[0].mxu0
    %3095 = vdwg.mxu0
    %v3096 = vadd.f32 %v1912, %v3093
    %v3097 = vxor.u32 %v3096, 2147483648
    %v3098 = vmul.f32 %v3097, 1.442695
    %v3099 = vpow.pop %v3098
    %v3100 = vadd.f32 %v3099, 1.0
    %v3101 = vrcp.pop %v3100
    %v3102 = vmul.f32 1.0, %v3101
    %v3103 = vtanh.pop %v3096
    %v3104 = vmul.f32 %v3102, %v2911
    %3106 = vrot.lane.b32.xlu0 %v3103, 32
    %v3107 = vpop.permute.xlu0 %3106
    %v3109 = vmul.f32 %v3102, %v3107
    %3111 = vrot.lane.b32.xlu0 %v3109, 32
    %v3112 = vpop.permute.xlu0 %3111
    %v3114 = vadd.f32 %v3104, %v3112
    %v3115 = vtanh.pop %v3114
    %3117 = vrot.lane.b32.xlu0 %v3115, 32
    %v3118 = vpop.permute.xlu0 %3117
    %v3120 = vmul.f32 %v3102, %v3118
    %3123 = vrot.lane.b32.xlu0 %v3020, 96
    %v3124 = vpop.permute.xlu0 %3123
    %v3126 = vsel %vm84, %v3023, %v3124
    %v3128 = vsel %vm414, %v3126, 0
    %3130 = vmatprep.subr.mxu0 0.0
    %3131 = vmatpush1.msra.mxu0 %v59
    %3132 = vmatprep.subr.mxu0 0.0
    %3133 = vmatpush1.msra.mxu0 %v60
    %3134 = vmatprep.subr.mxu0 0.0
    %3135 = vmatpush1.msra.mxu0 %v61
    %3136 = vmatprep.subr.mxu0 0.0
    %3137 = vmatpush1.msra.mxu0 %v62
    %3138 = vmatprep.subr.mxu0 0.0
    %3139 = vmatpush1.msra.mxu0 %v63
    %3140 = vmatprep.subr.mxu0 0.0
    %3141 = vmatpush1.msra.mxu0 %v64
    %3142 = vmatprep.subr.mxu0 0.0
    %3143 = vmatpush1.msra.mxu0 %v65
    %3144 = vmatprep.subr.mxu0 0.0
    %3145 = vmatpush1.msra.mxu0 %v66
    %3146 = vmatprep.subr.mxu0 0.0
    %3147 = vmatpush1.msra.mxu0 0.0
    %3148 = vmatprep.subr.mxu0 0.0
    %3149 = vmatpush1.msra.mxu0 0.0
    %3150 = vmatprep.subr.mxu0 0.0
    %3151 = vmatpush1.msra.mxu0 0.0
    %3152 = vmatprep.subr.mxu0 0.0
    %3153 = vmatpush1.msra.mxu0 0.0
    %3154 = vmatprep.subr.mxu0 0.0
    %3155 = vmatpush1.msra.mxu0 0.0
    %3156 = vmatprep.subr.mxu0 0.0
    %3157 = vmatpush1.msra.mxu0 0.0
    %3158 = vmatprep.subr.mxu0 0.0
    %3159 = vmatpush1.msra.mxu0 0.0
    %3160 = vmatprep.subr.mxu0 0.0
    %3161 = vmatpush1.msra.mxu0 0.0
    %3162 = vmatprep.subr.mxu0 0.0
    %3163 = vmatpush1.msra.mxu0 0.0
    %3164 = vmatprep.subr.mxu0 0.0
    %3165 = vmatpush1.msra.mxu0 0.0
    %3166 = vmatprep.subr.mxu0 0.0
    %3167 = vmatpush1.msra.mxu0 0.0
    %3168 = vmatprep.subr.mxu0 0.0
    %3169 = vmatpush1.msra.mxu0 0.0
    %3170 = vmatprep.subr.mxu0 0.0
    %3171 = vmatpush1.msra.mxu0 0.0
    %3172 = vmatprep.subr.mxu0 0.0
    %3173 = vmatpush1.msra.mxu0 0.0
    %3174 = vmatprep.subr.mxu0 0.0
    %3175 = vmatpush1.msra.mxu0 0.0
    %3176 = vmatprep.subr.mxu0 0.0
    %3177 = vmatpush1.msra.mxu0 0.0
    %3178 = vmatprep.subr.mxu0 0.0
    %3179 = vmatpush1.msra.mxu0 0.0
    %3180 = vmatprep.subr.mxu0 0.0
    %3181 = vmatpush1.msra.mxu0 0.0
    %3182 = vmatprep.subr.mxu0 0.0
    %3183 = vmatpush1.msra.mxu0 0.0
    %3184 = vmatprep.subr.mxu0 0.0
    %3185 = vmatpush1.msra.mxu0 0.0
    %3186 = vmatprep.subr.mxu0 0.0
    %3187 = vmatpush1.msra.mxu0 0.0
    %3188 = vmatprep.subr.mxu0 0.0
    %3189 = vmatpush1.msra.mxu0 0.0
    %3190 = vmatprep.subr.mxu0 0.0
    %3191 = vmatpush1.msra.mxu0 0.0
    %3192 = vmatprep.subr.mxu0 0.0
    %3193 = vmatpush1.msra.mxu0 0.0
    %3194 = vmatprep.mubr.f32.mxu0 0.0
    %3195 = vmatmul.mubr.f32.gmra.mrb[0].mxu0 %v3128
    %v3196 = vpop.f32.mrb[0].mxu0
    %v3197 = vadd.f32 %v71, %v3196
    %v3198 = vpop.f32.mrb[0].mxu0
    %3199 = vdwg.mxu0
    %v3200 = vxor.u32 %v3197, 2147483648
    %v3201 = vmul.f32 %v3200, 1.442695
    %v3202 = vpow.pop %v3201
    %v3203 = vadd.f32 %v3202, 1.0
    %v3204 = vrcp.pop %v3203
    %v3205 = vmul.f32 1.0, %v3204
    %v3206 = vtanh.pop %v3197
    %v3207 = vmul.f32 %v3205, %v3014
    %3209 = vrot.lane.b32.xlu0 %v3206, 32
    %v3210 = vpop.permute.xlu0 %3209
    %v3212 = vmul.f32 %v3205, %v3210
    %3214 = vrot.lane.b32.xlu0 %v3212, 32
    %v3215 = vpop.permute.xlu0 %3214
    %v3217 = vadd.f32 %v3207, %v3215
    %v3218 = vtanh.pop %v3217
    %3220 = vrot.lane.b32.xlu0 %v3218, 32
    %v3221 = vpop.permute.xlu0 %3220
    %v3223 = vmul.f32 %v3205, %v3221
    %3225 = vrot.lane.b32.xlu0 %v3120, 64
    %v3226 = vpop.permute.xlu0 %3225
    %v3227 = vsel %vm84, %v3226, 0
    %3229 = vmatprep.subr.mxu0 0.0
    %3230 = vmatpush1.msra.mxu0 %v54
    %3231 = vmatprep.subr.mxu0 0.0
    %3232 = vmatpush1.msra.mxu0 %v55
    %3233 = vmatprep.subr.mxu0 0.0
    %3234 = vmatpush1.msra.mxu0 %v56
    %3235 = vmatprep.subr.mxu0 0.0
    %3236 = vmatpush1.msra.mxu0 %v57
    %3237 = vmatprep.subr.mxu0 0.0
    %3238 = vmatpush1.msra.mxu0 0.0
    %3239 = vmatprep.subr.mxu0 0.0
    %3240 = vmatpush1.msra.mxu0 0.0
    %3241 = vmatprep.subr.mxu0 0.0
    %3242 = vmatpush1.msra.mxu0 0.0
    %3243 = vmatprep.subr.mxu0 0.0
    %3244 = vmatpush1.msra.mxu0 0.0
    %3245 = vmatprep.subr.mxu0 0.0
    %3246 = vmatpush1.msra.mxu0 0.0
    %3247 = vmatprep.subr.mxu0 0.0
    %3248 = vmatpush1.msra.mxu0 0.0
    %3249 = vmatprep.subr.mxu0 0.0
    %3250 = vmatpush1.msra.mxu0 0.0
    %3251 = vmatprep.subr.mxu0 0.0
    %3252 = vmatpush1.msra.mxu0 0.0
    %3253 = vmatprep.subr.mxu0 0.0
    %3254 = vmatpush1.msra.mxu0 0.0
    %3255 = vmatprep.subr.mxu0 0.0
    %3256 = vmatpush1.msra.mxu0 0.0
    %3257 = vmatprep.subr.mxu0 0.0
    %3258 = vmatpush1.msra.mxu0 0.0
    %3259 = vmatprep.subr.mxu0 0.0
    %3260 = vmatpush1.msra.mxu0 0.0
    %3261 = vmatprep.subr.mxu0 0.0
    %3262 = vmatpush1.msra.mxu0 0.0
    %3263 = vmatprep.subr.mxu0 0.0
    %3264 = vmatpush1.msra.mxu0 0.0
    %3265 = vmatprep.subr.mxu0 0.0
    %3266 = vmatpush1.msra.mxu0 0.0
    %3267 = vmatprep.subr.mxu0 0.0
    %3268 = vmatpush1.msra.mxu0 0.0
    %3269 = vmatprep.subr.mxu0 0.0
    %3270 = vmatpush1.msra.mxu0 0.0
    %3271 = vmatprep.subr.mxu0 0.0
    %3272 = vmatpush1.msra.mxu0 0.0
    %3273 = vmatprep.subr.mxu0 0.0
    %3274 = vmatpush1.msra.mxu0 0.0
    %3275 = vmatprep.subr.mxu0 0.0
    %3276 = vmatpush1.msra.mxu0 0.0
    %3277 = vmatprep.subr.mxu0 0.0
    %3278 = vmatpush1.msra.mxu0 0.0
    %3279 = vmatprep.subr.mxu0 0.0
    %3280 = vmatpush1.msra.mxu0 0.0
    %3281 = vmatprep.subr.mxu0 0.0
    %3282 = vmatpush1.msra.mxu0 0.0
    %3283 = vmatprep.subr.mxu0 0.0
    %3284 = vmatpush1.msra.mxu0 0.0
    %3285 = vmatprep.subr.mxu0 0.0
    %3286 = vmatpush1.msra.mxu0 0.0
    %3287 = vmatprep.subr.mxu0 0.0
    %3288 = vmatpush1.msra.mxu0 0.0
    %3289 = vmatprep.subr.mxu0 0.0
    %3290 = vmatpush1.msra.mxu0 0.0
    %3291 = vmatprep.subr.mxu0 0.0
    %3292 = vmatpush1.msra.mxu0 0.0
    %3293 = vmatprep.mubr.f32.mxu0 0.0
    %3294 = vmatmul.mubr.f32.gmra.mrb[0].mxu0 %v3227
    %v3295 = vpop.f32.mrb[0].mxu0
    %v3296 = vadd.f32 0.0, %v3295
    %v3297 = vpop.f32.mrb[0].mxu0
    %3298 = vdwg.mxu0
    %v3299 = vadd.f32 %v1912, %v3296
    %v3300 = vxor.u32 %v3299, 2147483648
    %v3301 = vmul.f32 %v3300, 1.442695
    %v3302 = vpow.pop %v3301
    %v3303 = vadd.f32 %v3302, 1.0
    %v3304 = vrcp.pop %v3303
    %v3305 = vmul.f32 1.0, %v3304
    %v3306 = vtanh.pop %v3299
    %v3307 = vmul.f32 %v3305, %v3114
    %3309 = vrot.lane.b32.xlu0 %v3306, 32
    %v3310 = vpop.permute.xlu0 %3309
    %v3312 = vmul.f32 %v3305, %v3310
    %3314 = vrot.lane.b32.xlu0 %v3312, 32
    %v3315 = vpop.permute.xlu0 %3314
    %v3317 = vadd.f32 %v3307, %v3315
    %v3318 = vtanh.pop %v3317
    %3320 = vrot.lane.b32.xlu0 %v3318, 32
    %v3321 = vpop.permute.xlu0 %3320
    %v3323 = vmul.f32 %v3305, %v3321
    %3326 = vrot.lane.b32.xlu0 %v3223, 96
    %v3327 = vpop.permute.xlu0 %3326
    %v3329 = vsel %vm84, %v3226, %v3327
    %v3331 = vsel %vm414, %v3329, 0
    %3333 = vmatprep.subr.mxu0 0.0
    %3334 = vmatpush1.msra.mxu0 %v59
    %3335 = vmatprep.subr.mxu0 0.0
    %3336 = vmatpush1.msra.mxu0 %v60
    %3337 = vmatprep.subr.mxu0 0.0
    %3338 = vmatpush1.msra.mxu0 %v61
    %3339 = vmatprep.subr.mxu0 0.0
    %3340 = vmatpush1.msra.mxu0 %v62
    %3341 = vmatprep.subr.mxu0 0.0
    %3342 = vmatpush1.msra.mxu0 %v63
    %3343 = vmatprep.subr.mxu0 0.0
    %3344 = vmatpush1.msra.mxu0 %v64
    %3345 = vmatprep.subr.mxu0 0.0
    %3346 = vmatpush1.msra.mxu0 %v65
    %3347 = vmatprep.subr.mxu0 0.0
    %3348 = vmatpush1.msra.mxu0 %v66
    %3349 = vmatprep.subr.mxu0 0.0
    %3350 = vmatpush1.msra.mxu0 0.0
    %3351 = vmatprep.subr.mxu0 0.0
    %3352 = vmatpush1.msra.mxu0 0.0
    %3353 = vmatprep.subr.mxu0 0.0
    %3354 = vmatpush1.msra.mxu0 0.0
    %3355 = vmatprep.subr.mxu0 0.0
    %3356 = vmatpush1.msra.mxu0 0.0
    %3357 = vmatprep.subr.mxu0 0.0
    %3358 = vmatpush1.msra.mxu0 0.0
    %3359 = vmatprep.subr.mxu0 0.0
    %3360 = vmatpush1.msra.mxu0 0.0
    %3361 = vmatprep.subr.mxu0 0.0
    %3362 = vmatpush1.msra.mxu0 0.0
    %3363 = vmatprep.subr.mxu0 0.0
    %3364 = vmatpush1.msra.mxu0 0.0
    %3365 = vmatprep.subr.mxu0 0.0
    %3366 = vmatpush1.msra.mxu0 0.0
    %3367 = vmatprep.subr.mxu0 0.0
    %3368 = vmatpush1.msra.mxu0 0.0
    %3369 = vmatprep.subr.mxu0 0.0
    %3370 = vmatpush1.msra.mxu0 0.0
    %3371 = vmatprep.subr.mxu0 0.0
    %3372 = vmatpush1.msra.mxu0 0.0
    %3373 = vmatprep.subr.mxu0 0.0
    %3374 = vmatpush1.msra.mxu0 0.0
    %3375 = vmatprep.subr.mxu0 0.0
    %3376 = vmatpush1.msra.mxu0 0.0
    %3377 = vmatprep.subr.mxu0 0.0
    %3378 = vmatpush1.msra.mxu0 0.0
    %3379 = vmatprep.subr.mxu0 0.0
    %3380 = vmatpush1.msra.mxu0 0.0
    %3381 = vmatprep.subr.mxu0 0.0
    %3382 = vmatpush1.msra.mxu0 0.0
    %3383 = vmatprep.subr.mxu0 0.0
    %3384 = vmatpush1.msra.mxu0 0.0
    %3385 = vmatprep.subr.mxu0 0.0
    %3386 = vmatpush1.msra.mxu0 0.0
    %3387 = vmatprep.subr.mxu0 0.0
    %3388 = vmatpush1.msra.mxu0 0.0
    %3389 = vmatprep.subr.mxu0 0.0
    %3390 = vmatpush1.msra.mxu0 0.0
    %3391 = vmatprep.subr.mxu0 0.0
    %3392 = vmatpush1.msra.mxu0 0.0
    %3393 = vmatprep.subr.mxu0 0.0
    %3394 = vmatpush1.msra.mxu0 0.0
    %3395 = vmatprep.subr.mxu0 0.0
    %3396 = vmatpush1.msra.mxu0 0.0
    %3397 = vmatprep.mubr.f32.mxu0 0.0
    %3398 = vmatmul.mubr.f32.gmra.mrb[0].mxu0 %v3331
    %v3399 = vpop.f32.mrb[0].mxu0
    %v3400 = vadd.f32 %v71, %v3399
    %v3401 = vpop.f32.mrb[0].mxu0
    %3402 = vdwg.mxu0
    %v3403 = vxor.u32 %v3400, 2147483648
    %v3404 = vmul.f32 %v3403, 1.442695
    %v3405 = vpow.pop %v3404
    %v3406 = vadd.f32 %v3405, 1.0
    %v3407 = vrcp.pop %v3406
    %v3408 = vmul.f32 1.0, %v3407
    %v3409 = vtanh.pop %v3400
    %v3410 = vmul.f32 %v3408, %v3217
    %3412 = vrot.lane.b32.xlu0 %v3409, 32
    %v3413 = vpop.permute.xlu0 %3412
    %v3415 = vmul.f32 %v3408, %v3413
    %3417 = vrot.lane.b32.xlu0 %v3415, 32
    %v3418 = vpop.permute.xlu0 %3417
    %v3420 = vadd.f32 %v3410, %v3418
    %v3421 = vtanh.pop %v3420
    %3423 = vrot.lane.b32.xlu0 %v3421, 32
    %v3424 = vpop.permute.xlu0 %3423
    %v3426 = vmul.f32 %v3408, %v3424
    %3428 = vrot.lane.b32.xlu0 %v3323, 64
    %v3429 = vpop.permute.xlu0 %3428
    %3432 = vrot.lane.b32.xlu0 %v3426, 96
    %v3433 = vpop.permute.xlu0 %3432
    %v3435 = vsel %vm84, %v3429, %v3433
    %v3437 = vsel %vm414, %v3435, 0
    %3439 = vmatprep.subr.mxu0 0.0
    %3440 = vmatpush1.msra.mxu0 %v59
    %3441 = vmatprep.subr.mxu0 0.0
    %3442 = vmatpush1.msra.mxu0 %v60
    %3443 = vmatprep.subr.mxu0 0.0
    %3444 = vmatpush1.msra.mxu0 %v61
    %3445 = vmatprep.subr.mxu0 0.0
    %3446 = vmatpush1.msra.mxu0 %v62
    %3447 = vmatprep.subr.mxu0 0.0
    %3448 = vmatpush1.msra.mxu0 %v63
    %3449 = vmatprep.subr.mxu0 0.0
    %3450 = vmatpush1.msra.mxu0 %v64
    %3451 = vmatprep.subr.mxu0 0.0
    %3452 = vmatpush1.msra.mxu0 %v65
    %3453 = vmatprep.subr.mxu0 0.0
    %3454 = vmatpush1.msra.mxu0 %v66
    %3455 = vmatprep.subr.mxu0 0.0
    %3456 = vmatpush1.msra.mxu0 0.0
    %3457 = vmatprep.subr.mxu0 0.0
    %3458 = vmatpush1.msra.mxu0 0.0
    %3459 = vmatprep.subr.mxu0 0.0
    %3460 = vmatpush1.msra.mxu0 0.0
    %3461 = vmatprep.subr.mxu0 0.0
    %3462 = vmatpush1.msra.mxu0 0.0
    %3463 = vmatprep.subr.mxu0 0.0
    %3464 = vmatpush1.msra.mxu0 0.0
    %3465 = vmatprep.subr.mxu0 0.0
    %3466 = vmatpush1.msra.mxu0 0.0
    %3467 = vmatprep.subr.mxu0 0.0
    %3468 = vmatpush1.msra.mxu0 0.0
    %3469 = vmatprep.subr.mxu0 0.0
    %3470 = vmatpush1.msra.mxu0 0.0
    %3471 = vmatprep.subr.mxu0 0.0
    %3472 = vmatpush1.msra.mxu0 0.0
    %3473 = vmatprep.subr.mxu0 0.0
    %3474 = vmatpush1.msra.mxu0 0.0
    %3475 = vmatprep.subr.mxu0 0.0
    %3476 = vmatpush1.msra.mxu0 0.0
    %3477 = vmatprep.subr.mxu0 0.0
    %3478 = vmatpush1.msra.mxu0 0.0
    %3479 = vmatprep.subr.mxu0 0.0
    %3480 = vmatpush1.msra.mxu0 0.0
    %3481 = vmatprep.subr.mxu0 0.0
    %3482 = vmatpush1.msra.mxu0 0.0
    %3483 = vmatprep.subr.mxu0 0.0
    %3484 = vmatpush1.msra.mxu0 0.0
    %3485 = vmatprep.subr.mxu0 0.0
    %3486 = vmatpush1.msra.mxu0 0.0
    %3487 = vmatprep.subr.mxu0 0.0
    %3488 = vmatpush1.msra.mxu0 0.0
    %3489 = vmatprep.subr.mxu0 0.0
    %3490 = vmatpush1.msra.mxu0 0.0
    %3491 = vmatprep.subr.mxu0 0.0
    %3492 = vmatpush1.msra.mxu0 0.0
    %3493 = vmatprep.subr.mxu0 0.0
    %3494 = vmatpush1.msra.mxu0 0.0
    %3495 = vmatprep.subr.mxu0 0.0
    %3496 = vmatpush1.msra.mxu0 0.0
    %3497 = vmatprep.subr.mxu0 0.0
    %3498 = vmatpush1.msra.mxu0 0.0
    %3499 = vmatprep.subr.mxu0 0.0
    %3500 = vmatpush1.msra.mxu0 0.0
    %3501 = vmatprep.subr.mxu0 0.0
    %3502 = vmatpush1.msra.mxu0 0.0
    %3503 = vmatprep.mubr.f32.mxu0 0.0
    %3504 = vmatmul.mubr.f32.gmra.mrb[0].mxu0 %v3437
    %v3505 = vpop.f32.mrb[0].mxu0
    %v3506 = vadd.f32 %v71, %v3505
    %v3507 = vpop.f32.mrb[0].mxu0
    %3508 = vdwg.mxu0
    %v3509 = vxor.u32 %v3506, 2147483648
    %v3510 = vmul.f32 %v3509, 1.442695
    %v3511 = vpow.pop %v3510
    %v3512 = vadd.f32 %v3511, 1.0
    %v3513 = vrcp.pop %v3512
    %v3514 = vmul.f32 1.0, %v3513
    %v3515 = vtanh.pop %v3506
    %v3516 = vmul.f32 %v3514, %v3420
    %3518 = vrot.lane.b32.xlu0 %v3515, 32
    %v3519 = vpop.permute.xlu0 %3518
    %v3521 = vmul.f32 %v3514, %v3519
    %3523 = vrot.lane.b32.xlu0 %v3521, 32
    %v3524 = vpop.permute.xlu0 %3523
    %v3526 = vadd.f32 %v3516, %v3524
    %v3527 = vtanh.pop %v3526
    %3529 = vrot.lane.b32.xlu0 %v3527, 32
    %v3530 = vpop.permute.xlu0 %3529
    %v3532 = vmul.f32 %v3514, %v3530
    %3533 = vrot.lane.b32.xlu0 %v2208, 64
    %v3534 = vpop.permute.xlu0 %3533
    %3536 = vrot.lane.b32.xlu0 %v2817, 32
    %v3537 = vpop.permute.xlu0 %3536
    %3539 = vrot.lane.b32.xlu0 %v3020, 64
    %v3540 = vpop.permute.xlu0 %3539
    %3543 = vrot.lane.b32.xlu0 %v3532, 32
    %v3544 = vpop.permute.xlu0 %3543
    %v3546 = vsel %vm84, %v3534, %v2515
    %v3547 = vsel %vm414, %v3546, %v2614
    %vm3548 = vcmask 785408
    %v3549 = vsel %vm3548, %v3547, %v3537
    %v3550 = vsel %vm84, %v3540, %v3327
    %v3551 = vsel %vm414, %v3550, %v3426
    %v3552 = vsel %vm3548, %v3551, %v3544
    %3553 = vst [vmem:[%s3] sm:$0xff] %v3549
    %3554 = vst [vmem:[%s3 + $0x8] sm:$0xff] %v3552
    // Predicated region
    $region18: #{recurrent_autoencoder_forward.1} parent=1 // pred_check
      _
    $region19: #{recurrent_autoencoder_forward.1} parent=1 // pred_check_branch
      %3556 = sbr.rel (0) target = $region21
    $region20: #{recurrent_autoencoder_forward.1} parent=1 // pred_region
      _
    $region21: #{recurrent_autoencoder_forward.1} parent=1 // pred_fallthru
      _
    // Predicated region
    $region22: #{recurrent_autoencoder_forward.1} parent=1 // pred_check
      _
    $region23: #{recurrent_autoencoder_forward.1} parent=1 // pred_check_branch
      %3558 = sbr.rel (0) target = $region25
    $region24: #{recurrent_autoencoder_forward.1} parent=1 // pred_region
      _
    $region25: #{recurrent_autoencoder_forward.1} parent=1 // pred_fallthru
      _
    %3559 = vsyncpa [#allocation3], 1

</llo_original>
